<compile_context>
chip_gen: v7x
topology: tpu7x:2x2x1
jax: 0.10.0
libtpu: 0.0.40
codegen_flags: <defaults>
</compile_context>

<pallas_src>
import functools
import numpy as np

import jax
import jax.numpy as jnp
from jax.experimental import pallas as pl
from jax.experimental.pallas import tpu as pltpu


# ----------------------------------------------------------------------------
# Static helpers (tap pattern, bilinear resize matrices)
# ----------------------------------------------------------------------------
def _round_up(x, m):
    return ((x + m - 1) // m) * m


def _tap_offsets(rate):
    """15 ACNet taps (conv_3x3 + conv_1x3 + conv_3x1) as (dy, dx) offsets into the
    (top=1, left=1)-zero-padded input, matching PyTorch padding/dilation and the
    crop-from-the-start semantics in ACNet.forward."""
    offs = [(rate * ky, rate * kx) for ky in range(3) for kx in range(3)]  # 3x3, pad 1, dil r
    offs += [(1, rate * kx) for kx in range(3)]                            # 1x3, pad (0,1), dil (1,r)
    offs += [(rate * ky, 1) for ky in range(3)]                            # 3x1, pad (1,0), dil (r,1)
    return tuple(offs)


def _bilinear_matrix(n_out, n_in):
    """Dense (n_out, n_in) matrix of F.interpolate(bilinear, align_corners=False)."""
    A = np.zeros((n_out, n_in), np.float32)
    if n_in == 1:
        A[:, 0] = 1.0
        return A
    scale = n_in / n_out
    for o in range(n_out):
        src = max((o + 0.5) * scale - 0.5, 0.0)
        i0 = min(int(np.floor(src)), n_in - 1)
        i1 = min(i0 + 1, n_in - 1)
        lam = src - i0
        A[o, i0] += 1.0 - lam
        A[o, i1] += lam
    return A


# ----------------------------------------------------------------------------
# Fused Pallas kernel: all ASPP stages for `bt` batch elements per grid step
# ----------------------------------------------------------------------------
def _aspp_kernel(x_ref, wconv_ref, bnconv_ref, rmat_ref, wpool_ref, bnpool_ref,
                 o_ref, patch_ref, *, stages, H, W, Cin, Cout, Wp, Mmax, bt):
    HW = H * W
    ntaps = len(stages[0][0])
    n_conv = len(stages)

    for b in range(bt):
        # ---------------- conv stages (c0 + one per dilation rate) ----------------
        for s, (offsets, Hc, Wc) in enumerate(stages):
            M = Hc * Wp
            # im2col: one contiguous lane-range copy per tap (all Cin sublanes at once).
            # Patch rows are ordered (tap, cin); lanes are the flattened (y, x) window.
            for t, (dy, dx) in enumerate(offsets):
                start = dy * Wp + dx
                patch_ref[t * Cin:(t + 1) * Cin, 0:M] = x_ref[b, :, start:start + M]
            if M < Mmax:
                # Keep the tail finite (R has zero rows there, but NaN * 0 == NaN).
                patch_ref[:, M:Mmax] = jnp.zeros((ntaps * Cin, Mmax - M),
                                                 patch_ref.dtype)

            # Fused ACNet conv (BN scale pre-folded): one bf16 MXU matmul, output
            # lane-dense over the flattened spatial window.
            z = jnp.dot(wconv_ref[s], patch_ref[...],
                        preferred_element_type=jnp.float32)          # (Cout, Mmax) f32
            bn = bnconv_ref[s]                                       # cols: b1, s2, b2
            z = jnp.maximum(z + bn[:, 0:1], 0.0)                     # ACNet BN shift + ReLU
            z = jnp.maximum(z * bn[:, 1:2] + bn[:, 2:3], 0.0)        # outer BN + ReLU

            # Crop + separable bilinear resize to (H, W): one bf16 MXU matmul straight
            # into the lane-dense (Cout, H*W) store layout.
            res = jnp.dot(z.astype(jnp.bfloat16), rmat_ref[s],
                          preferred_element_type=jnp.float32)        # (Cout, H*W)
            o_ref[b, s * Cout:(s + 1) * Cout, :] = res

        # ---------------- image-pool stage ----------------
        xs = x_ref[b].astype(jnp.float32)                 # (Cin, Lpad); zero pads add 0
        pooled = jnp.sum(xs, axis=1, keepdims=True)       # (Cin, 1) == H*W * mean
        y = jnp.dot(wpool_ref[...], pooled,
                    preferred_element_type=jnp.float32)   # (Cout, 1); 1/(H*W) folded in
        bnp = bnpool_ref[...]
        y = jnp.maximum(y + bnp[:, 0:1], 0.0)
        y = jnp.maximum(y * bnp[:, 1:2] + bnp[:, 2:3], 0.0)
        o_ref[b, n_conv * Cout:(n_conv + 1) * Cout, :] = jnp.broadcast_to(y, (Cout, HW))


# ----------------------------------------------------------------------------
# Synthetic parameters mirroring the PyTorch module (eval-mode BN stats)
# ----------------------------------------------------------------------------
def make_aspp_params(in_ch, out_ch, rates, seed=0):
    rng = np.random.default_rng(seed)

    def rand(shape, scale=0.2):
        return (rng.standard_normal(shape) * scale).astype(np.float32)

    def bn_params():
        return dict(
            gamma=(1.0 + 0.1 * rng.standard_normal(out_ch)).astype(np.float32),
            beta=(0.1 * rng.standard_normal(out_ch)).astype(np.float32),
            mean=(0.1 * rng.standard_normal(out_ch)).astype(np.float32),
            var=rng.uniform(0.5, 1.5, out_ch).astype(np.float32))

    def acnet(kernel_size):
        k = kernel_size
        return dict(w_kxk=rand((out_ch, in_ch, k, k)),   # conv_3x3 (1x1 conv when k==1)
                    w_1x3=rand((out_ch, in_ch, 1, 3)),
                    w_3x1=rand((out_ch, in_ch, 3, 1)),
                    bn1=bn_params(),                     # ACNet internal BN
                    bn2=bn_params())                     # outer _ConvBnReLU BN

    conv_stages = [dict(rate=1, kernel_size=1, **acnet(1))]
    conv_stages += [dict(rate=r, kernel_size=3, **acnet(3)) for r in rates]
    return dict(in_ch=in_ch, out_ch=out_ch, rates=tuple(rates),
                conv_stages=conv_stages, imagepool=dict(kernel_size=1, **acnet(1)))


def _bn_fold(bn, eps=1e-5):
    s = (bn['gamma'] / np.sqrt(bn['var'] + eps)).astype(np.float32)
    b = (bn['beta'] - bn['mean'] * s).astype(np.float32)
    return s, b


def _prepare_operands(params, H, W):
    Cin, Cout = params['in_ch'], params['out_ch']
    Wp = W + 2                        # 1 left + 1 right pad column
    Hp = H + 3                        # 1 top + 2 bottom pad rows (2nd bottom row only
                                      # guards the flattened tap-window slices)
    HW = H * W
    Mmax = H * Wp                     # largest conv-output window (rate-1 stages)
    Lpad = _round_up(Hp * Wp, 128)

    stage_static, wstack, bnstack, rstack = [], [], [], []
    for st in params['conv_stages']:
        r, k = st['rate'], st['kernel_size']
        Hc, Wc = H + 2 - 2 * r, W + 2 - 2 * r
        if k == 1:                                   # c0: 1x1 conv == center tap of a 3x3
            w33 = np.zeros((Cout, Cin, 3, 3), np.float32)
            w33[:, :, 1, 1] = st['w_kxk'][:, :, 0, 0]
        else:
            w33 = st['w_kxk']
        blocks = [w33[:, :, ky, kx] for ky in range(3) for kx in range(3)]
        blocks += [st['w_1x3'][:, :, 0, kx] for kx in range(3)]
        blocks += [st['w_3x1'][:, :, ky, 0] for ky in range(3)]
        wmat = np.concatenate(blocks, axis=1)        # (Cout, 15*Cin), col = tap*Cin + cin
        s1, b1 = _bn_fold(st['bn1'])
        s2, b2 = _bn_fold(st['bn2'])
        wstack.append(wmat * s1[:, None])            # fold ACNet BN scale into weights
        bnstack.append(np.stack([b1, s2, b2], axis=1))   # (Cout, 3)

        # Combined crop + separable bilinear resize matrix: maps the flattened (Hc, Wp)
        # conv window (garbage columns x >= Wc included) to the flattened (H, W) output.
        Ah = _bilinear_matrix(H, Hc)
        Aw = _bilinear_matrix(W, Wc)
        R = np.zeros((Mmax, HW), np.float32)
        for y in range(Hc):
            for x in range(Wc):
                R[y * Wp + x] = np.outer(Ah[:, y], Aw[:, x]).reshape(-1)
        rstack.append(R)
        stage_static.append((_tap_offsets(r), Hc, Wc))

    ip = params['imagepool']                         # 1x1 spatial input: only center taps
    wc = ip['w_kxk'][:, :, 0, 0] + ip['w_1x3'][:, :, 0, 1] + ip['w_3x1'][:, :, 1, 0]
    s1p, b1p = _bn_fold(ip['bn1'])
    s2p, b2p = _bn_fold(ip['bn2'])
    wpool = (wc * s1p[:, None] / float(H * W)).astype(np.float32)   # folds mean + BN scale
    bnpool = np.stack([b1p, s2p, b2p], axis=1)                      # (Cout, 3)

    return dict(
        Wp=Wp, Hp=Hp, Mmax=Mmax, Lpad=Lpad, stages=tuple(stage_static),
        wconv=jnp.asarray(np.stack(wstack), dtype=jnp.bfloat16),    # (n_conv, Cout, 15*Cin)
        bnconv=jnp.asarray(np.stack(bnstack), dtype=jnp.float32),   # (n_conv, Cout, 3)
        rmat=jnp.asarray(np.stack(rstack), dtype=jnp.bfloat16),     # (n_conv, Mmax, H*W)
        wpool=jnp.asarray(wpool, dtype=jnp.float32),                # (Cout, Cin)
        bnpool=jnp.asarray(bnpool, dtype=jnp.float32))              # (Cout, 3)


# ----------------------------------------------------------------------------
# Forward wrapper
# ----------------------------------------------------------------------------
def aspp_forward(x_nchw, params, *, batch_tile=1):
    """_ASPP.forward: NCHW input -> NCHW output with (2 + len(rates)) * out_ch channels."""
    B, Cin, H, W = x_nchw.shape
    Cout = params['out_ch']
    assert B % batch_tile == 0
    bt = batch_tile

    ops = _prepare_operands(params, H, W)
    Wp, Hp, Mmax, Lpad = ops['Wp'], ops['Hp'], ops['Mmax'], ops['Lpad']
    stages = ops['stages']
    n_conv = len(stages)
    n_stages = n_conv + 1                               # conv stages + image pool
    HW = H * W
    ntaps = len(stages[0][0])
    K = ntaps * Cin

    consts = (ops['wconv'], ops['bnconv'], ops['rmat'], ops['wpool'], ops['bnpool'])

    kernel = functools.partial(_aspp_kernel, stages=stages, H=H, W=W, Cin=Cin,
                               Cout=Cout, Wp=Wp, Mmax=Mmax, bt=bt)

    def _const_spec(a):
        nd = a.ndim
        # Same block every step -> resident in VMEM, not re-fetched per iteration.
        # TODO(synk): for production channel counts on v7x (64 MiB VMEM), chunk the
        # tap/K dim and single-buffer these specs (pipeline_mode=pl.Buffered(1)).
        return pl.BlockSpec(a.shape, lambda i, _nd=nd: (0,) * _nd)

    flops = B * (n_conv * (2 * Cout * K * Mmax + 2 * Cout * Mmax * HW) + 2 * Cout * Cin)
    bytes_accessed = (B * Cin * Lpad * 2
                      + sum(int(np.prod(a.shape)) * a.dtype.itemsize for a in consts)
                      + B * n_stages * Cout * HW * 4)
    cost = pl.CostEstimate(flops=flops, transcendentals=0, bytes_accessed=bytes_accessed)

    @jax.jit
    def run(x):
        # Pad (conv halo + one guard row) + bf16 cast + flatten spatial: NO transpose,
        # XLA fuses this into a single pass over the input.
        xp = jnp.pad(x.astype(jnp.bfloat16), ((0, 0), (0, 0), (1, 2), (1, 1)))
        xflat = xp.reshape(B, Cin, Hp * Wp)
        xflat = jnp.pad(xflat, ((0, 0), (0, 0), (0, Lpad - Hp * Wp)))

        out = pl.pallas_call(
            kernel,
            grid=(B // bt,),
            in_specs=[pl.BlockSpec((bt, Cin, Lpad), lambda i: (i, 0, 0))]
                     + [_const_spec(a) for a in consts],
            out_specs=pl.BlockSpec((bt, n_stages * Cout, HW), lambda i: (i, 0, 0)),
            out_shape=jax.ShapeDtypeStruct((B, n_stages * Cout, HW), jnp.float32),
            scratch_shapes=[pltpu.VMEM((K, Mmax), jnp.bfloat16)],
            compiler_params=pltpu.CompilerParams(dimension_semantics=("parallel",)),
            cost_estimate=cost,
        )(xflat, *consts)

        # (B, n_stages*Cout, H*W) -> NCHW stage concat: a FREE reshape, no transpose.
        return out.reshape(B, n_stages * Cout, H, W)

    return run(x_nchw)


# ----------------------------------------------------------------------------
if __name__ == "__main__":
    B, Cin, Cout, H, W = 2, 4, 8, 16, 16
    rates = (1, 2, 3)

    params = make_aspp_params(Cin, Cout, rates, seed=0)
    x = jax.random.normal(jax.random.PRNGKey(0), (B, Cin, H, W), dtype=jnp.float32)

    # grid=(B,) parallel: even grid keeps both v7x TensorCores busy; for large B,
    # batch_tile>1 fattens each grid step by folding batch into the matmul M dim.
    out = aspp_forward(x, params, batch_tile=1)
    out = jax.block_until_ready(out)

    expected_channels = (2 + len(rates)) * Cout
    assert out.shape == (B, expected_channels, H, W), out.shape
    assert bool(jnp.all(jnp.isfinite(out)))
    print("KERNEL_OK")
</pallas_src>

<mosaic_0001>
module attributes {stable_mosaic.version = 11 : i64} {
  func.func @_aspp_kernel(%arg0: i32, %arg1: memref<1x4x384xbf16, #tpu.memory_space<vmem>>, %arg2: memref<4x8x60xbf16, #tpu.memory_space<vmem>>, %arg3: memref<4x8x3xf32, #tpu.memory_space<vmem>>, %arg4: memref<4x288x256xbf16, #tpu.memory_space<vmem>>, %arg5: memref<8x4xf32, #tpu.memory_space<vmem>>, %arg6: memref<8x3xf32, #tpu.memory_space<vmem>>, %arg7: memref<1x40x256xf32, #tpu.memory_space<vmem>>, %arg8: memref<60x288xbf16, #tpu.memory_space<vmem>>) attributes {dimension_semantics = [#tpu.dimension_semantics<parallel>], iteration_bounds = array<i64: 2>, scalar_prefetch = 0 : i64, scratch_operands = 1 : i64, tpu.core_type = #tpu.core_type<tc>, window_params = [{transform_indices = @transform_0, window_bounds = array<i64: 1, 4, 384>}, {pipeline_mode = #tpu.pipeline_mode<synchronous>, transform_indices = @transform_1, window_bounds = array<i64: 4, 8, 60>}, {pipeline_mode = #tpu.pipeline_mode<synchronous>, transform_indices = @transform_2, window_bounds = array<i64: 4, 8, 3>}, {pipeline_mode = #tpu.pipeline_mode<synchronous>, transform_indices = @transform_3, window_bounds = array<i64: 4, 288, 256>}, {pipeline_mode = #tpu.pipeline_mode<synchronous>, transform_indices = @transform_4, window_bounds = array<i64: 8, 4>}, {pipeline_mode = #tpu.pipeline_mode<synchronous>, transform_indices = @transform_5, window_bounds = array<i64: 8, 3>}, {transform_indices = @transform_6, window_bounds = array<i64: 1, 40, 256>}]} {
    %c0 = arith.constant 0 : index
    %c0_0 = arith.constant 0 : index
    %c0_1 = arith.constant 0 : index
    %0 = vector.load %arg1[%c0, %c0_0, %c0_1] : memref<1x4x384xbf16, #tpu.memory_space<vmem>>, vector<1x4x288xbf16>
    %1 = vector.shape_cast %0 : vector<1x4x288xbf16> to vector<4x288xbf16>
    %c0_2 = arith.constant 0 : index
    %c0_3 = arith.constant 0 : index
    %2 = vector.load %arg8[%c0_2, %c0_3] : memref<60x288xbf16, #tpu.memory_space<vmem>>, vector<4x288xbf16>
    tpu.vector_store %arg8[%c0_2, %c0_3], %1 {strides = array<i32>} : memref<60x288xbf16, #tpu.memory_space<vmem>>, vector<4x288xbf16>,
    %c0_4 = arith.constant 0 : index
    %c0_5 = arith.constant 0 : index
    %c1 = arith.constant 1 : index
    %3 = vector.load %arg1[%c0_4, %c0_5, %c1] : memref<1x4x384xbf16, #tpu.memory_space<vmem>>, vector<1x4x288xbf16>
    %4 = vector.shape_cast %3 : vector<1x4x288xbf16> to vector<4x288xbf16>
    %c4 = arith.constant 4 : index
    %c0_6 = arith.constant 0 : index
    %5 = vector.load %arg8[%c4, %c0_6] : memref<60x288xbf16, #tpu.memory_space<vmem>>, vector<4x288xbf16>
    tpu.vector_store %arg8[%c4, %c0_6], %4 {strides = array<i32>} : memref<60x288xbf16, #tpu.memory_space<vmem>>, vector<4x288xbf16>,
    %c0_7 = arith.constant 0 : index
    %c0_8 = arith.constant 0 : index
    %c2 = arith.constant 2 : index
    %6 = vector.load %arg1[%c0_7, %c0_8, %c2] : memref<1x4x384xbf16, #tpu.memory_space<vmem>>, vector<1x4x288xbf16>
    %7 = vector.shape_cast %6 : vector<1x4x288xbf16> to vector<4x288xbf16>
    %c8 = arith.constant 8 : index
    %c0_9 = arith.constant 0 : index
    %8 = vector.load %arg8[%c8, %c0_9] : memref<60x288xbf16, #tpu.memory_space<vmem>>, vector<4x288xbf16>
    tpu.vector_store %arg8[%c8, %c0_9], %7 {strides = array<i32>} : memref<60x288xbf16, #tpu.memory_space<vmem>>, vector<4x288xbf16>,
    %c0_10 = arith.constant 0 : index
    %c0_11 = arith.constant 0 : index
    %c18 = arith.constant 18 : index
    %9 = vector.load %arg1[%c0_10, %c0_11, %c18] : memref<1x4x384xbf16, #tpu.memory_space<vmem>>, vector<1x4x288xbf16>
    %10 = vector.shape_cast %9 : vector<1x4x288xbf16> to vector<4x288xbf16>
    %c12 = arith.constant 12 : index
    %c0_12 = arith.constant 0 : index
    %11 = vector.load %arg8[%c12, %c0_12] : memref<60x288xbf16, #tpu.memory_space<vmem>>, vector<4x288xbf16>
    tpu.vector_store %arg8[%c12, %c0_12], %10 {strides = array<i32>} : memref<60x288xbf16, #tpu.memory_space<vmem>>, vector<4x288xbf16>,
    %c0_13 = arith.constant 0 : index
    %c0_14 = arith.constant 0 : index
    %c19 = arith.constant 19 : index
    %12 = vector.load %arg1[%c0_13, %c0_14, %c19] : memref<1x4x384xbf16, #tpu.memory_space<vmem>>, vector<1x4x288xbf16>
    %13 = vector.shape_cast %12 : vector<1x4x288xbf16> to vector<4x288xbf16>
    %c16 = arith.constant 16 : index
    %c0_15 = arith.constant 0 : index
    %14 = vector.load %arg8[%c16, %c0_15] : memref<60x288xbf16, #tpu.memory_space<vmem>>, vector<4x288xbf16>
    tpu.vector_store %arg8[%c16, %c0_15], %13 {strides = array<i32>} : memref<60x288xbf16, #tpu.memory_space<vmem>>, vector<4x288xbf16>,
    %c0_16 = arith.constant 0 : index
    %c0_17 = arith.constant 0 : index
    %c20 = arith.constant 20 : index
    %15 = vector.load %arg1[%c0_16, %c0_17, %c20] : memref<1x4x384xbf16, #tpu.memory_space<vmem>>, vector<1x4x288xbf16>
    %16 = vector.shape_cast %15 : vector<1x4x288xbf16> to vector<4x288xbf16>
    %c20_18 = arith.constant 20 : index
    %c0_19 = arith.constant 0 : index
    %17 = vector.load %arg8[%c20_18, %c0_19] : memref<60x288xbf16, #tpu.memory_space<vmem>>, vector<4x288xbf16>
    tpu.vector_store %arg8[%c20_18, %c0_19], %16 {strides = array<i32>} : memref<60x288xbf16, #tpu.memory_space<vmem>>, vector<4x288xbf16>,
    %c0_20 = arith.constant 0 : index
    %c0_21 = arith.constant 0 : index
    %c36 = arith.constant 36 : index
    %18 = vector.load %arg1[%c0_20, %c0_21, %c36] : memref<1x4x384xbf16, #tpu.memory_space<vmem>>, vector<1x4x288xbf16>
    %19 = vector.shape_cast %18 : vector<1x4x288xbf16> to vector<4x288xbf16>
    %c24 = arith.constant 24 : index
    %c0_22 = arith.constant 0 : index
    %20 = vector.load %arg8[%c24, %c0_22] : memref<60x288xbf16, #tpu.memory_space<vmem>>, vector<4x288xbf16>
    tpu.vector_store %arg8[%c24, %c0_22], %19 {strides = array<i32>} : memref<60x288xbf16, #tpu.memory_space<vmem>>, vector<4x288xbf16>,
    %c0_23 = arith.constant 0 : index
    %c0_24 = arith.constant 0 : index
    %c37 = arith.constant 37 : index
    %21 = vector.load %arg1[%c0_23, %c0_24, %c37] : memref<1x4x384xbf16, #tpu.memory_space<vmem>>, vector<1x4x288xbf16>
    %22 = vector.shape_cast %21 : vector<1x4x288xbf16> to vector<4x288xbf16>
    %c28 = arith.constant 28 : index
    %c0_25 = arith.constant 0 : index
    %23 = vector.load %arg8[%c28, %c0_25] : memref<60x288xbf16, #tpu.memory_space<vmem>>, vector<4x288xbf16>
    tpu.vector_store %arg8[%c28, %c0_25], %22 {strides = array<i32>} : memref<60x288xbf16, #tpu.memory_space<vmem>>, vector<4x288xbf16>,
    %c0_26 = arith.constant 0 : index
    %c0_27 = arith.constant 0 : index
    %c38 = arith.constant 38 : index
    %24 = vector.load %arg1[%c0_26, %c0_27, %c38] : memref<1x4x384xbf16, #tpu.memory_space<vmem>>, vector<1x4x288xbf16>
    %25 = vector.shape_cast %24 : vector<1x4x288xbf16> to vector<4x288xbf16>
    %c32 = arith.constant 32 : index
    %c0_28 = arith.constant 0 : index
    %26 = vector.load %arg8[%c32, %c0_28] : memref<60x288xbf16, #tpu.memory_space<vmem>>, vector<4x288xbf16>
    tpu.vector_store %arg8[%c32, %c0_28], %25 {strides = array<i32>} : memref<60x288xbf16, #tpu.memory_space<vmem>>, vector<4x288xbf16>,
    %c0_29 = arith.constant 0 : index
    %c0_30 = arith.constant 0 : index
    %c18_31 = arith.constant 18 : index
    %27 = vector.load %arg1[%c0_29, %c0_30, %c18_31] : memref<1x4x384xbf16, #tpu.memory_space<vmem>>, vector<1x4x288xbf16>
    %28 = vector.shape_cast %27 : vector<1x4x288xbf16> to vector<4x288xbf16>
    %c36_32 = arith.constant 36 : index
    %c0_33 = arith.constant 0 : index
    %29 = vector.load %arg8[%c36_32, %c0_33] : memref<60x288xbf16, #tpu.memory_space<vmem>>, vector<4x288xbf16>
    tpu.vector_store %arg8[%c36_32, %c0_33], %28 {strides = array<i32>} : memref<60x288xbf16, #tpu.memory_space<vmem>>, vector<4x288xbf16>,
    %c0_34 = arith.constant 0 : index
    %c0_35 = arith.constant 0 : index
    %c19_36 = arith.constant 19 : index
    %30 = vector.load %arg1[%c0_34, %c0_35, %c19_36] : memref<1x4x384xbf16, #tpu.memory_space<vmem>>, vector<1x4x288xbf16>
    %31 = vector.shape_cast %30 : vector<1x4x288xbf16> to vector<4x288xbf16>
    %c40 = arith.constant 40 : index
    %c0_37 = arith.constant 0 : index
    %32 = vector.load %arg8[%c40, %c0_37] : memref<60x288xbf16, #tpu.memory_space<vmem>>, vector<4x288xbf16>
    tpu.vector_store %arg8[%c40, %c0_37], %31 {strides = array<i32>} : memref<60x288xbf16, #tpu.memory_space<vmem>>, vector<4x288xbf16>,
    %c0_38 = arith.constant 0 : index
    %c0_39 = arith.constant 0 : index
    %c20_40 = arith.constant 20 : index
    %33 = vector.load %arg1[%c0_38, %c0_39, %c20_40] : memref<1x4x384xbf16, #tpu.memory_space<vmem>>, vector<1x4x288xbf16>
    %34 = vector.shape_cast %33 : vector<1x4x288xbf16> to vector<4x288xbf16>
    %c44 = arith.constant 44 : index
    %c0_41 = arith.constant 0 : index
    %35 = vector.load %arg8[%c44, %c0_41] : memref<60x288xbf16, #tpu.memory_space<vmem>>, vector<4x288xbf16>
    tpu.vector_store %arg8[%c44, %c0_41], %34 {strides = array<i32>} : memref<60x288xbf16, #tpu.memory_space<vmem>>, vector<4x288xbf16>,
    %c0_42 = arith.constant 0 : index
    %c0_43 = arith.constant 0 : index
    %c1_44 = arith.constant 1 : index
    %36 = vector.load %arg1[%c0_42, %c0_43, %c1_44] : memref<1x4x384xbf16, #tpu.memory_space<vmem>>, vector<1x4x288xbf16>
    %37 = vector.shape_cast %36 : vector<1x4x288xbf16> to vector<4x288xbf16>
    %c48 = arith.constant 48 : index
    %c0_45 = arith.constant 0 : index
    %38 = vector.load %arg8[%c48, %c0_45] : memref<60x288xbf16, #tpu.memory_space<vmem>>, vector<4x288xbf16>
    tpu.vector_store %arg8[%c48, %c0_45], %37 {strides = array<i32>} : memref<60x288xbf16, #tpu.memory_space<vmem>>, vector<4x288xbf16>,
    %c0_46 = arith.constant 0 : index
    %c0_47 = arith.constant 0 : index
    %c19_48 = arith.constant 19 : index
    %39 = vector.load %arg1[%c0_46, %c0_47, %c19_48] : memref<1x4x384xbf16, #tpu.memory_space<vmem>>, vector<1x4x288xbf16>
    %40 = vector.shape_cast %39 : vector<1x4x288xbf16> to vector<4x288xbf16>
    %c52 = arith.constant 52 : index
    %c0_49 = arith.constant 0 : index
    %41 = vector.load %arg8[%c52, %c0_49] : memref<60x288xbf16, #tpu.memory_space<vmem>>, vector<4x288xbf16>
    tpu.vector_store %arg8[%c52, %c0_49], %40 {strides = array<i32>} : memref<60x288xbf16, #tpu.memory_space<vmem>>, vector<4x288xbf16>,
    %c0_50 = arith.constant 0 : index
    %c0_51 = arith.constant 0 : index
    %c37_52 = arith.constant 37 : index
    %42 = vector.load %arg1[%c0_50, %c0_51, %c37_52] : memref<1x4x384xbf16, #tpu.memory_space<vmem>>, vector<1x4x288xbf16>
    %43 = vector.shape_cast %42 : vector<1x4x288xbf16> to vector<4x288xbf16>
    %c56 = arith.constant 56 : index
    %c0_53 = arith.constant 0 : index
    %44 = vector.load %arg8[%c56, %c0_53] : memref<60x288xbf16, #tpu.memory_space<vmem>>, vector<4x288xbf16>
    tpu.vector_store %arg8[%c56, %c0_53], %43 {strides = array<i32>} : memref<60x288xbf16, #tpu.memory_space<vmem>>, vector<4x288xbf16>,
    %c0_54 = arith.constant 0 : index
    %c0_55 = arith.constant 0 : index
    %c0_56 = arith.constant 0 : index
    %45 = vector.load %arg2[%c0_54, %c0_55, %c0_56] : memref<4x8x60xbf16, #tpu.memory_space<vmem>>, vector<1x8x60xbf16>
    %46 = vector.shape_cast %45 : vector<1x8x60xbf16> to vector<8x60xbf16>
    %c0_57 = arith.constant 0 : index
    %c0_58 = arith.constant 0 : index
    %47 = vector.load %arg8[%c0_57, %c0_58] : memref<60x288xbf16, #tpu.memory_space<vmem>>, vector<60x288xbf16>
    %cst = arith.constant dense<0.000000e+00> : vector<8x288xf32>
    %48 = tpu.matmul %46, %47, %cst {dimension_numbers = #tpu.dot_dimension_numbers<[1], [0], [0], [1], [0, 0, 1, 1], [], []>} : vector<8x60xbf16>, vector<60x288xbf16>, vector<8x288xf32> -> vector<8x288xf32>
    %c0_59 = arith.constant 0 : index
    %c0_60 = arith.constant 0 : index
    %c0_61 = arith.constant 0 : index
    %49 = vector.load %arg3[%c0_59, %c0_60, %c0_61] : memref<4x8x3xf32, #tpu.memory_space<vmem>>, vector<1x8x3xf32>
    %50 = vector.shape_cast %49 : vector<1x8x3xf32> to vector<8x3xf32>
    %51 = vector.extract_strided_slice %50 {offsets = [0, 0], sizes = [8, 1], strides = [1, 1]} : vector<8x3xf32> to vector<8x1xf32>
    %52 = vector.broadcast %51 : vector<8x1xf32> to vector<8x288xf32>
    %53 = arith.addf %48, %52 : vector<8x288xf32>
    %cst_62 = arith.constant 0.000000e+00 : f32
    %54 = vector.broadcast %cst_62 : f32 to vector<8x288xf32>
    %55 = arith.maximumf %53, %54 : vector<8x288xf32>
    %56 = vector.extract_strided_slice %50 {offsets = [0, 1], sizes = [8, 1], strides = [1, 1]} : vector<8x3xf32> to vector<8x1xf32>
    %57 = vector.broadcast %56 : vector<8x1xf32> to vector<8x288xf32>
    %58 = arith.mulf %55, %57 : vector<8x288xf32>
    %59 = vector.extract_strided_slice %50 {offsets = [0, 2], sizes = [8, 1], strides = [1, 1]} : vector<8x3xf32> to vector<8x1xf32>
    %60 = vector.broadcast %59 : vector<8x1xf32> to vector<8x288xf32>
    %61 = arith.addf %58, %60 : vector<8x288xf32>
    %cst_63 = arith.constant 0.000000e+00 : f32
    %62 = vector.broadcast %cst_63 : f32 to vector<8x288xf32>
    %63 = arith.maximumf %61, %62 : vector<8x288xf32>
    %64 = arith.truncf %63 : vector<8x288xf32> to vector<8x288xbf16>
    %c0_64 = arith.constant 0 : index
    %c0_65 = arith.constant 0 : index
    %c0_66 = arith.constant 0 : index
    %65 = vector.load %arg4[%c0_64, %c0_65, %c0_66] : memref<4x288x256xbf16, #tpu.memory_space<vmem>>, vector<1x288x256xbf16>
    %66 = vector.shape_cast %65 : vector<1x288x256xbf16> to vector<288x256xbf16>
    %cst_67 = arith.constant dense<0.000000e+00> : vector<8x256xf32>
    %67 = tpu.matmul %64, %66, %cst_67 {dimension_numbers = #tpu.dot_dimension_numbers<[1], [0], [0], [1], [0, 0, 1, 1], [], []>} : vector<8x288xbf16>, vector<288x256xbf16>, vector<8x256xf32> -> vector<8x256xf32>
    %c0_68 = arith.constant 0 : index
    %c0_69 = arith.constant 0 : index
    %c0_70 = arith.constant 0 : index
    %68 = vector.load %arg7[%c0_68, %c0_69, %c0_70] : memref<1x40x256xf32, #tpu.memory_space<vmem>>, vector<1x8x256xf32>
    %69 = vector.shape_cast %68 : vector<1x8x256xf32> to vector<8x256xf32>
    %70 = vector.shape_cast %67 : vector<8x256xf32> to vector<1x8x256xf32>
    tpu.vector_store %arg7[%c0_68, %c0_69, %c0_70], %70 {strides = array<i32>} : memref<1x40x256xf32, #tpu.memory_space<vmem>>, vector<1x8x256xf32>,
    %c0_71 = arith.constant 0 : index
    %c0_72 = arith.constant 0 : index
    %c0_73 = arith.constant 0 : index
    %71 = vector.load %arg1[%c0_71, %c0_72, %c0_73] : memref<1x4x384xbf16, #tpu.memory_space<vmem>>, vector<1x4x288xbf16>
    %72 = vector.shape_cast %71 : vector<1x4x288xbf16> to vector<4x288xbf16>
    %c0_74 = arith.constant 0 : index
    %c0_75 = arith.constant 0 : index
    %73 = vector.load %arg8[%c0_74, %c0_75] : memref<60x288xbf16, #tpu.memory_space<vmem>>, vector<4x288xbf16>
    tpu.vector_store %arg8[%c0_74, %c0_75], %72 {strides = array<i32>} : memref<60x288xbf16, #tpu.memory_space<vmem>>, vector<4x288xbf16>,
    %c0_76 = arith.constant 0 : index
    %c0_77 = arith.constant 0 : index
    %c1_78 = arith.constant 1 : index
    %74 = vector.load %arg1[%c0_76, %c0_77, %c1_78] : memref<1x4x384xbf16, #tpu.memory_space<vmem>>, vector<1x4x288xbf16>
    %75 = vector.shape_cast %74 : vector<1x4x288xbf16> to vector<4x288xbf16>
    %c4_79 = arith.constant 4 : index
    %c0_80 = arith.constant 0 : index
    %76 = vector.load %arg8[%c4_79, %c0_80] : memref<60x288xbf16, #tpu.memory_space<vmem>>, vector<4x288xbf16>
    tpu.vector_store %arg8[%c4_79, %c0_80], %75 {strides = array<i32>} : memref<60x288xbf16, #tpu.memory_space<vmem>>, vector<4x288xbf16>,
    %c0_81 = arith.constant 0 : index
    %c0_82 = arith.constant 0 : index
    %c2_83 = arith.constant 2 : index
    %77 = vector.load %arg1[%c0_81, %c0_82, %c2_83] : memref<1x4x384xbf16, #tpu.memory_space<vmem>>, vector<1x4x288xbf16>
    %78 = vector.shape_cast %77 : vector<1x4x288xbf16> to vector<4x288xbf16>
    %c8_84 = arith.constant 8 : index
    %c0_85 = arith.constant 0 : index
    %79 = vector.load %arg8[%c8_84, %c0_85] : memref<60x288xbf16, #tpu.memory_space<vmem>>, vector<4x288xbf16>
    tpu.vector_store %arg8[%c8_84, %c0_85], %78 {strides = array<i32>} : memref<60x288xbf16, #tpu.memory_space<vmem>>, vector<4x288xbf16>,
    %c0_86 = arith.constant 0 : index
    %c0_87 = arith.constant 0 : index
    %c18_88 = arith.constant 18 : index
    %80 = vector.load %arg1[%c0_86, %c0_87, %c18_88] : memref<1x4x384xbf16, #tpu.memory_space<vmem>>, vector<1x4x288xbf16>
    %81 = vector.shape_cast %80 : vector<1x4x288xbf16> to vector<4x288xbf16>
    %c12_89 = arith.constant 12 : index
    %c0_90 = arith.constant 0 : index
    %82 = vector.load %arg8[%c12_89, %c0_90] : memref<60x288xbf16, #tpu.memory_space<vmem>>, vector<4x288xbf16>
    tpu.vector_store %arg8[%c12_89, %c0_90], %81 {strides = array<i32>} : memref<60x288xbf16, #tpu.memory_space<vmem>>, vector<4x288xbf16>,
    %c0_91 = arith.constant 0 : index
    %c0_92 = arith.constant 0 : index
    %c19_93 = arith.constant 19 : index
    %83 = vector.load %arg1[%c0_91, %c0_92, %c19_93] : memref<1x4x384xbf16, #tpu.memory_space<vmem>>, vector<1x4x288xbf16>
    %84 = vector.shape_cast %83 : vector<1x4x288xbf16> to vector<4x288xbf16>
    %c16_94 = arith.constant 16 : index
    %c0_95 = arith.constant 0 : index
    %85 = vector.load %arg8[%c16_94, %c0_95] : memref<60x288xbf16, #tpu.memory_space<vmem>>, vector<4x288xbf16>
    tpu.vector_store %arg8[%c16_94, %c0_95], %84 {strides = array<i32>} : memref<60x288xbf16, #tpu.memory_space<vmem>>, vector<4x288xbf16>,
    %c0_96 = arith.constant 0 : index
    %c0_97 = arith.constant 0 : index
    %c20_98 = arith.constant 20 : index
    %86 = vector.load %arg1[%c0_96, %c0_97, %c20_98] : memref<1x4x384xbf16, #tpu.memory_space<vmem>>, vector<1x4x288xbf16>
    %87 = vector.shape_cast %86 : vector<1x4x288xbf16> to vector<4x288xbf16>
    %c20_99 = arith.constant 20 : index
    %c0_100 = arith.constant 0 : index
    %88 = vector.load %arg8[%c20_99, %c0_100] : memref<60x288xbf16, #tpu.memory_space<vmem>>, vector<4x288xbf16>
    tpu.vector_store %arg8[%c20_99, %c0_100], %87 {strides = array<i32>} : memref<60x288xbf16, #tpu.memory_space<vmem>>, vector<4x288xbf16>,
    %c0_101 = arith.constant 0 : index
    %c0_102 = arith.constant 0 : index
    %c36_103 = arith.constant 36 : index
    %89 = vector.load %arg1[%c0_101, %c0_102, %c36_103] : memref<1x4x384xbf16, #tpu.memory_space<vmem>>, vector<1x4x288xbf16>
    %90 = vector.shape_cast %89 : vector<1x4x288xbf16> to vector<4x288xbf16>
    %c24_104 = arith.constant 24 : index
    %c0_105 = arith.constant 0 : index
    %91 = vector.load %arg8[%c24_104, %c0_105] : memref<60x288xbf16, #tpu.memory_space<vmem>>, vector<4x288xbf16>
    tpu.vector_store %arg8[%c24_104, %c0_105], %90 {strides = array<i32>} : memref<60x288xbf16, #tpu.memory_space<vmem>>, vector<4x288xbf16>,
    %c0_106 = arith.constant 0 : index
    %c0_107 = arith.constant 0 : index
    %c37_108 = arith.constant 37 : index
    %92 = vector.load %arg1[%c0_106, %c0_107, %c37_108] : memref<1x4x384xbf16, #tpu.memory_space<vmem>>, vector<1x4x288xbf16>
    %93 = vector.shape_cast %92 : vector<1x4x288xbf16> to vector<4x288xbf16>
    %c28_109 = arith.constant 28 : index
    %c0_110 = arith.constant 0 : index
    %94 = vector.load %arg8[%c28_109, %c0_110] : memref<60x288xbf16, #tpu.memory_space<vmem>>, vector<4x288xbf16>
    tpu.vector_store %arg8[%c28_109, %c0_110], %93 {strides = array<i32>} : memref<60x288xbf16, #tpu.memory_space<vmem>>, vector<4x288xbf16>,
    %c0_111 = arith.constant 0 : index
    %c0_112 = arith.constant 0 : index
    %c38_113 = arith.constant 38 : index
    %95 = vector.load %arg1[%c0_111, %c0_112, %c38_113] : memref<1x4x384xbf16, #tpu.memory_space<vmem>>, vector<1x4x288xbf16>
    %96 = vector.shape_cast %95 : vector<1x4x288xbf16> to vector<4x288xbf16>
    %c32_114 = arith.constant 32 : index
    %c0_115 = arith.constant 0 : index
    %97 = vector.load %arg8[%c32_114, %c0_115] : memref<60x288xbf16, #tpu.memory_space<vmem>>, vector<4x288xbf16>
    tpu.vector_store %arg8[%c32_114, %c0_115], %96 {strides = array<i32>} : memref<60x288xbf16, #tpu.memory_space<vmem>>, vector<4x288xbf16>,
    %c0_116 = arith.constant 0 : index
    %c0_117 = arith.constant 0 : index
    %c18_118 = arith.constant 18 : index
    %98 = vector.load %arg1[%c0_116, %c0_117, %c18_118] : memref<1x4x384xbf16, #tpu.memory_space<vmem>>, vector<1x4x288xbf16>
    %99 = vector.shape_cast %98 : vector<1x4x288xbf16> to vector<4x288xbf16>
    %c36_119 = arith.constant 36 : index
    %c0_120 = arith.constant 0 : index
    %100 = vector.load %arg8[%c36_119, %c0_120] : memref<60x288xbf16, #tpu.memory_space<vmem>>, vector<4x288xbf16>
    tpu.vector_store %arg8[%c36_119, %c0_120], %99 {strides = array<i32>} : memref<60x288xbf16, #tpu.memory_space<vmem>>, vector<4x288xbf16>,
    %c0_121 = arith.constant 0 : index
    %c0_122 = arith.constant 0 : index
    %c19_123 = arith.constant 19 : index
    %101 = vector.load %arg1[%c0_121, %c0_122, %c19_123] : memref<1x4x384xbf16, #tpu.memory_space<vmem>>, vector<1x4x288xbf16>
    %102 = vector.shape_cast %101 : vector<1x4x288xbf16> to vector<4x288xbf16>
    %c40_124 = arith.constant 40 : index
    %c0_125 = arith.constant 0 : index
    %103 = vector.load %arg8[%c40_124, %c0_125] : memref<60x288xbf16, #tpu.memory_space<vmem>>, vector<4x288xbf16>
    tpu.vector_store %arg8[%c40_124, %c0_125], %102 {strides = array<i32>} : memref<60x288xbf16, #tpu.memory_space<vmem>>, vector<4x288xbf16>,
    %c0_126 = arith.constant 0 : index
    %c0_127 = arith.constant 0 : index
    %c20_128 = arith.constant 20 : index
    %104 = vector.load %arg1[%c0_126, %c0_127, %c20_128] : memref<1x4x384xbf16, #tpu.memory_space<vmem>>, vector<1x4x288xbf16>
    %105 = vector.shape_cast %104 : vector<1x4x288xbf16> to vector<4x288xbf16>
    %c44_129 = arith.constant 44 : index
    %c0_130 = arith.constant 0 : index
    %106 = vector.load %arg8[%c44_129, %c0_130] : memref<60x288xbf16, #tpu.memory_space<vmem>>, vector<4x288xbf16>
    tpu.vector_store %arg8[%c44_129, %c0_130], %105 {strides = array<i32>} : memref<60x288xbf16, #tpu.memory_space<vmem>>, vector<4x288xbf16>,
    %c0_131 = arith.constant 0 : index
    %c0_132 = arith.constant 0 : index
    %c1_133 = arith.constant 1 : index
    %107 = vector.load %arg1[%c0_131, %c0_132, %c1_133] : memref<1x4x384xbf16, #tpu.memory_space<vmem>>, vector<1x4x288xbf16>
    %108 = vector.shape_cast %107 : vector<1x4x288xbf16> to vector<4x288xbf16>
    %c48_134 = arith.constant 48 : index
    %c0_135 = arith.constant 0 : index
    %109 = vector.load %arg8[%c48_134, %c0_135] : memref<60x288xbf16, #tpu.memory_space<vmem>>, vector<4x288xbf16>
    tpu.vector_store %arg8[%c48_134, %c0_135], %108 {strides = array<i32>} : memref<60x288xbf16, #tpu.memory_space<vmem>>, vector<4x288xbf16>,
    %c0_136 = arith.constant 0 : index
    %c0_137 = arith.constant 0 : index
    %c19_138 = arith.constant 19 : index
    %110 = vector.load %arg1[%c0_136, %c0_137, %c19_138] : memref<1x4x384xbf16, #tpu.memory_space<vmem>>, vector<1x4x288xbf16>
    %111 = vector.shape_cast %110 : vector<1x4x288xbf16> to vector<4x288xbf16>
    %c52_139 = arith.constant 52 : index
    %c0_140 = arith.constant 0 : index
    %112 = vector.load %arg8[%c52_139, %c0_140] : memref<60x288xbf16, #tpu.memory_space<vmem>>, vector<4x288xbf16>
    tpu.vector_store %arg8[%c52_139, %c0_140], %111 {strides = array<i32>} : memref<60x288xbf16, #tpu.memory_space<vmem>>, vector<4x288xbf16>,
    %c0_141 = arith.constant 0 : index
    %c0_142 = arith.constant 0 : index
    %c37_143 = arith.constant 37 : index
    %113 = vector.load %arg1[%c0_141, %c0_142, %c37_143] : memref<1x4x384xbf16, #tpu.memory_space<vmem>>, vector<1x4x288xbf16>
    %114 = vector.shape_cast %113 : vector<1x4x288xbf16> to vector<4x288xbf16>
    %c56_144 = arith.constant 56 : index
    %c0_145 = arith.constant 0 : index
    %115 = vector.load %arg8[%c56_144, %c0_145] : memref<60x288xbf16, #tpu.memory_space<vmem>>, vector<4x288xbf16>
    tpu.vector_store %arg8[%c56_144, %c0_145], %114 {strides = array<i32>} : memref<60x288xbf16, #tpu.memory_space<vmem>>, vector<4x288xbf16>,
    %c1_146 = arith.constant 1 : index
    %c0_147 = arith.constant 0 : index
    %c0_148 = arith.constant 0 : index
    %116 = vector.load %arg2[%c1_146, %c0_147, %c0_148] : memref<4x8x60xbf16, #tpu.memory_space<vmem>>, vector<1x8x60xbf16>
    %117 = vector.shape_cast %116 : vector<1x8x60xbf16> to vector<8x60xbf16>
    %c0_149 = arith.constant 0 : index
    %c0_150 = arith.constant 0 : index
    %118 = vector.load %arg8[%c0_149, %c0_150] : memref<60x288xbf16, #tpu.memory_space<vmem>>, vector<60x288xbf16>
    %cst_151 = arith.constant dense<0.000000e+00> : vector<8x288xf32>
    %119 = tpu.matmul %117, %118, %cst_151 {dimension_numbers = #tpu.dot_dimension_numbers<[1], [0], [0], [1], [0, 0, 1, 1], [], []>} : vector<8x60xbf16>, vector<60x288xbf16>, vector<8x288xf32> -> vector<8x288xf32>
    %c1_152 = arith.constant 1 : index
    %c0_153 = arith.constant 0 : index
    %c0_154 = arith.constant 0 : index
    %120 = vector.load %arg3[%c1_152, %c0_153, %c0_154] : memref<4x8x3xf32, #tpu.memory_space<vmem>>, vector<1x8x3xf32>
    %121 = vector.shape_cast %120 : vector<1x8x3xf32> to vector<8x3xf32>
    %122 = vector.extract_strided_slice %121 {offsets = [0, 0], sizes = [8, 1], strides = [1, 1]} : vector<8x3xf32> to vector<8x1xf32>
    %123 = vector.broadcast %122 : vector<8x1xf32> to vector<8x288xf32>
    %124 = arith.addf %119, %123 : vector<8x288xf32>
    %cst_155 = arith.constant 0.000000e+00 : f32
    %125 = vector.broadcast %cst_155 : f32 to vector<8x288xf32>
    %126 = arith.maximumf %124, %125 : vector<8x288xf32>
    %127 = vector.extract_strided_slice %121 {offsets = [0, 1], sizes = [8, 1], strides = [1, 1]} : vector<8x3xf32> to vector<8x1xf32>
    %128 = vector.broadcast %127 : vector<8x1xf32> to vector<8x288xf32>
    %129 = arith.mulf %126, %128 : vector<8x288xf32>
    %130 = vector.extract_strided_slice %121 {offsets = [0, 2], sizes = [8, 1], strides = [1, 1]} : vector<8x3xf32> to vector<8x1xf32>
    %131 = vector.broadcast %130 : vector<8x1xf32> to vector<8x288xf32>
    %132 = arith.addf %129, %131 : vector<8x288xf32>
    %cst_156 = arith.constant 0.000000e+00 : f32
    %133 = vector.broadcast %cst_156 : f32 to vector<8x288xf32>
    %134 = arith.maximumf %132, %133 : vector<8x288xf32>
    %135 = arith.truncf %134 : vector<8x288xf32> to vector<8x288xbf16>
    %c1_157 = arith.constant 1 : index
    %c0_158 = arith.constant 0 : index
    %c0_159 = arith.constant 0 : index
    %136 = vector.load %arg4[%c1_157, %c0_158, %c0_159] : memref<4x288x256xbf16, #tpu.memory_space<vmem>>, vector<1x288x256xbf16>
    %137 = vector.shape_cast %136 : vector<1x288x256xbf16> to vector<288x256xbf16>
    %cst_160 = arith.constant dense<0.000000e+00> : vector<8x256xf32>
    %138 = tpu.matmul %135, %137, %cst_160 {dimension_numbers = #tpu.dot_dimension_numbers<[1], [0], [0], [1], [0, 0, 1, 1], [], []>} : vector<8x288xbf16>, vector<288x256xbf16>, vector<8x256xf32> -> vector<8x256xf32>
    %c0_161 = arith.constant 0 : index
    %c8_162 = arith.constant 8 : index
    %c0_163 = arith.constant 0 : index
    %139 = vector.load %arg7[%c0_161, %c8_162, %c0_163] : memref<1x40x256xf32, #tpu.memory_space<vmem>>, vector<1x8x256xf32>
    %140 = vector.shape_cast %139 : vector<1x8x256xf32> to vector<8x256xf32>
    %141 = vector.shape_cast %138 : vector<8x256xf32> to vector<1x8x256xf32>
    tpu.vector_store %arg7[%c0_161, %c8_162, %c0_163], %141 {strides = array<i32>} : memref<1x40x256xf32, #tpu.memory_space<vmem>>, vector<1x8x256xf32>,
    %c0_164 = arith.constant 0 : index
    %c0_165 = arith.constant 0 : index
    %c0_166 = arith.constant 0 : index
    %142 = vector.load %arg1[%c0_164, %c0_165, %c0_166] : memref<1x4x384xbf16, #tpu.memory_space<vmem>>, vector<1x4x252xbf16>
    %143 = vector.shape_cast %142 : vector<1x4x252xbf16> to vector<4x252xbf16>
    %c0_167 = arith.constant 0 : index
    %c0_168 = arith.constant 0 : index
    %144 = vector.load %arg8[%c0_167, %c0_168] : memref<60x288xbf16, #tpu.memory_space<vmem>>, vector<4x252xbf16>
    tpu.vector_store %arg8[%c0_167, %c0_168], %143 {strides = array<i32>} : memref<60x288xbf16, #tpu.memory_space<vmem>>, vector<4x252xbf16>,
    %c0_169 = arith.constant 0 : index
    %c0_170 = arith.constant 0 : index
    %c2_171 = arith.constant 2 : index
    %145 = vector.load %arg1[%c0_169, %c0_170, %c2_171] : memref<1x4x384xbf16, #tpu.memory_space<vmem>>, vector<1x4x252xbf16>
    %146 = vector.shape_cast %145 : vector<1x4x252xbf16> to vector<4x252xbf16>
    %c4_172 = arith.constant 4 : index
    %c0_173 = arith.constant 0 : index
    %147 = vector.load %arg8[%c4_172, %c0_173] : memref<60x288xbf16, #tpu.memory_space<vmem>>, vector<4x252xbf16>
    tpu.vector_store %arg8[%c4_172, %c0_173], %146 {strides = array<i32>} : memref<60x288xbf16, #tpu.memory_space<vmem>>, vector<4x252xbf16>,
    %c0_174 = arith.constant 0 : index
    %c0_175 = arith.constant 0 : index
    %c4_176 = arith.constant 4 : index
    %148 = vector.load %arg1[%c0_174, %c0_175, %c4_176] : memref<1x4x384xbf16, #tpu.memory_space<vmem>>, vector<1x4x252xbf16>
    %149 = vector.shape_cast %148 : vector<1x4x252xbf16> to vector<4x252xbf16>
    %c8_177 = arith.constant 8 : index
    %c0_178 = arith.constant 0 : index
    %150 = vector.load %arg8[%c8_177, %c0_178] : memref<60x288xbf16, #tpu.memory_space<vmem>>, vector<4x252xbf16>
    tpu.vector_store %arg8[%c8_177, %c0_178], %149 {strides = array<i32>} : memref<60x288xbf16, #tpu.memory_space<vmem>>, vector<4x252xbf16>,
    %c0_179 = arith.constant 0 : index
    %c0_180 = arith.constant 0 : index
    %c36_181 = arith.constant 36 : index
    %151 = vector.load %arg1[%c0_179, %c0_180, %c36_181] : memref<1x4x384xbf16, #tpu.memory_space<vmem>>, vector<1x4x252xbf16>
    %152 = vector.shape_cast %151 : vector<1x4x252xbf16> to vector<4x252xbf16>
    %c12_182 = arith.constant 12 : index
    %c0_183 = arith.constant 0 : index
    %153 = vector.load %arg8[%c12_182, %c0_183] : memref<60x288xbf16, #tpu.memory_space<vmem>>, vector<4x252xbf16>
    tpu.vector_store %arg8[%c12_182, %c0_183], %152 {strides = array<i32>} : memref<60x288xbf16, #tpu.memory_space<vmem>>, vector<4x252xbf16>,
    %c0_184 = arith.constant 0 : index
    %c0_185 = arith.constant 0 : index
    %c38_186 = arith.constant 38 : index
    %154 = vector.load %arg1[%c0_184, %c0_185, %c38_186] : memref<1x4x384xbf16, #tpu.memory_space<vmem>>, vector<1x4x252xbf16>
    %155 = vector.shape_cast %154 : vector<1x4x252xbf16> to vector<4x252xbf16>
    %c16_187 = arith.constant 16 : index
    %c0_188 = arith.constant 0 : index
    %156 = vector.load %arg8[%c16_187, %c0_188] : memref<60x288xbf16, #tpu.memory_space<vmem>>, vector<4x252xbf16>
    tpu.vector_store %arg8[%c16_187, %c0_188], %155 {strides = array<i32>} : memref<60x288xbf16, #tpu.memory_space<vmem>>, vector<4x252xbf16>,
    %c0_189 = arith.constant 0 : index
    %c0_190 = arith.constant 0 : index
    %c40_191 = arith.constant 40 : index
    %157 = vector.load %arg1[%c0_189, %c0_190, %c40_191] : memref<1x4x384xbf16, #tpu.memory_space<vmem>>, vector<1x4x252xbf16>
    %158 = vector.shape_cast %157 : vector<1x4x252xbf16> to vector<4x252xbf16>
    %c20_192 = arith.constant 20 : index
    %c0_193 = arith.constant 0 : index
    %159 = vector.load %arg8[%c20_192, %c0_193] : memref<60x288xbf16, #tpu.memory_space<vmem>>, vector<4x252xbf16>
    tpu.vector_store %arg8[%c20_192, %c0_193], %158 {strides = array<i32>} : memref<60x288xbf16, #tpu.memory_space<vmem>>, vector<4x252xbf16>,
    %c0_194 = arith.constant 0 : index
    %c0_195 = arith.constant 0 : index
    %c72 = arith.constant 72 : index
    %160 = vector.load %arg1[%c0_194, %c0_195, %c72] : memref<1x4x384xbf16, #tpu.memory_space<vmem>>, vector<1x4x252xbf16>
    %161 = vector.shape_cast %160 : vector<1x4x252xbf16> to vector<4x252xbf16>
    %c24_196 = arith.constant 24 : index
    %c0_197 = arith.constant 0 : index
    %162 = vector.load %arg8[%c24_196, %c0_197] : memref<60x288xbf16, #tpu.memory_space<vmem>>, vector<4x252xbf16>
    tpu.vector_store %arg8[%c24_196, %c0_197], %161 {strides = array<i32>} : memref<60x288xbf16, #tpu.memory_space<vmem>>, vector<4x252xbf16>,
    %c0_198 = arith.constant 0 : index
    %c0_199 = arith.constant 0 : index
    %c74 = arith.constant 74 : index
    %163 = vector.load %arg1[%c0_198, %c0_199, %c74] : memref<1x4x384xbf16, #tpu.memory_space<vmem>>, vector<1x4x252xbf16>
    %164 = vector.shape_cast %163 : vector<1x4x252xbf16> to vector<4x252xbf16>
    %c28_200 = arith.constant 28 : index
    %c0_201 = arith.constant 0 : index
    %165 = vector.load %arg8[%c28_200, %c0_201] : memref<60x288xbf16, #tpu.memory_space<vmem>>, vector<4x252xbf16>
    tpu.vector_store %arg8[%c28_200, %c0_201], %164 {strides = array<i32>} : memref<60x288xbf16, #tpu.memory_space<vmem>>, vector<4x252xbf16>,
    %c0_202 = arith.constant 0 : index
    %c0_203 = arith.constant 0 : index
    %c76 = arith.constant 76 : index
    %166 = vector.load %arg1[%c0_202, %c0_203, %c76] : memref<1x4x384xbf16, #tpu.memory_space<vmem>>, vector<1x4x252xbf16>
    %167 = vector.shape_cast %166 : vector<1x4x252xbf16> to vector<4x252xbf16>
    %c32_204 = arith.constant 32 : index
    %c0_205 = arith.constant 0 : index
    %168 = vector.load %arg8[%c32_204, %c0_205] : memref<60x288xbf16, #tpu.memory_space<vmem>>, vector<4x252xbf16>
    tpu.vector_store %arg8[%c32_204, %c0_205], %167 {strides = array<i32>} : memref<60x288xbf16, #tpu.memory_space<vmem>>, vector<4x252xbf16>,
    %c0_206 = arith.constant 0 : index
    %c0_207 = arith.constant 0 : index
    %c18_208 = arith.constant 18 : index
    %169 = vector.load %arg1[%c0_206, %c0_207, %c18_208] : memref<1x4x384xbf16, #tpu.memory_space<vmem>>, vector<1x4x252xbf16>
    %170 = vector.shape_cast %169 : vector<1x4x252xbf16> to vector<4x252xbf16>
    %c36_209 = arith.constant 36 : index
    %c0_210 = arith.constant 0 : index
    %171 = vector.load %arg8[%c36_209, %c0_210] : memref<60x288xbf16, #tpu.memory_space<vmem>>, vector<4x252xbf16>
    tpu.vector_store %arg8[%c36_209, %c0_210], %170 {strides = array<i32>} : memref<60x288xbf16, #tpu.memory_space<vmem>>, vector<4x252xbf16>,
    %c0_211 = arith.constant 0 : index
    %c0_212 = arith.constant 0 : index
    %c20_213 = arith.constant 20 : index
    %172 = vector.load %arg1[%c0_211, %c0_212, %c20_213] : memref<1x4x384xbf16, #tpu.memory_space<vmem>>, vector<1x4x252xbf16>
    %173 = vector.shape_cast %172 : vector<1x4x252xbf16> to vector<4x252xbf16>
    %c40_214 = arith.constant 40 : index
    %c0_215 = arith.constant 0 : index
    %174 = vector.load %arg8[%c40_214, %c0_215] : memref<60x288xbf16, #tpu.memory_space<vmem>>, vector<4x252xbf16>
    tpu.vector_store %arg8[%c40_214, %c0_215], %173 {strides = array<i32>} : memref<60x288xbf16, #tpu.memory_space<vmem>>, vector<4x252xbf16>,
    %c0_216 = arith.constant 0 : index
    %c0_217 = arith.constant 0 : index
    %c22 = arith.constant 22 : index
    %175 = vector.load %arg1[%c0_216, %c0_217, %c22] : memref<1x4x384xbf16, #tpu.memory_space<vmem>>, vector<1x4x252xbf16>
    %176 = vector.shape_cast %175 : vector<1x4x252xbf16> to vector<4x252xbf16>
    %c44_218 = arith.constant 44 : index
    %c0_219 = arith.constant 0 : index
    %177 = vector.load %arg8[%c44_218, %c0_219] : memref<60x288xbf16, #tpu.memory_space<vmem>>, vector<4x252xbf16>
    tpu.vector_store %arg8[%c44_218, %c0_219], %176 {strides = array<i32>} : memref<60x288xbf16, #tpu.memory_space<vmem>>, vector<4x252xbf16>,
    %c0_220 = arith.constant 0 : index
    %c0_221 = arith.constant 0 : index
    %c1_222 = arith.constant 1 : index
    %178 = vector.load %arg1[%c0_220, %c0_221, %c1_222] : memref<1x4x384xbf16, #tpu.memory_space<vmem>>, vector<1x4x252xbf16>
    %179 = vector.shape_cast %178 : vector<1x4x252xbf16> to vector<4x252xbf16>
    %c48_223 = arith.constant 48 : index
    %c0_224 = arith.constant 0 : index
    %180 = vector.load %arg8[%c48_223, %c0_224] : memref<60x288xbf16, #tpu.memory_space<vmem>>, vector<4x252xbf16>
    tpu.vector_store %arg8[%c48_223, %c0_224], %179 {strides = array<i32>} : memref<60x288xbf16, #tpu.memory_space<vmem>>, vector<4x252xbf16>,
    %c0_225 = arith.constant 0 : index
    %c0_226 = arith.constant 0 : index
    %c37_227 = arith.constant 37 : index
    %181 = vector.load %arg1[%c0_225, %c0_226, %c37_227] : memref<1x4x384xbf16, #tpu.memory_space<vmem>>, vector<1x4x252xbf16>
    %182 = vector.shape_cast %181 : vector<1x4x252xbf16> to vector<4x252xbf16>
    %c52_228 = arith.constant 52 : index
    %c0_229 = arith.constant 0 : index
    %183 = vector.load %arg8[%c52_228, %c0_229] : memref<60x288xbf16, #tpu.memory_space<vmem>>, vector<4x252xbf16>
    tpu.vector_store %arg8[%c52_228, %c0_229], %182 {strides = array<i32>} : memref<60x288xbf16, #tpu.memory_space<vmem>>, vector<4x252xbf16>,
    %c0_230 = arith.constant 0 : index
    %c0_231 = arith.constant 0 : index
    %c73 = arith.constant 73 : index
    %184 = vector.load %arg1[%c0_230, %c0_231, %c73] : memref<1x4x384xbf16, #tpu.memory_space<vmem>>, vector<1x4x252xbf16>
    %185 = vector.shape_cast %184 : vector<1x4x252xbf16> to vector<4x252xbf16>
    %c56_232 = arith.constant 56 : index
    %c0_233 = arith.constant 0 : index
    %186 = vector.load %arg8[%c56_232, %c0_233] : memref<60x288xbf16, #tpu.memory_space<vmem>>, vector<4x252xbf16>
    tpu.vector_store %arg8[%c56_232, %c0_233], %185 {strides = array<i32>} : memref<60x288xbf16, #tpu.memory_space<vmem>>, vector<4x252xbf16>,
    %cst_234 = arith.constant 0.000000e+00 : bf16
    %187 = vector.broadcast %cst_234 : bf16 to vector<60x36xbf16>
    %c0_235 = arith.constant 0 : index
    %c252 = arith.constant 252 : index
    %188 = vector.load %arg8[%c0_235, %c252] : memref<60x288xbf16, #tpu.memory_space<vmem>>, vector<60x36xbf16>
    tpu.vector_store %arg8[%c0_235, %c252], %187 {strides = array<i32>} : memref<60x288xbf16, #tpu.memory_space<vmem>>, vector<60x36xbf16>,
    %c2_236 = arith.constant 2 : index
    %c0_237 = arith.constant 0 : index
    %c0_238 = arith.constant 0 : index
    %189 = vector.load %arg2[%c2_236, %c0_237, %c0_238] : memref<4x8x60xbf16, #tpu.memory_space<vmem>>, vector<1x8x60xbf16>
    %190 = vector.shape_cast %189 : vector<1x8x60xbf16> to vector<8x60xbf16>
    %c0_239 = arith.constant 0 : index
    %c0_240 = arith.constant 0 : index
    %191 = vector.load %arg8[%c0_239, %c0_240] : memref<60x288xbf16, #tpu.memory_space<vmem>>, vector<60x288xbf16>
    %cst_241 = arith.constant dense<0.000000e+00> : vector<8x288xf32>
    %192 = tpu.matmul %190, %191, %cst_241 {dimension_numbers = #tpu.dot_dimension_numbers<[1], [0], [0], [1], [0, 0, 1, 1], [], []>} : vector<8x60xbf16>, vector<60x288xbf16>, vector<8x288xf32> -> vector<8x288xf32>
    %c2_242 = arith.constant 2 : index
    %c0_243 = arith.constant 0 : index
    %c0_244 = arith.constant 0 : index
    %193 = vector.load %arg3[%c2_242, %c0_243, %c0_244] : memref<4x8x3xf32, #tpu.memory_space<vmem>>, vector<1x8x3xf32>
    %194 = vector.shape_cast %193 : vector<1x8x3xf32> to vector<8x3xf32>
    %195 = vector.extract_strided_slice %194 {offsets = [0, 0], sizes = [8, 1], strides = [1, 1]} : vector<8x3xf32> to vector<8x1xf32>
    %196 = vector.broadcast %195 : vector<8x1xf32> to vector<8x288xf32>
    %197 = arith.addf %192, %196 : vector<8x288xf32>
    %cst_245 = arith.constant 0.000000e+00 : f32
    %198 = vector.broadcast %cst_245 : f32 to vector<8x288xf32>
    %199 = arith.maximumf %197, %198 : vector<8x288xf32>
    %200 = vector.extract_strided_slice %194 {offsets = [0, 1], sizes = [8, 1], strides = [1, 1]} : vector<8x3xf32> to vector<8x1xf32>
    %201 = vector.broadcast %200 : vector<8x1xf32> to vector<8x288xf32>
    %202 = arith.mulf %199, %201 : vector<8x288xf32>
    %203 = vector.extract_strided_slice %194 {offsets = [0, 2], sizes = [8, 1], strides = [1, 1]} : vector<8x3xf32> to vector<8x1xf32>
    %204 = vector.broadcast %203 : vector<8x1xf32> to vector<8x288xf32>
    %205 = arith.addf %202, %204 : vector<8x288xf32>
    %cst_246 = arith.constant 0.000000e+00 : f32
    %206 = vector.broadcast %cst_246 : f32 to vector<8x288xf32>
    %207 = arith.maximumf %205, %206 : vector<8x288xf32>
    %208 = arith.truncf %207 : vector<8x288xf32> to vector<8x288xbf16>
    %c2_247 = arith.constant 2 : index
    %c0_248 = arith.constant 0 : index
    %c0_249 = arith.constant 0 : index
    %209 = vector.load %arg4[%c2_247, %c0_248, %c0_249] : memref<4x288x256xbf16, #tpu.memory_space<vmem>>, vector<1x288x256xbf16>
    %210 = vector.shape_cast %209 : vector<1x288x256xbf16> to vector<288x256xbf16>
    %cst_250 = arith.constant dense<0.000000e+00> : vector<8x256xf32>
    %211 = tpu.matmul %208, %210, %cst_250 {dimension_numbers = #tpu.dot_dimension_numbers<[1], [0], [0], [1], [0, 0, 1, 1], [], []>} : vector<8x288xbf16>, vector<288x256xbf16>, vector<8x256xf32> -> vector<8x256xf32>
    %c0_251 = arith.constant 0 : index
    %c16_252 = arith.constant 16 : index
    %c0_253 = arith.constant 0 : index
    %212 = vector.load %arg7[%c0_251, %c16_252, %c0_253] : memref<1x40x256xf32, #tpu.memory_space<vmem>>, vector<1x8x256xf32>
    %213 = vector.shape_cast %212 : vector<1x8x256xf32> to vector<8x256xf32>
    %214 = vector.shape_cast %211 : vector<8x256xf32> to vector<1x8x256xf32>
    tpu.vector_store %arg7[%c0_251, %c16_252, %c0_253], %214 {strides = array<i32>} : memref<1x40x256xf32, #tpu.memory_space<vmem>>, vector<1x8x256xf32>,
    %c0_254 = arith.constant 0 : index
    %c0_255 = arith.constant 0 : index
    %c0_256 = arith.constant 0 : index
    %215 = vector.load %arg1[%c0_254, %c0_255, %c0_256] : memref<1x4x384xbf16, #tpu.memory_space<vmem>>, vector<1x4x216xbf16>
    %216 = vector.shape_cast %215 : vector<1x4x216xbf16> to vector<4x216xbf16>
    %c0_257 = arith.constant 0 : index
    %c0_258 = arith.constant 0 : index
    %217 = vector.load %arg8[%c0_257, %c0_258] : memref<60x288xbf16, #tpu.memory_space<vmem>>, vector<4x216xbf16>
    tpu.vector_store %arg8[%c0_257, %c0_258], %216 {strides = array<i32>} : memref<60x288xbf16, #tpu.memory_space<vmem>>, vector<4x216xbf16>,
    %c0_259 = arith.constant 0 : index
    %c0_260 = arith.constant 0 : index
    %c3 = arith.constant 3 : index
    %218 = vector.load %arg1[%c0_259, %c0_260, %c3] : memref<1x4x384xbf16, #tpu.memory_space<vmem>>, vector<1x4x216xbf16>
    %219 = vector.shape_cast %218 : vector<1x4x216xbf16> to vector<4x216xbf16>
    %c4_261 = arith.constant 4 : index
    %c0_262 = arith.constant 0 : index
    %220 = vector.load %arg8[%c4_261, %c0_262] : memref<60x288xbf16, #tpu.memory_space<vmem>>, vector<4x216xbf16>
    tpu.vector_store %arg8[%c4_261, %c0_262], %219 {strides = array<i32>} : memref<60x288xbf16, #tpu.memory_space<vmem>>, vector<4x216xbf16>,
    %c0_263 = arith.constant 0 : index
    %c0_264 = arith.constant 0 : index
    %c6 = arith.constant 6 : index
    %221 = vector.load %arg1[%c0_263, %c0_264, %c6] : memref<1x4x384xbf16, #tpu.memory_space<vmem>>, vector<1x4x216xbf16>
    %222 = vector.shape_cast %221 : vector<1x4x216xbf16> to vector<4x216xbf16>
    %c8_265 = arith.constant 8 : index
    %c0_266 = arith.constant 0 : index
    %223 = vector.load %arg8[%c8_265, %c0_266] : memref<60x288xbf16, #tpu.memory_space<vmem>>, vector<4x216xbf16>
    tpu.vector_store %arg8[%c8_265, %c0_266], %222 {strides = array<i32>} : memref<60x288xbf16, #tpu.memory_space<vmem>>, vector<4x216xbf16>,
    %c0_267 = arith.constant 0 : index
    %c0_268 = arith.constant 0 : index
    %c54 = arith.constant 54 : index
    %224 = vector.load %arg1[%c0_267, %c0_268, %c54] : memref<1x4x384xbf16, #tpu.memory_space<vmem>>, vector<1x4x216xbf16>
    %225 = vector.shape_cast %224 : vector<1x4x216xbf16> to vector<4x216xbf16>
    %c12_269 = arith.constant 12 : index
    %c0_270 = arith.constant 0 : index
    %226 = vector.load %arg8[%c12_269, %c0_270] : memref<60x288xbf16, #tpu.memory_space<vmem>>, vector<4x216xbf16>
    tpu.vector_store %arg8[%c12_269, %c0_270], %225 {strides = array<i32>} : memref<60x288xbf16, #tpu.memory_space<vmem>>, vector<4x216xbf16>,
    %c0_271 = arith.constant 0 : index
    %c0_272 = arith.constant 0 : index
    %c57 = arith.constant 57 : index
    %227 = vector.load %arg1[%c0_271, %c0_272, %c57] : memref<1x4x384xbf16, #tpu.memory_space<vmem>>, vector<1x4x216xbf16>
    %228 = vector.shape_cast %227 : vector<1x4x216xbf16> to vector<4x216xbf16>
    %c16_273 = arith.constant 16 : index
    %c0_274 = arith.constant 0 : index
    %229 = vector.load %arg8[%c16_273, %c0_274] : memref<60x288xbf16, #tpu.memory_space<vmem>>, vector<4x216xbf16>
    tpu.vector_store %arg8[%c16_273, %c0_274], %228 {strides = array<i32>} : memref<60x288xbf16, #tpu.memory_space<vmem>>, vector<4x216xbf16>,
    %c0_275 = arith.constant 0 : index
    %c0_276 = arith.constant 0 : index
    %c60 = arith.constant 60 : index
    %230 = vector.load %arg1[%c0_275, %c0_276, %c60] : memref<1x4x384xbf16, #tpu.memory_space<vmem>>, vector<1x4x216xbf16>
    %231 = vector.shape_cast %230 : vector<1x4x216xbf16> to vector<4x216xbf16>
    %c20_277 = arith.constant 20 : index
    %c0_278 = arith.constant 0 : index
    %232 = vector.load %arg8[%c20_277, %c0_278] : memref<60x288xbf16, #tpu.memory_space<vmem>>, vector<4x216xbf16>
    tpu.vector_store %arg8[%c20_277, %c0_278], %231 {strides = array<i32>} : memref<60x288xbf16, #tpu.memory_space<vmem>>, vector<4x216xbf16>,
    %c0_279 = arith.constant 0 : index
    %c0_280 = arith.constant 0 : index
    %c108 = arith.constant 108 : index
    %233 = vector.load %arg1[%c0_279, %c0_280, %c108] : memref<1x4x384xbf16, #tpu.memory_space<vmem>>, vector<1x4x216xbf16>
    %234 = vector.shape_cast %233 : vector<1x4x216xbf16> to vector<4x216xbf16>
    %c24_281 = arith.constant 24 : index
    %c0_282 = arith.constant 0 : index
    %235 = vector.load %arg8[%c24_281, %c0_282] : memref<60x288xbf16, #tpu.memory_space<vmem>>, vector<4x216xbf16>
    tpu.vector_store %arg8[%c24_281, %c0_282], %234 {strides = array<i32>} : memref<60x288xbf16, #tpu.memory_space<vmem>>, vector<4x216xbf16>,
    %c0_283 = arith.constant 0 : index
    %c0_284 = arith.constant 0 : index
    %c111 = arith.constant 111 : index
    %236 = vector.load %arg1[%c0_283, %c0_284, %c111] : memref<1x4x384xbf16, #tpu.memory_space<vmem>>, vector<1x4x216xbf16>
    %237 = vector.shape_cast %236 : vector<1x4x216xbf16> to vector<4x216xbf16>
    %c28_285 = arith.constant 28 : index
    %c0_286 = arith.constant 0 : index
    %238 = vector.load %arg8[%c28_285, %c0_286] : memref<60x288xbf16, #tpu.memory_space<vmem>>, vector<4x216xbf16>
    tpu.vector_store %arg8[%c28_285, %c0_286], %237 {strides = array<i32>} : memref<60x288xbf16, #tpu.memory_space<vmem>>, vector<4x216xbf16>,
    %c0_287 = arith.constant 0 : index
    %c0_288 = arith.constant 0 : index
    %c114 = arith.constant 114 : index
    %239 = vector.load %arg1[%c0_287, %c0_288, %c114] : memref<1x4x384xbf16, #tpu.memory_space<vmem>>, vector<1x4x216xbf16>
    %240 = vector.shape_cast %239 : vector<1x4x216xbf16> to vector<4x216xbf16>
    %c32_289 = arith.constant 32 : index
    %c0_290 = arith.constant 0 : index
    %241 = vector.load %arg8[%c32_289, %c0_290] : memref<60x288xbf16, #tpu.memory_space<vmem>>, vector<4x216xbf16>
    tpu.vector_store %arg8[%c32_289, %c0_290], %240 {strides = array<i32>} : memref<60x288xbf16, #tpu.memory_space<vmem>>, vector<4x216xbf16>,
    %c0_291 = arith.constant 0 : index
    %c0_292 = arith.constant 0 : index
    %c18_293 = arith.constant 18 : index
    %242 = vector.load %arg1[%c0_291, %c0_292, %c18_293] : memref<1x4x384xbf16, #tpu.memory_space<vmem>>, vector<1x4x216xbf16>
    %243 = vector.shape_cast %242 : vector<1x4x216xbf16> to vector<4x216xbf16>
    %c36_294 = arith.constant 36 : index
    %c0_295 = arith.constant 0 : index
    %244 = vector.load %arg8[%c36_294, %c0_295] : memref<60x288xbf16, #tpu.memory_space<vmem>>, vector<4x216xbf16>
    tpu.vector_store %arg8[%c36_294, %c0_295], %243 {strides = array<i32>} : memref<60x288xbf16, #tpu.memory_space<vmem>>, vector<4x216xbf16>,
    %c0_296 = arith.constant 0 : index
    %c0_297 = arith.constant 0 : index
    %c21 = arith.constant 21 : index
    %245 = vector.load %arg1[%c0_296, %c0_297, %c21] : memref<1x4x384xbf16, #tpu.memory_space<vmem>>, vector<1x4x216xbf16>
    %246 = vector.shape_cast %245 : vector<1x4x216xbf16> to vector<4x216xbf16>
    %c40_298 = arith.constant 40 : index
    %c0_299 = arith.constant 0 : index
    %247 = vector.load %arg8[%c40_298, %c0_299] : memref<60x288xbf16, #tpu.memory_space<vmem>>, vector<4x216xbf16>
    tpu.vector_store %arg8[%c40_298, %c0_299], %246 {strides = array<i32>} : memref<60x288xbf16, #tpu.memory_space<vmem>>, vector<4x216xbf16>,
    %c0_300 = arith.constant 0 : index
    %c0_301 = arith.constant 0 : index
    %c24_302 = arith.constant 24 : index
    %248 = vector.load %arg1[%c0_300, %c0_301, %c24_302] : memref<1x4x384xbf16, #tpu.memory_space<vmem>>, vector<1x4x216xbf16>
    %249 = vector.shape_cast %248 : vector<1x4x216xbf16> to vector<4x216xbf16>
    %c44_303 = arith.constant 44 : index
    %c0_304 = arith.constant 0 : index
    %250 = vector.load %arg8[%c44_303, %c0_304] : memref<60x288xbf16, #tpu.memory_space<vmem>>, vector<4x216xbf16>
    tpu.vector_store %arg8[%c44_303, %c0_304], %249 {strides = array<i32>} : memref<60x288xbf16, #tpu.memory_space<vmem>>, vector<4x216xbf16>,
    %c0_305 = arith.constant 0 : index
    %c0_306 = arith.constant 0 : index
    %c1_307 = arith.constant 1 : index
    %251 = vector.load %arg1[%c0_305, %c0_306, %c1_307] : memref<1x4x384xbf16, #tpu.memory_space<vmem>>, vector<1x4x216xbf16>
    %252 = vector.shape_cast %251 : vector<1x4x216xbf16> to vector<4x216xbf16>
    %c48_308 = arith.constant 48 : index
    %c0_309 = arith.constant 0 : index
    %253 = vector.load %arg8[%c48_308, %c0_309] : memref<60x288xbf16, #tpu.memory_space<vmem>>, vector<4x216xbf16>
    tpu.vector_store %arg8[%c48_308, %c0_309], %252 {strides = array<i32>} : memref<60x288xbf16, #tpu.memory_space<vmem>>, vector<4x216xbf16>,
    %c0_310 = arith.constant 0 : index
    %c0_311 = arith.constant 0 : index
    %c55 = arith.constant 55 : index
    %254 = vector.load %arg1[%c0_310, %c0_311, %c55] : memref<1x4x384xbf16, #tpu.memory_space<vmem>>, vector<1x4x216xbf16>
    %255 = vector.shape_cast %254 : vector<1x4x216xbf16> to vector<4x216xbf16>
    %c52_312 = arith.constant 52 : index
    %c0_313 = arith.constant 0 : index
    %256 = vector.load %arg8[%c52_312, %c0_313] : memref<60x288xbf16, #tpu.memory_space<vmem>>, vector<4x216xbf16>
    tpu.vector_store %arg8[%c52_312, %c0_313], %255 {strides = array<i32>} : memref<60x288xbf16, #tpu.memory_space<vmem>>, vector<4x216xbf16>,
    %c0_314 = arith.constant 0 : index
    %c0_315 = arith.constant 0 : index
    %c109 = arith.constant 109 : index
    %257 = vector.load %arg1[%c0_314, %c0_315, %c109] : memref<1x4x384xbf16, #tpu.memory_space<vmem>>, vector<1x4x216xbf16>
    %258 = vector.shape_cast %257 : vector<1x4x216xbf16> to vector<4x216xbf16>
    %c56_316 = arith.constant 56 : index
    %c0_317 = arith.constant 0 : index
    %259 = vector.load %arg8[%c56_316, %c0_317] : memref<60x288xbf16, #tpu.memory_space<vmem>>, vector<4x216xbf16>
    tpu.vector_store %arg8[%c56_316, %c0_317], %258 {strides = array<i32>} : memref<60x288xbf16, #tpu.memory_space<vmem>>, vector<4x216xbf16>,
    %cst_318 = arith.constant 0.000000e+00 : bf16
    %260 = vector.broadcast %cst_318 : bf16 to vector<60x72xbf16>
    %c0_319 = arith.constant 0 : index
    %c216 = arith.constant 216 : index
    %261 = vector.load %arg8[%c0_319, %c216] : memref<60x288xbf16, #tpu.memory_space<vmem>>, vector<60x72xbf16>
    tpu.vector_store %arg8[%c0_319, %c216], %260 {strides = array<i32>} : memref<60x288xbf16, #tpu.memory_space<vmem>>, vector<60x72xbf16>,
    %c3_320 = arith.constant 3 : index
    %c0_321 = arith.constant 0 : index
    %c0_322 = arith.constant 0 : index
    %262 = vector.load %arg2[%c3_320, %c0_321, %c0_322] : memref<4x8x60xbf16, #tpu.memory_space<vmem>>, vector<1x8x60xbf16>
    %263 = vector.shape_cast %262 : vector<1x8x60xbf16> to vector<8x60xbf16>
    %c0_323 = arith.constant 0 : index
    %c0_324 = arith.constant 0 : index
    %264 = vector.load %arg8[%c0_323, %c0_324] : memref<60x288xbf16, #tpu.memory_space<vmem>>, vector<60x288xbf16>
    %cst_325 = arith.constant dense<0.000000e+00> : vector<8x288xf32>
    %265 = tpu.matmul %263, %264, %cst_325 {dimension_numbers = #tpu.dot_dimension_numbers<[1], [0], [0], [1], [0, 0, 1, 1], [], []>} : vector<8x60xbf16>, vector<60x288xbf16>, vector<8x288xf32> -> vector<8x288xf32>
    %c3_326 = arith.constant 3 : index
    %c0_327 = arith.constant 0 : index
    %c0_328 = arith.constant 0 : index
    %266 = vector.load %arg3[%c3_326, %c0_327, %c0_328] : memref<4x8x3xf32, #tpu.memory_space<vmem>>, vector<1x8x3xf32>
    %267 = vector.shape_cast %266 : vector<1x8x3xf32> to vector<8x3xf32>
    %268 = vector.extract_strided_slice %267 {offsets = [0, 0], sizes = [8, 1], strides = [1, 1]} : vector<8x3xf32> to vector<8x1xf32>
    %269 = vector.broadcast %268 : vector<8x1xf32> to vector<8x288xf32>
    %270 = arith.addf %265, %269 : vector<8x288xf32>
    %cst_329 = arith.constant 0.000000e+00 : f32
    %271 = vector.broadcast %cst_329 : f32 to vector<8x288xf32>
    %272 = arith.maximumf %270, %271 : vector<8x288xf32>
    %273 = vector.extract_strided_slice %267 {offsets = [0, 1], sizes = [8, 1], strides = [1, 1]} : vector<8x3xf32> to vector<8x1xf32>
    %274 = vector.broadcast %273 : vector<8x1xf32> to vector<8x288xf32>
    %275 = arith.mulf %272, %274 : vector<8x288xf32>
    %276 = vector.extract_strided_slice %267 {offsets = [0, 2], sizes = [8, 1], strides = [1, 1]} : vector<8x3xf32> to vector<8x1xf32>
    %277 = vector.broadcast %276 : vector<8x1xf32> to vector<8x288xf32>
    %278 = arith.addf %275, %277 : vector<8x288xf32>
    %cst_330 = arith.constant 0.000000e+00 : f32
    %279 = vector.broadcast %cst_330 : f32 to vector<8x288xf32>
    %280 = arith.maximumf %278, %279 : vector<8x288xf32>
    %281 = arith.truncf %280 : vector<8x288xf32> to vector<8x288xbf16>
    %c3_331 = arith.constant 3 : index
    %c0_332 = arith.constant 0 : index
    %c0_333 = arith.constant 0 : index
    %282 = vector.load %arg4[%c3_331, %c0_332, %c0_333] : memref<4x288x256xbf16, #tpu.memory_space<vmem>>, vector<1x288x256xbf16>
    %283 = vector.shape_cast %282 : vector<1x288x256xbf16> to vector<288x256xbf16>
    %cst_334 = arith.constant dense<0.000000e+00> : vector<8x256xf32>
    %284 = tpu.matmul %281, %283, %cst_334 {dimension_numbers = #tpu.dot_dimension_numbers<[1], [0], [0], [1], [0, 0, 1, 1], [], []>} : vector<8x288xbf16>, vector<288x256xbf16>, vector<8x256xf32> -> vector<8x256xf32>
    %c0_335 = arith.constant 0 : index
    %c24_336 = arith.constant 24 : index
    %c0_337 = arith.constant 0 : index
    %285 = vector.load %arg7[%c0_335, %c24_336, %c0_337] : memref<1x40x256xf32, #tpu.memory_space<vmem>>, vector<1x8x256xf32>
    %286 = vector.shape_cast %285 : vector<1x8x256xf32> to vector<8x256xf32>
    %287 = vector.shape_cast %284 : vector<8x256xf32> to vector<1x8x256xf32>
    tpu.vector_store %arg7[%c0_335, %c24_336, %c0_337], %287 {strides = array<i32>} : memref<1x40x256xf32, #tpu.memory_space<vmem>>, vector<1x8x256xf32>,
    %c0_338 = arith.constant 0 : index
    %c0_339 = arith.constant 0 : index
    %c0_340 = arith.constant 0 : index
    %288 = vector.load %arg1[%c0_338, %c0_339, %c0_340] : memref<1x4x384xbf16, #tpu.memory_space<vmem>>, vector<1x4x384xbf16>
    %289 = vector.shape_cast %288 : vector<1x4x384xbf16> to vector<4x384xbf16>
    %290 = arith.extf %289 : vector<4x384xbf16> to vector<4x384xf32>
    %cst_341 = arith.constant dense<0.000000e+00> : vector<4xf32>
    %291 = vector.multi_reduction <add>, %290, %cst_341 [1] : vector<4x384xf32> to vector<4xf32>
    %292 = vector.shape_cast %291 : vector<4xf32> to vector<4x1xf32>
    %c0_342 = arith.constant 0 : index
    %c0_343 = arith.constant 0 : index
    %293 = vector.load %arg5[%c0_342, %c0_343] : memref<8x4xf32, #tpu.memory_space<vmem>>, vector<8x4xf32>
    %cst_344 = arith.constant dense<0.000000e+00> : vector<8x1xf32>
    %294 = tpu.matmul %293, %292, %cst_344 {dimension_numbers = #tpu.dot_dimension_numbers<[1], [0], [0], [1], [0, 0, 1, 1], [], []>} : vector<8x4xf32>, vector<4x1xf32>, vector<8x1xf32> -> vector<8x1xf32>
    %c0_345 = arith.constant 0 : index
    %c0_346 = arith.constant 0 : index
    %295 = vector.load %arg6[%c0_345, %c0_346] : memref<8x3xf32, #tpu.memory_space<vmem>>, vector<8x3xf32>
    %296 = vector.extract_strided_slice %295 {offsets = [0, 0], sizes = [8, 1], strides = [1, 1]} : vector<8x3xf32> to vector<8x1xf32>
    %297 = arith.addf %294, %296 : vector<8x1xf32>
    %cst_347 = arith.constant 0.000000e+00 : f32
    %298 = vector.broadcast %cst_347 : f32 to vector<8x1xf32>
    %299 = arith.maximumf %297, %298 : vector<8x1xf32>
    %300 = vector.extract_strided_slice %295 {offsets = [0, 1], sizes = [8, 1], strides = [1, 1]} : vector<8x3xf32> to vector<8x1xf32>
    %301 = arith.mulf %299, %300 : vector<8x1xf32>
    %302 = vector.extract_strided_slice %295 {offsets = [0, 2], sizes = [8, 1], strides = [1, 1]} : vector<8x3xf32> to vector<8x1xf32>
    %303 = arith.addf %301, %302 : vector<8x1xf32>
    %cst_348 = arith.constant 0.000000e+00 : f32
    %304 = vector.broadcast %cst_348 : f32 to vector<8x1xf32>
    %305 = arith.maximumf %303, %304 : vector<8x1xf32>
    %306 = vector.shape_cast %305 : vector<8x1xf32> to vector<8x1xf32>
    %307 = vector.broadcast %306 : vector<8x1xf32> to vector<8x256xf32>
    %c0_349 = arith.constant 0 : index
    %c32_350 = arith.constant 32 : index
    %c0_351 = arith.constant 0 : index
    %308 = vector.load %arg7[%c0_349, %c32_350, %c0_351] : memref<1x40x256xf32, #tpu.memory_space<vmem>>, vector<1x8x256xf32>
    %309 = vector.shape_cast %308 : vector<1x8x256xf32> to vector<8x256xf32>
    %310 = vector.shape_cast %307 : vector<8x256xf32> to vector<1x8x256xf32>
    tpu.vector_store %arg7[%c0_349, %c32_350, %c0_351], %310 {strides = array<i32>} : memref<1x40x256xf32, #tpu.memory_space<vmem>>, vector<1x8x256xf32>,
    return
  }
  func.func @transform_0(%arg0: i32) -> (i32, i32, i32) {
    %c0_i32 = arith.constant 0 : i32
    %c0_i32_0 = arith.constant 0 : i32
    %c0_i32_1 = arith.constant 0 : i32
    return %arg0, %c0_i32, %c0_i32_0 : i32, i32, i32
  }
  func.func @transform_1(%arg0: i32) -> (i32, i32, i32) {
    %c0_i32 = arith.constant 0 : i32
    %c0_i32_0 = arith.constant 0 : i32
    %c0_i32_1 = arith.constant 0 : i32
    %c0_i32_2 = arith.constant 0 : i32
    return %c0_i32, %c0_i32_0, %c0_i32_1 : i32, i32, i32
  }
  func.func @transform_2(%arg0: i32) -> (i32, i32, i32) {
    %c0_i32 = arith.constant 0 : i32
    %c0_i32_0 = arith.constant 0 : i32
    %c0_i32_1 = arith.constant 0 : i32
    %c0_i32_2 = arith.constant 0 : i32
    return %c0_i32, %c0_i32_0, %c0_i32_1 : i32, i32, i32
  }
  func.func @transform_3(%arg0: i32) -> (i32, i32, i32) {
    %c0_i32 = arith.constant 0 : i32
    %c0_i32_0 = arith.constant 0 : i32
    %c0_i32_1 = arith.constant 0 : i32
    %c0_i32_2 = arith.constant 0 : i32
    return %c0_i32, %c0_i32_0, %c0_i32_1 : i32, i32, i32
  }
  func.func @transform_4(%arg0: i32) -> (i32, i32) {
    %c0_i32 = arith.constant 0 : i32
    %c0_i32_0 = arith.constant 0 : i32
    %c0_i32_1 = arith.constant 0 : i32
    return %c0_i32, %c0_i32_0 : i32, i32
  }
  func.func @transform_5(%arg0: i32) -> (i32, i32) {
    %c0_i32 = arith.constant 0 : i32
    %c0_i32_0 = arith.constant 0 : i32
    %c0_i32_1 = arith.constant 0 : i32
    return %c0_i32, %c0_i32_0 : i32, i32
  }
  func.func @transform_6(%arg0: i32) -> (i32, i32, i32) {
    %c0_i32 = arith.constant 0 : i32
    %c0_i32_0 = arith.constant 0 : i32
    %c0_i32_1 = arith.constant 0 : i32
    return %arg0, %c0_i32, %c0_i32_0 : i32, i32, i32
  }
}

</mosaic_0001>

<llo_original>
// kernel: run.1
$region0: #{run.1}
  #allocation0 [shape = 'u32[]', space=smem, size = 0x4, offset = 0x4, fixed_abs, tag = 'smem constant byte address 0x4 - core index']
  #allocation1 [shape = 'u32[144,128]{1,0:T(1,128)}', space=vmem, size = 0x12000, scoped, tag = 'internal scratch']
  #allocation2 [shape = 'bf16[60,288]{1,0:T(8,128)(2,1)}', space=vmem, size = 0xc000, scoped, tag = 'scratch operand']
  %s0 = inlined_call_operand.vmem [shape: bf16[2,4,384], index: 0, kind: input, shape index: {}]
  %s1 = inlined_call_operand.vmem [shape: bf16[4,8,60], index: 1, kind: input, shape index: {}]
  %s2 = inlined_call_operand.vmem [shape: f32[4,8,3], index: 2, kind: input, shape index: {}]
  %s3 = inlined_call_operand.vmem [shape: bf16[4,288,256], index: 3, kind: input, shape index: {}]
  %s4 = inlined_call_operand.vmem [shape: f32[8,4], index: 4, kind: input, shape index: {}]
  %s5 = inlined_call_operand.vmem [shape: f32[8,3], index: 5, kind: input, shape index: {}]
  %s6 = inlined_call_operand.vmem [shape: f32[2,40,256], index: 6, kind: output, shape index: {}]
  %s7 = sld [smem:[#allocation0]]
  $region57: #{run.1} parent=0
    _
  %s9 = ssub.s32 1, %s7
  %s10 = scalar_select 0, %s9, %s7
  loop: start=0, step=1, limit=4
  $region2: #{run.1} parent=0 // loop_pre_header
    _
  $region3: #{run.1} parent=0 // loop_header
    %s12 = sphi 0, %s16
    %p13 = scmp.ge.s32.totalorder %s12, 4
    %s22 = sphi 0, %s24
    %s25 = sphi 0, %s22
    %s26 = sphi 0, %s25
    %s42 = sphi 0, %s26
    %s46 = sphi 0, %s46
    %s48 = sphi 0, %s46
    %s49 = sphi 0, %s48
    %s63 = sphi 0, %s49
    %s67 = sphi 0, %s67
    %s69 = sphi 0, %s67
    %s70 = sphi 0, %s69
    %s84 = sphi 0, %s70
    %s88 = sphi 0, %s88
    %s90 = sphi 0, %s88
    %s91 = sphi 0, %s90
    %s105 = sphi 0, %s91
    %s109 = sphi 0, %s109
    %s111 = sphi 0, %s109
    %s112 = sphi 0, %s111
    %s126 = sphi 0, %s112
    %s130 = sphi 0, %s130
    %s132 = sphi 0, %s130
    %s133 = sphi 0, %s132
    %s147 = sphi 0, %s133
    %s153 = sphi 0, %s155
    %s156 = sphi 0, %s153
    %s157 = sphi 0, %s156
    %s173 = sphi 0, %s157
  $region4: #{run.1} parent=0 // loop_header_branch
    %15 = sbr.rel (%p13) target = $region8
  $region5: #{run.1} parent=0 // loop_body
    %s17 = ssub.s32 %s12, 1
    %s18 = ssub.s32 %s12, 2
    %s19 = sadd.s32 %s12, 1
    %s20 = ssub.s32 %s12, %s19
    %p21 = scmp.eq.s32.totalorder %s20, 0
    %s23 = sadd.s32 %s22, 1
    %s24 = scalar_select %p21, %s22, %s23
    %p27 = pneg %p21
    %p28 = scmp.eq.s32.totalorder %s12, 1
    %p29 = por %p27, %p28
    %p30 = scmp.ne.s32.totalorder %s22, %s25
    %p31 = scmp.eq.s32.totalorder %s12, 0
    %p32 = por %p30, %p31
    %p33 = scmp.ne.s32.totalorder %s22, %s25
    %p34 = scmp.eq.s32.totalorder %s17, 1
    %p35 = por %p33, %p34
    %p36 = scmp.ne.s32.totalorder %s25, %s26
    %p37 = scmp.eq.s32.totalorder %s17, 0
    %p38 = por %p36, %p37
    %p39 = scmp.ne.s32.totalorder %s25, %s26
    %p40 = scmp.eq.s32.totalorder %s18, 1
    %p41 = por %p39, %p40
    %p43 = scmp.ne.s32.totalorder %s26, %s42
    %p44 = scmp.eq.s32.totalorder %s18, 0
    %p45 = por %p43, %p44
    %s47 = sadd.s32 %s46, 1
    %p50 = scmp.eq.s32.totalorder %s12, 1
    %p51 = scmp.ne.s32.totalorder %s46, %s48
    %p52 = scmp.eq.s32.totalorder %s12, 0
    %p53 = por %p51, %p52
    %p54 = scmp.ne.s32.totalorder %s46, %s48
    %p55 = scmp.eq.s32.totalorder %s17, 1
    %p56 = por %p54, %p55
    %p57 = scmp.ne.s32.totalorder %s48, %s49
    %p58 = scmp.eq.s32.totalorder %s17, 0
    %p59 = por %p57, %p58
    %p60 = scmp.ne.s32.totalorder %s48, %s49
    %p61 = scmp.eq.s32.totalorder %s18, 1
    %p62 = por %p60, %p61
    %p64 = scmp.ne.s32.totalorder %s49, %s63
    %p65 = scmp.eq.s32.totalorder %s18, 0
    %p66 = por %p64, %p65
    %s68 = sadd.s32 %s67, 1
    %p71 = scmp.eq.s32.totalorder %s12, 1
    %p72 = scmp.ne.s32.totalorder %s67, %s69
    %p73 = scmp.eq.s32.totalorder %s12, 0
    %p74 = por %p72, %p73
    %p75 = scmp.ne.s32.totalorder %s67, %s69
    %p76 = scmp.eq.s32.totalorder %s17, 1
    %p77 = por %p75, %p76
    %p78 = scmp.ne.s32.totalorder %s69, %s70
    %p79 = scmp.eq.s32.totalorder %s17, 0
    %p80 = por %p78, %p79
    %p81 = scmp.ne.s32.totalorder %s69, %s70
    %p82 = scmp.eq.s32.totalorder %s18, 1
    %p83 = por %p81, %p82
    %p85 = scmp.ne.s32.totalorder %s70, %s84
    %p86 = scmp.eq.s32.totalorder %s18, 0
    %p87 = por %p85, %p86
    %s89 = sadd.s32 %s88, 1
    %p92 = scmp.eq.s32.totalorder %s12, 1
    %p93 = scmp.ne.s32.totalorder %s88, %s90
    %p94 = scmp.eq.s32.totalorder %s12, 0
    %p95 = por %p93, %p94
    %p96 = scmp.ne.s32.totalorder %s88, %s90
    %p97 = scmp.eq.s32.totalorder %s17, 1
    %p98 = por %p96, %p97
    %p99 = scmp.ne.s32.totalorder %s90, %s91
    %p100 = scmp.eq.s32.totalorder %s17, 0
    %p101 = por %p99, %p100
    %p102 = scmp.ne.s32.totalorder %s90, %s91
    %p103 = scmp.eq.s32.totalorder %s18, 1
    %p104 = por %p102, %p103
    %p106 = scmp.ne.s32.totalorder %s91, %s105
    %p107 = scmp.eq.s32.totalorder %s18, 0
    %p108 = por %p106, %p107
    %s110 = sadd.s32 %s109, 1
    %p113 = scmp.eq.s32.totalorder %s12, 1
    %p114 = scmp.ne.s32.totalorder %s109, %s111
    %p115 = scmp.eq.s32.totalorder %s12, 0
    %p116 = por %p114, %p115
    %p117 = scmp.ne.s32.totalorder %s109, %s111
    %p118 = scmp.eq.s32.totalorder %s17, 1
    %p119 = por %p117, %p118
    %p120 = scmp.ne.s32.totalorder %s111, %s112
    %p121 = scmp.eq.s32.totalorder %s17, 0
    %p122 = por %p120, %p121
    %p123 = scmp.ne.s32.totalorder %s111, %s112
    %p124 = scmp.eq.s32.totalorder %s18, 1
    %p125 = por %p123, %p124
    %p127 = scmp.ne.s32.totalorder %s112, %s126
    %p128 = scmp.eq.s32.totalorder %s18, 0
    %p129 = por %p127, %p128
    %s131 = sadd.s32 %s130, 1
    %p134 = scmp.eq.s32.totalorder %s12, 1
    %p135 = scmp.ne.s32.totalorder %s130, %s132
    %p136 = scmp.eq.s32.totalorder %s12, 0
    %p137 = por %p135, %p136
    %p138 = scmp.ne.s32.totalorder %s130, %s132
    %p139 = scmp.eq.s32.totalorder %s17, 1
    %p140 = por %p138, %p139
    %p141 = scmp.ne.s32.totalorder %s132, %s133
    %p142 = scmp.eq.s32.totalorder %s17, 0
    %p143 = por %p141, %p142
    %p144 = scmp.ne.s32.totalorder %s132, %s133
    %p145 = scmp.eq.s32.totalorder %s18, 1
    %p146 = por %p144, %p145
    %p148 = scmp.ne.s32.totalorder %s133, %s147
    %p149 = scmp.eq.s32.totalorder %s18, 0
    %p150 = por %p148, %p149
    %s151 = ssub.s32 %s12, %s19
    %p152 = scmp.eq.s32.totalorder %s151, 0
    %s154 = sadd.s32 %s153, 1
    %s155 = scalar_select %p152, %s153, %s154
    %p158 = pneg %p152
    %p159 = scmp.eq.s32.totalorder %s12, 1
    %p160 = por %p158, %p159
    %p161 = scmp.ne.s32.totalorder %s153, %s156
    %p162 = scmp.eq.s32.totalorder %s12, 0
    %p163 = por %p161, %p162
    %p164 = scmp.ne.s32.totalorder %s153, %s156
    %p165 = scmp.eq.s32.totalorder %s17, 1
    %p166 = por %p164, %p165
    %p167 = scmp.ne.s32.totalorder %s156, %s157
    %p168 = scmp.eq.s32.totalorder %s17, 0
    %p169 = por %p167, %p168
    %p170 = scmp.ne.s32.totalorder %s156, %s157
    %p171 = scmp.eq.s32.totalorder %s18, 1
    %p172 = por %p170, %p171
    %p174 = scmp.ne.s32.totalorder %s157, %s173
    %p175 = scmp.eq.s32.totalorder %s18, 0
    %p176 = por %p174, %p175
    %p177 = scmp.le.s32.totalorder 1, %s12
    %p178 = scmp.lt.s32.totalorder %s12, 3
    %p179 = pnand %p177, %p178
    %p180 = pneg %p179
    // Predicated region
    $region9: #{run.1} parent=5 // pred_check
      _
    $region10: #{run.1} parent=5 // pred_check_branch
      %182 = sbr.rel (%p179) target = $region12
    $region11: #{run.1} parent=5 // pred_region
      %s183 = ssub.s32 %s12, 1
      // Predicated region
      $region13: #{run.1} parent=11 // pred_check
        %p184 = pneg %p59
      $region14: #{run.1} parent=11 // pred_check_branch
        %186 = sbr.rel (%p184) target = $region16
      $region15: #{run.1} parent=11 // pred_region
        _
      $region16: #{run.1} parent=11 // pred_fallthru
        _
      // Predicated region
      $region17: #{run.1} parent=11 // pred_check
        %p187 = pneg %p80
      $region18: #{run.1} parent=11 // pred_check_branch
        %189 = sbr.rel (%p187) target = $region20
      $region19: #{run.1} parent=11 // pred_region
        _
      $region20: #{run.1} parent=11 // pred_fallthru
        _
      // Predicated region
      $region21: #{run.1} parent=11 // pred_check
        %p190 = pneg %p101
      $region22: #{run.1} parent=11 // pred_check_branch
        %192 = sbr.rel (%p190) target = $region24
      $region23: #{run.1} parent=11 // pred_region
        _
      $region24: #{run.1} parent=11 // pred_fallthru
        _
      // Predicated region
      $region25: #{run.1} parent=11 // pred_check
        %p193 = pneg %p122
      $region26: #{run.1} parent=11 // pred_check_branch
        %195 = sbr.rel (%p193) target = $region28
      $region27: #{run.1} parent=11 // pred_region
        _
      $region28: #{run.1} parent=11 // pred_fallthru
        _
      // Predicated region
      $region29: #{run.1} parent=11 // pred_check
        %p196 = pneg %p143
      $region30: #{run.1} parent=11 // pred_check_branch
        %198 = sbr.rel (%p196) target = $region32
      $region31: #{run.1} parent=11 // pred_region
        _
      $region32: #{run.1} parent=11 // pred_fallthru
        _
    $region12: #{run.1} parent=5 // pred_fallthru
      _
    %p199 = scmp.lt.s32.totalorder %s12, 2
    // Predicated region
    $region33: #{run.1} parent=5 // pred_check
      %p200 = pneg %p199
    $region34: #{run.1} parent=5 // pred_check_branch
      %202 = sbr.rel (%p200) target = $region36
    $region35: #{run.1} parent=5 // pred_region
      // Predicated region
      $region37: #{run.1} parent=35 // pred_check
        %p203 = pneg %p32
      $region38: #{run.1} parent=35 // pred_check_branch
        %205 = sbr.rel (%p203) target = $region40
      $region39: #{run.1} parent=35 // pred_region
        %p206 = scmp.lt.s32.totalorder %s12, 1
        %s207 = scalar_select %p206, %s12, 1
        %s208 = smul.addr %s207, 3
        %s209 = smul.addr %s208, 2
        %s210 = scalar_lea.vmem %s0, %s209
      $region40: #{run.1} parent=35 // pred_fallthru
        _
    $region36: #{run.1} parent=5 // pred_fallthru
      _
    %p211 = scmp.le.s32.totalorder 1, %s12
    %p212 = scmp.lt.s32.totalorder %s12, 3
    %p213 = pnand %p211, %p212
    %p214 = pneg %p213
    // Predicated region
    $region41: #{run.1} parent=5 // pred_check
      _
    $region42: #{run.1} parent=5 // pred_check_branch
      %216 = sbr.rel (%p213) target = $region44
    $region43: #{run.1} parent=5 // pred_region
      %s217 = ssub.s32 %s12, 1
      %p218 = scmp.lt.s32.totalorder %s17, 1
      %s219 = scalar_select %p218, %s17, 1
      %s220 = smul.addr %s219, 3
      %s221 = smul.addr %s220, 2
      %s222 = scalar_lea.vmem %s0, %s221
      %p223 = pneg %p38
      %p224 = pneg %p35
      %p225 = pneg %p59
      %p226 = pneg %p56
      %p227 = pneg %p80
      %p228 = pneg %p77
      %p229 = pneg %p101
      %p230 = pneg %p98
      %p231 = pneg %p122
      %p232 = pneg %p119
      %p233 = pneg %p143
      %p234 = pneg %p140
      %p235 = pneg %p169
      %p236 = pneg %p166
      %p237 = scmp.lt.s32.totalorder %s17, 1
      %s238 = scalar_select %p237, %s17, 1
      %s239 = smul.addr %s238, 10
      %s240 = smul.addr %s239, 8
      %s241 = scalar_lea.vmem %s6, %s240
      %p242 = scmp.lt.s32.totalorder %s17, 1
      %s243 = scalar_select %p242, %s17, 1
      %s244 = smul.addr %s243, 3
      %s245 = smul.addr %s244, 2
      %s246 = scalar_lea.vmem %s0, %s245
      %p247 = scmp.lt.s32.totalorder %s17, 1
      %s248 = scalar_select %p247, %s17, 1
      %s249 = smul.addr %s248, 10
      %s250 = smul.addr %s249, 8
      %s251 = scalar_lea.vmem %s6, %s250
      %v253 = vld [vmem:[%s246] sm:$0x3f]
      %v255 = vcombine.high %v253, %v253
      %v257 = vunpack.c.l.s4 1983009808
      %v258 = vunpack.c.0.s8 %v257
      %v259 = vlaneseq
      %v260 = vshrl.u32 %v259, 7
      %v261 = vsub.s32 %v258, %v260
      %v262 = vrot.slane %v253, %v261
      %v264 = vunpack.c.l.s4 1983009808
      %v265 = vunpack.c.0.s8 %v264
      %v266 = vlaneseq
      %v267 = vshrl.u32 %v266, 7
      %v268 = vsub.s32 %v265, %v267
      %v269 = vrot.slane %v255, %v268
      %272 = vst [vmem:[#allocation2] sm:$0x33] %v262
      %vm273 = vcmask 254976
      %274 = vst.msk [vmem:[#allocation2 + $0x8] sm:$0x3] %vm273, %v269
      %v275 = vld [vmem:[%s246] sm:$0x3f]
      %v277 = vcombine.low %v275, %v275
      %v279 = vunpack.c.l.s4 1983009808
      %v280 = vunpack.c.0.s8 %v279
      %v281 = vlaneseq
      %v282 = vshrl.u32 %v281, 7
      %v283 = vsub.s32 %v280, %v282
      %v284 = vrot.slane %v277, %v283
      %v286 = vunpack.c.l.s4 1983009808
      %v287 = vunpack.c.0.s8 %v286
      %v288 = vlaneseq
      %v289 = vshrl.u32 %v288, 7
      %v290 = vsub.s32 %v287, %v289
      %v291 = vrot.slane %v275, %v290
      %292 = vrot.lane.b32.xlu0 %v284, 127
      %v293 = vpop.permute.xlu0 %292
      %294 = vrot.lane.b32.xlu0 %v291, 127
      %v295 = vpop.permute.xlu0 %294
      %v296 = vrot.slane %v293, 4
      %v297 = vrot.slane %v295, 4
      %vm298 = vcmask 1043456
      %v299 = vsel %vm298, %v296, %v297
      %vm300 = vcmask 1039360
      %v301 = vsel %vm300, %v293, %v299
      %304 = vst [vmem:[#allocation2] sm:$0xcc] %v301
      %vm305 = vcmask 257026
      %306 = vst.msk [vmem:[#allocation2 + $0x8] sm:$0xc] %vm305, %v295
      %v307 = vld [vmem:[%s246] sm:$0x3f]
      %v309 = vcombine.high %v307, %v307
      %v311 = vunpack.c.l.s4 1983009808
      %v312 = vunpack.c.0.s8 %v311
      %v313 = vlaneseq
      %v314 = vshrl.u32 %v313, 7
      %v315 = vsub.s32 %v312, %v314
      %v316 = vrot.slane %v307, %v315
      %v318 = vunpack.c.l.s4 1983009808
      %v319 = vunpack.c.0.s8 %v318
      %v320 = vlaneseq
      %v321 = vshrl.u32 %v320, 7
      %v322 = vsub.s32 %v319, %v321
      %v323 = vrot.slane %v309, %v322
      %324 = vrot.lane.b32.xlu0 %v316, 126
      %v325 = vpop.permute.xlu0 %324
      %326 = vrot.lane.b32.xlu0 %v323, 126
      %v327 = vpop.permute.xlu0 %326
      %v328 = vrot.slane %v325, 4
      %v329 = vrot.slane %v327, 4
      %v330 = vsel %vm298, %v328, %v329
      %vm331 = vcmask 1031168
      %v332 = vsel %vm331, %v325, %v330
      %335 = vst [vmem:[#allocation2 + $0xc] sm:$0x33] %v332
      %336 = vst.msk [vmem:[#allocation2 + $0x14] sm:$0x3] %vm273, %v327
      %v337 = vld [vmem:[%s246] sm:$0x3f]
      %v339 = vcombine.low %v337, %v337
      %v341 = vunpack.c.l.s4 1983009808
      %v342 = vunpack.c.0.s8 %v341
      %v343 = vlaneseq
      %v344 = vshrl.u32 %v343, 7
      %v345 = vsub.s32 %v342, %v344
      %v346 = vrot.slane %v339, %v345
      %v348 = vunpack.c.l.s4 1983009808
      %v349 = vunpack.c.0.s8 %v348
      %v350 = vlaneseq
      %v351 = vshrl.u32 %v350, 7
      %v352 = vsub.s32 %v349, %v351
      %v353 = vrot.slane %v337, %v352
      %354 = vrot.lane.b32.xlu0 %v346, 110
      %v355 = vpop.permute.xlu0 %354
      %356 = vrot.lane.b32.xlu0 %v353, 110
      %v357 = vpop.permute.xlu0 %356
      %v358 = vrot.slane %v355, 4
      %v359 = vrot.slane %v357, 4
      %v360 = vsel %vm298, %v358, %v359
      %vm361 = vcmask 900096
      %v362 = vsel %vm361, %v355, %v360
      %365 = vst [vmem:[#allocation2 + $0xc] sm:$0xcc] %v362
      %366 = vst.msk [vmem:[#allocation2 + $0x14] sm:$0xc] %vm305, %v357
      %v367 = vld [vmem:[%s246] sm:$0x3f]
      %v369 = vcombine.high %v367, %v367
      %v371 = vunpack.c.l.s4 1983009808
      %v372 = vunpack.c.0.s8 %v371
      %v373 = vlaneseq
      %v374 = vshrl.u32 %v373, 7
      %v375 = vsub.s32 %v372, %v374
      %v376 = vrot.slane %v367, %v375
      %v378 = vunpack.c.l.s4 1983009808
      %v379 = vunpack.c.0.s8 %v378
      %v380 = vlaneseq
      %v381 = vshrl.u32 %v380, 7
      %v382 = vsub.s32 %v379, %v381
      %v383 = vrot.slane %v369, %v382
      %384 = vrot.lane.b32.xlu0 %v376, 109
      %v385 = vpop.permute.xlu0 %384
      %386 = vrot.lane.b32.xlu0 %v383, 109
      %v387 = vpop.permute.xlu0 %386
      %v388 = vrot.slane %v385, 4
      %v389 = vrot.slane %v387, 4
      %v390 = vsel %vm298, %v388, %v389
      %vm391 = vcmask 891904
      %v392 = vsel %vm391, %v385, %v390
      %395 = vst [vmem:[#allocation2 + $0x18] sm:$0x33] %v392
      %396 = vst.msk [vmem:[#allocation2 + $0x20] sm:$0x3] %vm273, %v387
      %v397 = vld [vmem:[%s246] sm:$0x3f]
      %v399 = vcombine.low %v397, %v397
      %v401 = vunpack.c.l.s4 1983009808
      %v402 = vunpack.c.0.s8 %v401
      %v403 = vlaneseq
      %v404 = vshrl.u32 %v403, 7
      %v405 = vsub.s32 %v402, %v404
      %v406 = vrot.slane %v399, %v405
      %v408 = vunpack.c.l.s4 1983009808
      %v409 = vunpack.c.0.s8 %v408
      %v410 = vlaneseq
      %v411 = vshrl.u32 %v410, 7
      %v412 = vsub.s32 %v409, %v411
      %v413 = vrot.slane %v397, %v412
      %414 = vrot.lane.b32.xlu0 %v406, 108
      %v415 = vpop.permute.xlu0 %414
      %416 = vrot.lane.b32.xlu0 %v413, 108
      %v417 = vpop.permute.xlu0 %416
      %v418 = vrot.slane %v415, 4
      %v419 = vrot.slane %v417, 4
      %v420 = vsel %vm298, %v418, %v419
      %vm421 = vcmask 883712
      %v422 = vsel %vm421, %v415, %v420
      %425 = vst [vmem:[#allocation2 + $0x18] sm:$0xcc] %v422
      %426 = vst.msk [vmem:[#allocation2 + $0x20] sm:$0xc] %vm305, %v417
      %v427 = vld [vmem:[%s246] sm:$0x3f]
      %v429 = vcombine.high %v427, %v427
      %v431 = vunpack.c.l.s4 1983009808
      %v432 = vunpack.c.0.s8 %v431
      %v433 = vlaneseq
      %v434 = vshrl.u32 %v433, 7
      %v435 = vsub.s32 %v432, %v434
      %v436 = vrot.slane %v427, %v435
      %v438 = vunpack.c.l.s4 1983009808
      %v439 = vunpack.c.0.s8 %v438
      %v440 = vlaneseq
      %v441 = vshrl.u32 %v440, 7
      %v442 = vsub.s32 %v439, %v441
      %v443 = vrot.slane %v429, %v442
      %444 = vrot.lane.b32.xlu0 %v436, 92
      %v445 = vpop.permute.xlu0 %444
      %446 = vrot.lane.b32.xlu0 %v443, 92
      %v447 = vpop.permute.xlu0 %446
      %v448 = vrot.slane %v445, 4
      %v449 = vrot.slane %v447, 4
      %v450 = vsel %vm298, %v448, %v449
      %vm451 = vcmask 752640
      %v452 = vsel %vm451, %v445, %v450
      %455 = vst [vmem:[#allocation2 + $0x24] sm:$0x33] %v452
      %456 = vst.msk [vmem:[#allocation2 + $0x2c] sm:$0x3] %vm273, %v447
      %v457 = vld [vmem:[%s246] sm:$0x3f]
      %v459 = vcombine.low %v457, %v457
      %v461 = vunpack.c.l.s4 1983009808
      %v462 = vunpack.c.0.s8 %v461
      %v463 = vlaneseq
      %v464 = vshrl.u32 %v463, 7
      %v465 = vsub.s32 %v462, %v464
      %v466 = vrot.slane %v459, %v465
      %v468 = vunpack.c.l.s4 1983009808
      %v469 = vunpack.c.0.s8 %v468
      %v470 = vlaneseq
      %v471 = vshrl.u32 %v470, 7
      %v472 = vsub.s32 %v469, %v471
      %v473 = vrot.slane %v457, %v472
      %474 = vrot.lane.b32.xlu0 %v466, 91
      %v475 = vpop.permute.xlu0 %474
      %476 = vrot.lane.b32.xlu0 %v473, 91
      %v477 = vpop.permute.xlu0 %476
      %v478 = vrot.slane %v475, 4
      %v479 = vrot.slane %v477, 4
      %v480 = vsel %vm298, %v478, %v479
      %vm481 = vcmask 744448
      %v482 = vsel %vm481, %v475, %v480
      %485 = vst [vmem:[#allocation2 + $0x24] sm:$0xcc] %v482
      %486 = vst.msk [vmem:[#allocation2 + $0x2c] sm:$0xc] %vm305, %v477
      %v487 = vld [vmem:[%s246] sm:$0x3f]
      %v489 = vcombine.high %v487, %v487
      %v491 = vunpack.c.l.s4 1983009808
      %v492 = vunpack.c.0.s8 %v491
      %v493 = vlaneseq
      %v494 = vshrl.u32 %v493, 7
      %v495 = vsub.s32 %v492, %v494
      %v496 = vrot.slane %v487, %v495
      %v498 = vunpack.c.l.s4 1983009808
      %v499 = vunpack.c.0.s8 %v498
      %v500 = vlaneseq
      %v501 = vshrl.u32 %v500, 7
      %v502 = vsub.s32 %v499, %v501
      %v503 = vrot.slane %v489, %v502
      %504 = vrot.lane.b32.xlu0 %v496, 90
      %v505 = vpop.permute.xlu0 %504
      %506 = vrot.lane.b32.xlu0 %v503, 90
      %v507 = vpop.permute.xlu0 %506
      %v508 = vrot.slane %v505, 4
      %v509 = vrot.slane %v507, 4
      %v510 = vsel %vm298, %v508, %v509
      %vm511 = vcmask 736256
      %v512 = vsel %vm511, %v505, %v510
      %515 = vst [vmem:[#allocation2 + $0x30] sm:$0x33] %v512
      %516 = vst.msk [vmem:[#allocation2 + $0x38] sm:$0x3] %vm273, %v507
      %v517 = vld [vmem:[%s246] sm:$0x3f]
      %v519 = vcombine.low %v517, %v517
      %v521 = vunpack.c.l.s4 1983009808
      %v522 = vunpack.c.0.s8 %v521
      %v523 = vlaneseq
      %v524 = vshrl.u32 %v523, 7
      %v525 = vsub.s32 %v522, %v524
      %v526 = vrot.slane %v519, %v525
      %v528 = vunpack.c.l.s4 1983009808
      %v529 = vunpack.c.0.s8 %v528
      %v530 = vlaneseq
      %v531 = vshrl.u32 %v530, 7
      %v532 = vsub.s32 %v529, %v531
      %v533 = vrot.slane %v517, %v532
      %534 = vrot.lane.b32.xlu0 %v526, 110
      %v535 = vpop.permute.xlu0 %534
      %536 = vrot.lane.b32.xlu0 %v533, 110
      %v537 = vpop.permute.xlu0 %536
      %v538 = vrot.slane %v535, 4
      %v539 = vrot.slane %v537, 4
      %v540 = vsel %vm298, %v538, %v539
      %v541 = vsel %vm361, %v535, %v540
      %544 = vst [vmem:[#allocation2 + $0x30] sm:$0xcc] %v541
      %545 = vst.msk [vmem:[#allocation2 + $0x38] sm:$0xc] %vm305, %v537
      %v546 = vld [vmem:[%s246] sm:$0x3f]
      %v548 = vcombine.high %v546, %v546
      %v550 = vunpack.c.l.s4 1983009808
      %v551 = vunpack.c.0.s8 %v550
      %v552 = vlaneseq
      %v553 = vshrl.u32 %v552, 7
      %v554 = vsub.s32 %v551, %v553
      %v555 = vrot.slane %v546, %v554
      %v557 = vunpack.c.l.s4 1983009808
      %v558 = vunpack.c.0.s8 %v557
      %v559 = vlaneseq
      %v560 = vshrl.u32 %v559, 7
      %v561 = vsub.s32 %v558, %v560
      %v562 = vrot.slane %v548, %v561
      %563 = vrot.lane.b32.xlu0 %v555, 109
      %v564 = vpop.permute.xlu0 %563
      %565 = vrot.lane.b32.xlu0 %v562, 109
      %v566 = vpop.permute.xlu0 %565
      %v567 = vrot.slane %v564, 4
      %v568 = vrot.slane %v566, 4
      %v569 = vsel %vm298, %v567, %v568
      %v570 = vsel %vm391, %v564, %v569
      %573 = vst [vmem:[#allocation2 + $0x3c] sm:$0x33] %v570
      %574 = vst.msk [vmem:[#allocation2 + $0x44] sm:$0x3] %vm273, %v566
      %v575 = vld [vmem:[%s246] sm:$0x3f]
      %v577 = vcombine.low %v575, %v575
      %v579 = vunpack.c.l.s4 1983009808
      %v580 = vunpack.c.0.s8 %v579
      %v581 = vlaneseq
      %v582 = vshrl.u32 %v581, 7
      %v583 = vsub.s32 %v580, %v582
      %v584 = vrot.slane %v577, %v583
      %v586 = vunpack.c.l.s4 1983009808
      %v587 = vunpack.c.0.s8 %v586
      %v588 = vlaneseq
      %v589 = vshrl.u32 %v588, 7
      %v590 = vsub.s32 %v587, %v589
      %v591 = vrot.slane %v575, %v590
      %592 = vrot.lane.b32.xlu0 %v584, 108
      %v593 = vpop.permute.xlu0 %592
      %594 = vrot.lane.b32.xlu0 %v591, 108
      %v595 = vpop.permute.xlu0 %594
      %v596 = vrot.slane %v593, 4
      %v597 = vrot.slane %v595, 4
      %v598 = vsel %vm298, %v596, %v597
      %v599 = vsel %vm421, %v593, %v598
      %602 = vst [vmem:[#allocation2 + $0x3c] sm:$0xcc] %v599
      %603 = vst.msk [vmem:[#allocation2 + $0x44] sm:$0xc] %vm305, %v595
      %v604 = vld [vmem:[%s246] sm:$0x3f]
      %v606 = vcombine.high %v604, %v604
      %v608 = vunpack.c.l.s4 1983009808
      %v609 = vunpack.c.0.s8 %v608
      %v610 = vlaneseq
      %v611 = vshrl.u32 %v610, 7
      %v612 = vsub.s32 %v609, %v611
      %v613 = vrot.slane %v604, %v612
      %v615 = vunpack.c.l.s4 1983009808
      %v616 = vunpack.c.0.s8 %v615
      %v617 = vlaneseq
      %v618 = vshrl.u32 %v617, 7
      %v619 = vsub.s32 %v616, %v618
      %v620 = vrot.slane %v606, %v619
      %621 = vrot.lane.b32.xlu0 %v613, 127
      %v622 = vpop.permute.xlu0 %621
      %623 = vrot.lane.b32.xlu0 %v620, 127
      %v624 = vpop.permute.xlu0 %623
      %v625 = vrot.slane %v622, 4
      %v626 = vrot.slane %v624, 4
      %v627 = vsel %vm298, %v625, %v626
      %v628 = vsel %vm300, %v622, %v627
      %631 = vst [vmem:[#allocation2 + $0x48] sm:$0x33] %v628
      %632 = vst.msk [vmem:[#allocation2 + $0x50] sm:$0x3] %vm273, %v624
      %v633 = vld [vmem:[%s246] sm:$0x3f]
      %v635 = vcombine.low %v633, %v633
      %v637 = vunpack.c.l.s4 1983009808
      %v638 = vunpack.c.0.s8 %v637
      %v639 = vlaneseq
      %v640 = vshrl.u32 %v639, 7
      %v641 = vsub.s32 %v638, %v640
      %v642 = vrot.slane %v635, %v641
      %v644 = vunpack.c.l.s4 1983009808
      %v645 = vunpack.c.0.s8 %v644
      %v646 = vlaneseq
      %v647 = vshrl.u32 %v646, 7
      %v648 = vsub.s32 %v645, %v647
      %v649 = vrot.slane %v633, %v648
      %650 = vrot.lane.b32.xlu0 %v642, 109
      %v651 = vpop.permute.xlu0 %650
      %652 = vrot.lane.b32.xlu0 %v649, 109
      %v653 = vpop.permute.xlu0 %652
      %v654 = vrot.slane %v651, 4
      %v655 = vrot.slane %v653, 4
      %v656 = vsel %vm298, %v654, %v655
      %v657 = vsel %vm391, %v651, %v656
      %660 = vst [vmem:[#allocation2 + $0x48] sm:$0xcc] %v657
      %661 = vst.msk [vmem:[#allocation2 + $0x50] sm:$0xc] %vm305, %v653
      %v662 = vld [vmem:[%s246] sm:$0x3f]
      %v664 = vcombine.high %v662, %v662
      %v666 = vunpack.c.l.s4 1983009808
      %v667 = vunpack.c.0.s8 %v666
      %v668 = vlaneseq
      %v669 = vshrl.u32 %v668, 7
      %v670 = vsub.s32 %v667, %v669
      %v671 = vrot.slane %v662, %v670
      %v673 = vunpack.c.l.s4 1983009808
      %v674 = vunpack.c.0.s8 %v673
      %v675 = vlaneseq
      %v676 = vshrl.u32 %v675, 7
      %v677 = vsub.s32 %v674, %v676
      %v678 = vrot.slane %v664, %v677
      %679 = vrot.lane.b32.xlu0 %v671, 91
      %v680 = vpop.permute.xlu0 %679
      %681 = vrot.lane.b32.xlu0 %v678, 91
      %v682 = vpop.permute.xlu0 %681
      %v683 = vrot.slane %v680, 4
      %v684 = vrot.slane %v682, 4
      %v685 = vsel %vm298, %v683, %v684
      %v686 = vsel %vm481, %v680, %v685
      %689 = vst [vmem:[#allocation2 + $0x54] sm:$0x33] %v686
      %690 = vst.msk [vmem:[#allocation2 + $0x5c] sm:$0x3] %vm273, %v682
      %v691 = vld [vmem:[%s1] sm:$0xf]
      %v692 = vld [vmem:[#allocation2] sm:$0xff]
      %v693 = vld [vmem:[#allocation2 + $0x8] sm:$0xf]
      %v694 = vld [vmem:[#allocation2 + $0xc] sm:$0xff]
      %v695 = vld [vmem:[#allocation2 + $0x14] sm:$0xf]
      %v696 = vld [vmem:[#allocation2 + $0x18] sm:$0xff]
      %v697 = vld [vmem:[#allocation2 + $0x20] sm:$0xf]
      %v698 = vld [vmem:[#allocation2 + $0x24] sm:$0xff]
      %v699 = vld [vmem:[#allocation2 + $0x2c] sm:$0xf]
      %v700 = vld [vmem:[#allocation2 + $0x30] sm:$0xff]
      %v701 = vld [vmem:[#allocation2 + $0x38] sm:$0xf]
      %v702 = vld [vmem:[#allocation2 + $0x3c] sm:$0xff]
      %v703 = vld [vmem:[#allocation2 + $0x44] sm:$0xf]
      %v704 = vld [vmem:[#allocation2 + $0x48] sm:$0xff]
      %v705 = vld [vmem:[#allocation2 + $0x50] sm:$0xf]
      %v706 = vld [vmem:[#allocation2 + $0x54] sm:$0x33]
      %v707 = vld [vmem:[#allocation2 + $0x5c] sm:$0x3]
      %v708 = vld [vmem:[%s2] sm:$0xff]
      %710 = vset.pattern.permute.xlu0 0
      %711 = vperm.xlu0 %710, %v708
      %v712 = vpop.permute.xlu0 %711
      %v730 = vunpack.c.l.b16 %v692
      %v731 = vunpack.c.h.b16 %v692
      %v732 = vunpack.c.l.b16 %v693
      %v733 = vunpack.c.l.b16 %v694
      %v734 = vunpack.c.h.b16 %v694
      %v735 = vunpack.c.l.b16 %v695
      %v736 = vunpack.c.l.b16 %v696
      %v737 = vunpack.c.h.b16 %v696
      %v738 = vunpack.c.l.b16 %v697
      %v739 = vunpack.c.l.b16 %v698
      %v740 = vunpack.c.h.b16 %v698
      %v741 = vunpack.c.l.b16 %v699
      %v742 = vunpack.c.l.b16 %v700
      %v743 = vunpack.c.h.b16 %v700
      %v744 = vunpack.c.l.b16 %v701
      %v745 = vunpack.c.l.b16 %v702
      %v746 = vunpack.c.h.b16 %v702
      %v747 = vunpack.c.l.b16 %v703
      %v748 = vunpack.c.l.b16 %v704
      %v749 = vunpack.c.h.b16 %v704
      %v750 = vunpack.c.l.b16 %v705
      %v751 = vunpack.c.l.b16 %v706
      %v752 = vunpack.c.h.b16 %v706
      %v753 = vunpack.c.l.b16 %v707
      %v754 = vpack.c.b16 %v733, %v730
      %v755 = vpack.c.b16 %v734, %v731
      %v756 = vpack.c.b16 %v735, %v732
      %v757 = vpack.c.b16 %v739, %v736
      %v758 = vpack.c.b16 %v740, %v737
      %v759 = vpack.c.b16 %v741, %v738
      %v760 = vpack.c.b16 %v745, %v742
      %v761 = vpack.c.b16 %v746, %v743
      %v762 = vpack.c.b16 %v747, %v744
      %v763 = vpack.c.b16 %v751, %v748
      %v764 = vpack.c.b16 %v752, %v749
      %v765 = vpack.c.b16 %v753, %v750
      %vm775 = vcmask 490496
      %v777 = vsel %vm775, %v691, 0
      %vm779 = vcmask 1045504
      %v781 = vsel %vm779, %v763, 0
      %v784 = vsel %vm779, %v764, 0
      %v787 = vsel %vm779, %v765, 0
      %789 = vmatprep.subr.bf16.mxu0 %v755
      %790 = vmatpush1.bf16.msra.mxu0 %v754
      %791 = vmatprep.subr.bf16.mxu0 %v758
      %792 = vmatpush1.bf16.msra.mxu0 %v757
      %793 = vmatprep.subr.bf16.mxu0 %v761
      %794 = vmatpush1.bf16.msra.mxu0 %v760
      %795 = vmatprep.subr.bf16.mxu0 %v784
      %796 = vmatpush1.bf16.msra.mxu0 %v781
      %797 = vmatprep.subr.bf16.mxu0 0
      %798 = vmatpush1.bf16.msra.mxu0 0
      %799 = vmatprep.subr.bf16.mxu0 0
      %800 = vmatpush1.bf16.msra.mxu0 0
      %801 = vmatprep.subr.bf16.mxu0 0
      %802 = vmatpush1.bf16.msra.mxu0 0
      %803 = vmatprep.subr.bf16.mxu0 0
      %804 = vmatpush1.bf16.msra.mxu0 0
      %805 = vmatprep.subr.bf16.mxu0 0
      %806 = vmatpush1.bf16.msra.mxu0 0
      %807 = vmatprep.subr.bf16.mxu0 0
      %808 = vmatpush1.bf16.msra.mxu0 0
      %809 = vmatprep.subr.bf16.mxu0 0
      %810 = vmatpush1.bf16.msra.mxu0 0
      %811 = vmatprep.subr.bf16.mxu0 0
      %812 = vmatpush1.bf16.msra.mxu0 0
      %813 = vmatprep.subr.bf16.mxu0 0
      %814 = vmatpush1.bf16.msra.mxu0 0
      %815 = vmatprep.subr.bf16.mxu0 0
      %816 = vmatpush1.bf16.msra.mxu0 0
      %817 = vmatprep.subr.bf16.mxu0 0
      %818 = vmatpush1.bf16.msra.mxu0 0
      %819 = vmatprep.subr.bf16.mxu0 0
      %820 = vmatpush1.bf16.msra.mxu0 0
      %821 = vmatprep.mubr.bf16.mxu0 0
      %822 = vmatmul.mubr.bf16.gmra.mrb[0].mxu0 %v777
      %v823 = vpop.f32.mrb[0].mxu0
      %v824 = vadd.f32 %v712, %v823
      %v825 = vpop.f32.mrb[0].mxu0
      %v826 = vadd.f32 %v712, %v825
      %v827 = vpop.f32.mrb[0].mxu0
      %v828 = vpop.f32.mrb[0].mxu0
      %829 = vdwg.mxu0
      %830 = vmatprep.subr.bf16.mxu0 0
      %831 = vmatpush1.bf16.msra.mxu0 %v756
      %832 = vmatprep.subr.bf16.mxu0 0
      %833 = vmatpush1.bf16.msra.mxu0 %v759
      %834 = vmatprep.subr.bf16.mxu0 0
      %835 = vmatpush1.bf16.msra.mxu0 %v762
      %836 = vmatprep.subr.bf16.mxu0 0
      %837 = vmatpush1.bf16.msra.mxu0 %v787
      %838 = vmatprep.subr.bf16.mxu0 0
      %839 = vmatpush1.bf16.msra.mxu0 0
      %840 = vmatprep.subr.bf16.mxu0 0
      %841 = vmatpush1.bf16.msra.mxu0 0
      %842 = vmatprep.subr.bf16.mxu0 0
      %843 = vmatpush1.bf16.msra.mxu0 0
      %844 = vmatprep.subr.bf16.mxu0 0
      %845 = vmatpush1.bf16.msra.mxu0 0
      %846 = vmatprep.subr.bf16.mxu0 0
      %847 = vmatpush1.bf16.msra.mxu0 0
      %848 = vmatprep.subr.bf16.mxu0 0
      %849 = vmatpush1.bf16.msra.mxu0 0
      %850 = vmatprep.subr.bf16.mxu0 0
      %851 = vmatpush1.bf16.msra.mxu0 0
      %852 = vmatprep.subr.bf16.mxu0 0
      %853 = vmatpush1.bf16.msra.mxu0 0
      %854 = vmatprep.subr.bf16.mxu0 0
      %855 = vmatpush1.bf16.msra.mxu0 0
      %856 = vmatprep.subr.bf16.mxu0 0
      %857 = vmatpush1.bf16.msra.mxu0 0
      %858 = vmatprep.subr.bf16.mxu0 0
      %859 = vmatpush1.bf16.msra.mxu0 0
      %860 = vmatprep.subr.bf16.mxu0 0
      %861 = vmatpush1.bf16.msra.mxu0 0
      %862 = vmatprep.mubr.bf16.mxu0 0
      %863 = vmatmul.mubr.bf16.gmra.mrb[0].mxu0 %v777
      %v864 = vpop.f32.mrb[0].mxu0
      %v865 = vadd.f32 %v712, %v864
      %v866 = vpop.f32.mrb[0].mxu0
      %v867 = vpop.f32.mrb[0].mxu0
      %v868 = vpop.f32.mrb[0].mxu0
      %869 = vdwg.mxu0
      %v870 = vmax.f32 %v824, 0.0
      %v871 = vmax.f32 %v826, 0.0
      %v872 = vmax.f32 %v865, 0.0
      %873 = vset.pattern.permute.xlu0 1
      %874 = vperm.xlu0 %873, %v708
      %v875 = vpop.permute.xlu0 %874
      %v877 = vmul.f32 %v870, %v875
      %v878 = vmul.f32 %v871, %v875
      %v879 = vmul.f32 %v872, %v875
      %880 = vset.pattern.permute.xlu0 2
      %881 = vperm.xlu0 %880, %v708
      %v882 = vpop.permute.xlu0 %881
      %v884 = vadd.f32 %v877, %v882
      %v885 = vadd.f32 %v878, %v882
      %v886 = vadd.f32 %v879, %v882
      %v887 = vmax.f32 %v884, 0.0
      %v888 = vmax.f32 %v885, 0.0
      %v889 = vmax.f32 %v886, 0.0
      %v890 = vpack.c.bf16 %v887, %v887
      %v891 = vpack.c.bf16 %v888, %v888
      %v892 = vpack.c.bf16 %v889, %v889
      %v893 = vld [vmem:[%s3] sm:$0xff]
      %v894 = vld [vmem:[%s3 + $0x8] sm:$0xff]
      %v895 = vld [vmem:[%s3 + $0x10] sm:$0xff]
      %v896 = vld [vmem:[%s3 + $0x18] sm:$0xff]
      %v897 = vld [vmem:[%s3 + $0x20] sm:$0xff]
      %v898 = vld [vmem:[%s3 + $0x28] sm:$0xff]
      %v899 = vld [vmem:[%s3 + $0x30] sm:$0xff]
      %v900 = vld [vmem:[%s3 + $0x38] sm:$0xff]
      %v901 = vld [vmem:[%s3 + $0x40] sm:$0xff]
      %v902 = vld [vmem:[%s3 + $0x48] sm:$0xff]
      %v903 = vld [vmem:[%s3 + $0x50] sm:$0xff]
      %v904 = vld [vmem:[%s3 + $0x58] sm:$0xff]
      %v905 = vld [vmem:[%s3 + $0x60] sm:$0xff]
      %v906 = vld [vmem:[%s3 + $0x68] sm:$0xff]
      %v907 = vld [vmem:[%s3 + $0x70] sm:$0xff]
      %v908 = vld [vmem:[%s3 + $0x78] sm:$0xff]
      %v909 = vld [vmem:[%s3 + $0x80] sm:$0xff]
      %v910 = vld [vmem:[%s3 + $0x88] sm:$0xff]
      %v911 = vld [vmem:[%s3 + $0x90] sm:$0xff]
      %v912 = vld [vmem:[%s3 + $0x98] sm:$0xff]
      %v913 = vld [vmem:[%s3 + $0xa0] sm:$0xff]
      %v914 = vld [vmem:[%s3 + $0xa8] sm:$0xff]
      %v915 = vld [vmem:[%s3 + $0xb0] sm:$0xff]
      %v916 = vld [vmem:[%s3 + $0xb8] sm:$0xff]
      %v917 = vld [vmem:[%s3 + $0xc0] sm:$0xff]
      %v918 = vld [vmem:[%s3 + $0xc8] sm:$0xff]
      %v919 = vld [vmem:[%s3 + $0xd0] sm:$0xff]
      %v920 = vld [vmem:[%s3 + $0xd8] sm:$0xff]
      %v921 = vld [vmem:[%s3 + $0xe0] sm:$0xff]
      %v922 = vld [vmem:[%s3 + $0xe8] sm:$0xff]
      %v923 = vld [vmem:[%s3 + $0xf0] sm:$0xff]
      %v924 = vld [vmem:[%s3 + $0xf8] sm:$0xff]
      %v925 = vld [vmem:[%s3 + $0x100] sm:$0xff]
      %v926 = vld [vmem:[%s3 + $0x108] sm:$0xff]
      %v927 = vld [vmem:[%s3 + $0x110] sm:$0xff]
      %v928 = vld [vmem:[%s3 + $0x118] sm:$0xff]
      %v965 = vunpack.c.l.b16 %v893
      %v966 = vunpack.c.h.b16 %v893
      %v967 = vunpack.c.l.b16 %v894
      %v968 = vunpack.c.h.b16 %v894
      %v969 = vunpack.c.l.b16 %v895
      %v970 = vunpack.c.h.b16 %v895
      %v971 = vunpack.c.l.b16 %v896
      %v972 = vunpack.c.h.b16 %v896
      %v973 = vunpack.c.l.b16 %v897
      %v974 = vunpack.c.h.b16 %v897
      %v975 = vunpack.c.l.b16 %v898
      %v976 = vunpack.c.h.b16 %v898
      %v977 = vunpack.c.l.b16 %v899
      %v978 = vunpack.c.h.b16 %v899
      %v979 = vunpack.c.l.b16 %v900
      %v980 = vunpack.c.h.b16 %v900
      %v981 = vunpack.c.l.b16 %v901
      %v982 = vunpack.c.h.b16 %v901
      %v983 = vunpack.c.l.b16 %v902
      %v984 = vunpack.c.h.b16 %v902
      %v985 = vunpack.c.l.b16 %v903
      %v986 = vunpack.c.h.b16 %v903
      %v987 = vunpack.c.l.b16 %v904
      %v988 = vunpack.c.h.b16 %v904
      %v989 = vunpack.c.l.b16 %v905
      %v990 = vunpack.c.h.b16 %v905
      %v991 = vunpack.c.l.b16 %v906
      %v992 = vunpack.c.h.b16 %v906
      %v993 = vunpack.c.l.b16 %v907
      %v994 = vunpack.c.h.b16 %v907
      %v995 = vunpack.c.l.b16 %v908
      %v996 = vunpack.c.h.b16 %v908
      %v997 = vunpack.c.l.b16 %v909
      %v998 = vunpack.c.h.b16 %v909
      %v999 = vunpack.c.l.b16 %v910
      %v1000 = vunpack.c.h.b16 %v910
      %v1001 = vunpack.c.l.b16 %v911
      %v1002 = vunpack.c.h.b16 %v911
      %v1003 = vunpack.c.l.b16 %v912
      %v1004 = vunpack.c.h.b16 %v912
      %v1005 = vunpack.c.l.b16 %v913
      %v1006 = vunpack.c.h.b16 %v913
      %v1007 = vunpack.c.l.b16 %v914
      %v1008 = vunpack.c.h.b16 %v914
      %v1009 = vunpack.c.l.b16 %v915
      %v1010 = vunpack.c.h.b16 %v915
      %v1011 = vunpack.c.l.b16 %v916
      %v1012 = vunpack.c.h.b16 %v916
      %v1013 = vunpack.c.l.b16 %v917
      %v1014 = vunpack.c.h.b16 %v917
      %v1015 = vunpack.c.l.b16 %v918
      %v1016 = vunpack.c.h.b16 %v918
      %v1017 = vunpack.c.l.b16 %v919
      %v1018 = vunpack.c.h.b16 %v919
      %v1019 = vunpack.c.l.b16 %v920
      %v1020 = vunpack.c.h.b16 %v920
      %v1021 = vunpack.c.l.b16 %v921
      %v1022 = vunpack.c.h.b16 %v921
      %v1023 = vunpack.c.l.b16 %v922
      %v1024 = vunpack.c.h.b16 %v922
      %v1025 = vunpack.c.l.b16 %v923
      %v1026 = vunpack.c.h.b16 %v923
      %v1027 = vunpack.c.l.b16 %v924
      %v1028 = vunpack.c.h.b16 %v924
      %v1029 = vunpack.c.l.b16 %v925
      %v1030 = vunpack.c.h.b16 %v925
      %v1031 = vunpack.c.l.b16 %v926
      %v1032 = vunpack.c.h.b16 %v926
      %v1033 = vunpack.c.l.b16 %v927
      %v1034 = vunpack.c.h.b16 %v927
      %v1035 = vunpack.c.l.b16 %v928
      %v1036 = vunpack.c.h.b16 %v928
      %v1037 = vpack.c.b16 %v967, %v965
      %v1038 = vpack.c.b16 %v968, %v966
      %v1039 = vpack.c.b16 %v971, %v969
      %v1040 = vpack.c.b16 %v972, %v970
      %v1041 = vpack.c.b16 %v975, %v973
      %v1042 = vpack.c.b16 %v976, %v974
      %v1043 = vpack.c.b16 %v979, %v977
      %v1044 = vpack.c.b16 %v980, %v978
      %v1045 = vpack.c.b16 %v983, %v981
      %v1046 = vpack.c.b16 %v984, %v982
      %v1047 = vpack.c.b16 %v987, %v985
      %v1048 = vpack.c.b16 %v988, %v986
      %v1049 = vpack.c.b16 %v991, %v989
      %v1050 = vpack.c.b16 %v992, %v990
      %v1051 = vpack.c.b16 %v995, %v993
      %v1052 = vpack.c.b16 %v996, %v994
      %v1053 = vpack.c.b16 %v999, %v997
      %v1054 = vpack.c.b16 %v1000, %v998
      %v1055 = vpack.c.b16 %v1003, %v1001
      %v1056 = vpack.c.b16 %v1004, %v1002
      %v1057 = vpack.c.b16 %v1007, %v1005
      %v1058 = vpack.c.b16 %v1008, %v1006
      %v1059 = vpack.c.b16 %v1011, %v1009
      %v1060 = vpack.c.b16 %v1012, %v1010
      %v1061 = vpack.c.b16 %v1015, %v1013
      %v1062 = vpack.c.b16 %v1016, %v1014
      %v1063 = vpack.c.b16 %v1019, %v1017
      %v1064 = vpack.c.b16 %v1020, %v1018
      %v1065 = vpack.c.b16 %v1023, %v1021
      %v1066 = vpack.c.b16 %v1024, %v1022
      %v1067 = vpack.c.b16 %v1027, %v1025
      %v1068 = vpack.c.b16 %v1028, %v1026
      %v1069 = vpack.c.b16 %v1031, %v1029
      %v1070 = vpack.c.b16 %v1032, %v1030
      %v1071 = vpack.c.b16 %v1035, %v1033
      %v1072 = vpack.c.b16 %v1036, %v1034
      %vm1109 = vcmask 261120
      %v1111 = vsel %vm1109, %v892, 0
      %1113 = vmatprep.subr.bf16.mxu0 %v1038
      %1114 = vmatpush1.bf16.msra.mxu0 %v1037
      %1115 = vmatprep.subr.bf16.mxu0 %v1040
      %1116 = vmatpush1.bf16.msra.mxu0 %v1039
      %1117 = vmatprep.subr.bf16.mxu0 %v1042
      %1118 = vmatpush1.bf16.msra.mxu0 %v1041
      %1119 = vmatprep.subr.bf16.mxu0 %v1044
      %1120 = vmatpush1.bf16.msra.mxu0 %v1043
      %1121 = vmatprep.subr.bf16.mxu0 %v1046
      %1122 = vmatpush1.bf16.msra.mxu0 %v1045
      %1123 = vmatprep.subr.bf16.mxu0 %v1048
      %1124 = vmatpush1.bf16.msra.mxu0 %v1047
      %1125 = vmatprep.subr.bf16.mxu0 %v1050
      %1126 = vmatpush1.bf16.msra.mxu0 %v1049
      %1127 = vmatprep.subr.bf16.mxu0 %v1052
      %1128 = vmatpush1.bf16.msra.mxu0 %v1051
      %1129 = vmatprep.subr.bf16.mxu0 %v1054
      %1130 = vmatpush1.bf16.msra.mxu0 %v1053
      %1131 = vmatprep.subr.bf16.mxu0 %v1056
      %1132 = vmatpush1.bf16.msra.mxu0 %v1055
      %1133 = vmatprep.subr.bf16.mxu0 %v1058
      %1134 = vmatpush1.bf16.msra.mxu0 %v1057
      %1135 = vmatprep.subr.bf16.mxu0 %v1060
      %1136 = vmatpush1.bf16.msra.mxu0 %v1059
      %1137 = vmatprep.subr.bf16.mxu0 %v1062
      %1138 = vmatpush1.bf16.msra.mxu0 %v1061
      %1139 = vmatprep.subr.bf16.mxu0 %v1064
      %1140 = vmatpush1.bf16.msra.mxu0 %v1063
      %1141 = vmatprep.subr.bf16.mxu0 %v1066
      %1142 = vmatpush1.bf16.msra.mxu0 %v1065
      %1143 = vmatprep.subr.bf16.mxu0 %v1068
      %1144 = vmatpush1.bf16.msra.mxu0 %v1067
      %1145 = vmatprep.mubr.bf16.mxu0 %v891
      %1146 = vmatmul.mubr.bf16.gmra.mrb[0].mxu0 %v890
      %v1147 = vpop.f32.mrb[0].mxu0
      %v1148 = vadd.f32 0.0, %v1147
      %v1149 = vpop.f32.mrb[0].mxu0
      %v1150 = vadd.f32 0.0, %v1149
      %v1151 = vpop.f32.mrb[0].mxu0
      %v1152 = vpop.f32.mrb[0].mxu0
      %1153 = vdwg.mxu0
      %1154 = vmatprep.subr.bf16.mxu0 %v1070
      %1155 = vmatpush1.bf16.msra.mxu0 %v1069
      %1156 = vmatprep.subr.bf16.mxu0 %v1072
      %1157 = vmatpush1.bf16.msra.mxu0 %v1071
      %1158 = vmatprep.subr.bf16.mxu0 0
      %1159 = vmatpush1.bf16.msra.mxu0 0
      %1160 = vmatprep.subr.bf16.mxu0 0
      %1161 = vmatpush1.bf16.msra.mxu0 0
      %1162 = vmatprep.subr.bf16.mxu0 0
      %1163 = vmatpush1.bf16.msra.mxu0 0
      %1164 = vmatprep.subr.bf16.mxu0 0
      %1165 = vmatpush1.bf16.msra.mxu0 0
      %1166 = vmatprep.subr.bf16.mxu0 0
      %1167 = vmatpush1.bf16.msra.mxu0 0
      %1168 = vmatprep.subr.bf16.mxu0 0
      %1169 = vmatpush1.bf16.msra.mxu0 0
      %1170 = vmatprep.subr.bf16.mxu0 0
      %1171 = vmatpush1.bf16.msra.mxu0 0
      %1172 = vmatprep.subr.bf16.mxu0 0
      %1173 = vmatpush1.bf16.msra.mxu0 0
      %1174 = vmatprep.subr.bf16.mxu0 0
      %1175 = vmatpush1.bf16.msra.mxu0 0
      %1176 = vmatprep.subr.bf16.mxu0 0
      %1177 = vmatpush1.bf16.msra.mxu0 0
      %1178 = vmatprep.subr.bf16.mxu0 0
      %1179 = vmatpush1.bf16.msra.mxu0 0
      %1180 = vmatprep.subr.bf16.mxu0 0
      %1181 = vmatpush1.bf16.msra.mxu0 0
      %1182 = vmatprep.subr.bf16.mxu0 0
      %1183 = vmatpush1.bf16.msra.mxu0 0
      %1184 = vmatprep.subr.bf16.mxu0 0
      %1185 = vmatpush1.bf16.msra.mxu0 0
      %1186 = vmatprep.mubr.bf16.mxu0 0
      %1187 = vmatmul.mubr.bf16.gmra.mrb[0].mxu0 %v1111
      %v1188 = vpop.f32.mrb[0].mxu0
      %v1189 = vadd.f32 %v1148, %v1188
      %v1190 = vpop.f32.mrb[0].mxu0
      %v1191 = vadd.f32 %v1150, %v1190
      %v1192 = vpop.f32.mrb[0].mxu0
      %v1193 = vpop.f32.mrb[0].mxu0
      %1194 = vdwg.mxu0
      %1195 = vst [vmem:[%s251] sm:$0xff] %v1189
      %1196 = vst [vmem:[%s251 + $0x8] sm:$0xff] %v1191
      %v1197 = vld [vmem:[%s246] sm:$0x3f]
      %v1199 = vcombine.high %v1197, %v1197
      %v1201 = vunpack.c.l.s4 1983009808
      %v1202 = vunpack.c.0.s8 %v1201
      %v1203 = vlaneseq
      %v1204 = vshrl.u32 %v1203, 7
      %v1205 = vsub.s32 %v1202, %v1204
      %v1206 = vrot.slane %v1197, %v1205
      %v1208 = vunpack.c.l.s4 1983009808
      %v1209 = vunpack.c.0.s8 %v1208
      %v1210 = vlaneseq
      %v1211 = vshrl.u32 %v1210, 7
      %v1212 = vsub.s32 %v1209, %v1211
      %v1213 = vrot.slane %v1199, %v1212
      %1216 = vst [vmem:[#allocation2] sm:$0x33] %v1206
      %1217 = vst.msk [vmem:[#allocation2 + $0x8] sm:$0x3] %vm273, %v1213
      %v1218 = vld [vmem:[%s246] sm:$0x3f]
      %v1220 = vcombine.low %v1218, %v1218
      %v1222 = vunpack.c.l.s4 1983009808
      %v1223 = vunpack.c.0.s8 %v1222
      %v1224 = vlaneseq
      %v1225 = vshrl.u32 %v1224, 7
      %v1226 = vsub.s32 %v1223, %v1225
      %v1227 = vrot.slane %v1220, %v1226
      %v1229 = vunpack.c.l.s4 1983009808
      %v1230 = vunpack.c.0.s8 %v1229
      %v1231 = vlaneseq
      %v1232 = vshrl.u32 %v1231, 7
      %v1233 = vsub.s32 %v1230, %v1232
      %v1234 = vrot.slane %v1218, %v1233
      %1235 = vrot.lane.b32.xlu0 %v1227, 127
      %v1236 = vpop.permute.xlu0 %1235
      %1237 = vrot.lane.b32.xlu0 %v1234, 127
      %v1238 = vpop.permute.xlu0 %1237
      %v1239 = vrot.slane %v1236, 4
      %v1240 = vrot.slane %v1238, 4
      %v1241 = vsel %vm298, %v1239, %v1240
      %v1242 = vsel %vm300, %v1236, %v1241
      %1245 = vst [vmem:[#allocation2] sm:$0xcc] %v1242
      %1246 = vst.msk [vmem:[#allocation2 + $0x8] sm:$0xc] %vm305, %v1238
      %v1247 = vld [vmem:[%s246] sm:$0x3f]
      %v1249 = vcombine.high %v1247, %v1247
      %v1251 = vunpack.c.l.s4 1983009808
      %v1252 = vunpack.c.0.s8 %v1251
      %v1253 = vlaneseq
      %v1254 = vshrl.u32 %v1253, 7
      %v1255 = vsub.s32 %v1252, %v1254
      %v1256 = vrot.slane %v1247, %v1255
      %v1258 = vunpack.c.l.s4 1983009808
      %v1259 = vunpack.c.0.s8 %v1258
      %v1260 = vlaneseq
      %v1261 = vshrl.u32 %v1260, 7
      %v1262 = vsub.s32 %v1259, %v1261
      %v1263 = vrot.slane %v1249, %v1262
      %1264 = vrot.lane.b32.xlu0 %v1256, 126
      %v1265 = vpop.permute.xlu0 %1264
      %1266 = vrot.lane.b32.xlu0 %v1263, 126
      %v1267 = vpop.permute.xlu0 %1266
      %v1268 = vrot.slane %v1265, 4
      %v1269 = vrot.slane %v1267, 4
      %v1270 = vsel %vm298, %v1268, %v1269
      %v1271 = vsel %vm331, %v1265, %v1270
      %1274 = vst [vmem:[#allocation2 + $0xc] sm:$0x33] %v1271
      %1275 = vst.msk [vmem:[#allocation2 + $0x14] sm:$0x3] %vm273, %v1267
      %v1276 = vld [vmem:[%s246] sm:$0x3f]
      %v1278 = vcombine.low %v1276, %v1276
      %v1280 = vunpack.c.l.s4 1983009808
      %v1281 = vunpack.c.0.s8 %v1280
      %v1282 = vlaneseq
      %v1283 = vshrl.u32 %v1282, 7
      %v1284 = vsub.s32 %v1281, %v1283
      %v1285 = vrot.slane %v1278, %v1284
      %v1287 = vunpack.c.l.s4 1983009808
      %v1288 = vunpack.c.0.s8 %v1287
      %v1289 = vlaneseq
      %v1290 = vshrl.u32 %v1289, 7
      %v1291 = vsub.s32 %v1288, %v1290
      %v1292 = vrot.slane %v1276, %v1291
      %1293 = vrot.lane.b32.xlu0 %v1285, 110
      %v1294 = vpop.permute.xlu0 %1293
      %1295 = vrot.lane.b32.xlu0 %v1292, 110
      %v1296 = vpop.permute.xlu0 %1295
      %v1297 = vrot.slane %v1294, 4
      %v1298 = vrot.slane %v1296, 4
      %v1299 = vsel %vm298, %v1297, %v1298
      %v1300 = vsel %vm361, %v1294, %v1299
      %1303 = vst [vmem:[#allocation2 + $0xc] sm:$0xcc] %v1300
      %1304 = vst.msk [vmem:[#allocation2 + $0x14] sm:$0xc] %vm305, %v1296
      %v1305 = vld [vmem:[%s246] sm:$0x3f]
      %v1307 = vcombine.high %v1305, %v1305
      %v1309 = vunpack.c.l.s4 1983009808
      %v1310 = vunpack.c.0.s8 %v1309
      %v1311 = vlaneseq
      %v1312 = vshrl.u32 %v1311, 7
      %v1313 = vsub.s32 %v1310, %v1312
      %v1314 = vrot.slane %v1305, %v1313
      %v1316 = vunpack.c.l.s4 1983009808
      %v1317 = vunpack.c.0.s8 %v1316
      %v1318 = vlaneseq
      %v1319 = vshrl.u32 %v1318, 7
      %v1320 = vsub.s32 %v1317, %v1319
      %v1321 = vrot.slane %v1307, %v1320
      %1322 = vrot.lane.b32.xlu0 %v1314, 109
      %v1323 = vpop.permute.xlu0 %1322
      %1324 = vrot.lane.b32.xlu0 %v1321, 109
      %v1325 = vpop.permute.xlu0 %1324
      %v1326 = vrot.slane %v1323, 4
      %v1327 = vrot.slane %v1325, 4
      %v1328 = vsel %vm298, %v1326, %v1327
      %v1329 = vsel %vm391, %v1323, %v1328
      %1332 = vst [vmem:[#allocation2 + $0x18] sm:$0x33] %v1329
      %1333 = vst.msk [vmem:[#allocation2 + $0x20] sm:$0x3] %vm273, %v1325
      %v1334 = vld [vmem:[%s246] sm:$0x3f]
      %v1336 = vcombine.low %v1334, %v1334
      %v1338 = vunpack.c.l.s4 1983009808
      %v1339 = vunpack.c.0.s8 %v1338
      %v1340 = vlaneseq
      %v1341 = vshrl.u32 %v1340, 7
      %v1342 = vsub.s32 %v1339, %v1341
      %v1343 = vrot.slane %v1336, %v1342
      %v1345 = vunpack.c.l.s4 1983009808
      %v1346 = vunpack.c.0.s8 %v1345
      %v1347 = vlaneseq
      %v1348 = vshrl.u32 %v1347, 7
      %v1349 = vsub.s32 %v1346, %v1348
      %v1350 = vrot.slane %v1334, %v1349
      %1351 = vrot.lane.b32.xlu0 %v1343, 108
      %v1352 = vpop.permute.xlu0 %1351
      %1353 = vrot.lane.b32.xlu0 %v1350, 108
      %v1354 = vpop.permute.xlu0 %1353
      %v1355 = vrot.slane %v1352, 4
      %v1356 = vrot.slane %v1354, 4
      %v1357 = vsel %vm298, %v1355, %v1356
      %v1358 = vsel %vm421, %v1352, %v1357
      %1361 = vst [vmem:[#allocation2 + $0x18] sm:$0xcc] %v1358
      %1362 = vst.msk [vmem:[#allocation2 + $0x20] sm:$0xc] %vm305, %v1354
      %v1363 = vld [vmem:[%s246] sm:$0x3f]
      %v1365 = vcombine.high %v1363, %v1363
      %v1367 = vunpack.c.l.s4 1983009808
      %v1368 = vunpack.c.0.s8 %v1367
      %v1369 = vlaneseq
      %v1370 = vshrl.u32 %v1369, 7
      %v1371 = vsub.s32 %v1368, %v1370
      %v1372 = vrot.slane %v1363, %v1371
      %v1374 = vunpack.c.l.s4 1983009808
      %v1375 = vunpack.c.0.s8 %v1374
      %v1376 = vlaneseq
      %v1377 = vshrl.u32 %v1376, 7
      %v1378 = vsub.s32 %v1375, %v1377
      %v1379 = vrot.slane %v1365, %v1378
      %1380 = vrot.lane.b32.xlu0 %v1372, 92
      %v1381 = vpop.permute.xlu0 %1380
      %1382 = vrot.lane.b32.xlu0 %v1379, 92
      %v1383 = vpop.permute.xlu0 %1382
      %v1384 = vrot.slane %v1381, 4
      %v1385 = vrot.slane %v1383, 4
      %v1386 = vsel %vm298, %v1384, %v1385
      %v1387 = vsel %vm451, %v1381, %v1386
      %1390 = vst [vmem:[#allocation2 + $0x24] sm:$0x33] %v1387
      %1391 = vst.msk [vmem:[#allocation2 + $0x2c] sm:$0x3] %vm273, %v1383
      %v1392 = vld [vmem:[%s246] sm:$0x3f]
      %v1394 = vcombine.low %v1392, %v1392
      %v1396 = vunpack.c.l.s4 1983009808
      %v1397 = vunpack.c.0.s8 %v1396
      %v1398 = vlaneseq
      %v1399 = vshrl.u32 %v1398, 7
      %v1400 = vsub.s32 %v1397, %v1399
      %v1401 = vrot.slane %v1394, %v1400
      %v1403 = vunpack.c.l.s4 1983009808
      %v1404 = vunpack.c.0.s8 %v1403
      %v1405 = vlaneseq
      %v1406 = vshrl.u32 %v1405, 7
      %v1407 = vsub.s32 %v1404, %v1406
      %v1408 = vrot.slane %v1392, %v1407
      %1409 = vrot.lane.b32.xlu0 %v1401, 91
      %v1410 = vpop.permute.xlu0 %1409
      %1411 = vrot.lane.b32.xlu0 %v1408, 91
      %v1412 = vpop.permute.xlu0 %1411
      %v1413 = vrot.slane %v1410, 4
      %v1414 = vrot.slane %v1412, 4
      %v1415 = vsel %vm298, %v1413, %v1414
      %v1416 = vsel %vm481, %v1410, %v1415
      %1419 = vst [vmem:[#allocation2 + $0x24] sm:$0xcc] %v1416
      %1420 = vst.msk [vmem:[#allocation2 + $0x2c] sm:$0xc] %vm305, %v1412
      %v1421 = vld [vmem:[%s246] sm:$0x3f]
      %v1423 = vcombine.high %v1421, %v1421
      %v1425 = vunpack.c.l.s4 1983009808
      %v1426 = vunpack.c.0.s8 %v1425
      %v1427 = vlaneseq
      %v1428 = vshrl.u32 %v1427, 7
      %v1429 = vsub.s32 %v1426, %v1428
      %v1430 = vrot.slane %v1421, %v1429
      %v1432 = vunpack.c.l.s4 1983009808
      %v1433 = vunpack.c.0.s8 %v1432
      %v1434 = vlaneseq
      %v1435 = vshrl.u32 %v1434, 7
      %v1436 = vsub.s32 %v1433, %v1435
      %v1437 = vrot.slane %v1423, %v1436
      %1438 = vrot.lane.b32.xlu0 %v1430, 90
      %v1439 = vpop.permute.xlu0 %1438
      %1440 = vrot.lane.b32.xlu0 %v1437, 90
      %v1441 = vpop.permute.xlu0 %1440
      %v1442 = vrot.slane %v1439, 4
      %v1443 = vrot.slane %v1441, 4
      %v1444 = vsel %vm298, %v1442, %v1443
      %v1445 = vsel %vm511, %v1439, %v1444
      %1448 = vst [vmem:[#allocation2 + $0x30] sm:$0x33] %v1445
      %1449 = vst.msk [vmem:[#allocation2 + $0x38] sm:$0x3] %vm273, %v1441
      %v1450 = vld [vmem:[%s246] sm:$0x3f]
      %v1452 = vcombine.low %v1450, %v1450
      %v1454 = vunpack.c.l.s4 1983009808
      %v1455 = vunpack.c.0.s8 %v1454
      %v1456 = vlaneseq
      %v1457 = vshrl.u32 %v1456, 7
      %v1458 = vsub.s32 %v1455, %v1457
      %v1459 = vrot.slane %v1452, %v1458
      %v1461 = vunpack.c.l.s4 1983009808
      %v1462 = vunpack.c.0.s8 %v1461
      %v1463 = vlaneseq
      %v1464 = vshrl.u32 %v1463, 7
      %v1465 = vsub.s32 %v1462, %v1464
      %v1466 = vrot.slane %v1450, %v1465
      %1467 = vrot.lane.b32.xlu0 %v1459, 110
      %v1468 = vpop.permute.xlu0 %1467
      %1469 = vrot.lane.b32.xlu0 %v1466, 110
      %v1470 = vpop.permute.xlu0 %1469
      %v1471 = vrot.slane %v1468, 4
      %v1472 = vrot.slane %v1470, 4
      %v1473 = vsel %vm298, %v1471, %v1472
      %v1474 = vsel %vm361, %v1468, %v1473
      %1477 = vst [vmem:[#allocation2 + $0x30] sm:$0xcc] %v1474
      %1478 = vst.msk [vmem:[#allocation2 + $0x38] sm:$0xc] %vm305, %v1470
      %v1479 = vld [vmem:[%s246] sm:$0x3f]
      %v1481 = vcombine.high %v1479, %v1479
      %v1483 = vunpack.c.l.s4 1983009808
      %v1484 = vunpack.c.0.s8 %v1483
      %v1485 = vlaneseq
      %v1486 = vshrl.u32 %v1485, 7
      %v1487 = vsub.s32 %v1484, %v1486
      %v1488 = vrot.slane %v1479, %v1487
      %v1490 = vunpack.c.l.s4 1983009808
      %v1491 = vunpack.c.0.s8 %v1490
      %v1492 = vlaneseq
      %v1493 = vshrl.u32 %v1492, 7
      %v1494 = vsub.s32 %v1491, %v1493
      %v1495 = vrot.slane %v1481, %v1494
      %1496 = vrot.lane.b32.xlu0 %v1488, 109
      %v1497 = vpop.permute.xlu0 %1496
      %1498 = vrot.lane.b32.xlu0 %v1495, 109
      %v1499 = vpop.permute.xlu0 %1498
      %v1500 = vrot.slane %v1497, 4
      %v1501 = vrot.slane %v1499, 4
      %v1502 = vsel %vm298, %v1500, %v1501
      %v1503 = vsel %vm391, %v1497, %v1502
      %1506 = vst [vmem:[#allocation2 + $0x3c] sm:$0x33] %v1503
      %1507 = vst.msk [vmem:[#allocation2 + $0x44] sm:$0x3] %vm273, %v1499
      %v1508 = vld [vmem:[%s246] sm:$0x3f]
      %v1510 = vcombine.low %v1508, %v1508
      %v1512 = vunpack.c.l.s4 1983009808
      %v1513 = vunpack.c.0.s8 %v1512
      %v1514 = vlaneseq
      %v1515 = vshrl.u32 %v1514, 7
      %v1516 = vsub.s32 %v1513, %v1515
      %v1517 = vrot.slane %v1510, %v1516
      %v1519 = vunpack.c.l.s4 1983009808
      %v1520 = vunpack.c.0.s8 %v1519
      %v1521 = vlaneseq
      %v1522 = vshrl.u32 %v1521, 7
      %v1523 = vsub.s32 %v1520, %v1522
      %v1524 = vrot.slane %v1508, %v1523
      %1525 = vrot.lane.b32.xlu0 %v1517, 108
      %v1526 = vpop.permute.xlu0 %1525
      %1527 = vrot.lane.b32.xlu0 %v1524, 108
      %v1528 = vpop.permute.xlu0 %1527
      %v1529 = vrot.slane %v1526, 4
      %v1530 = vrot.slane %v1528, 4
      %v1531 = vsel %vm298, %v1529, %v1530
      %v1532 = vsel %vm421, %v1526, %v1531
      %1535 = vst [vmem:[#allocation2 + $0x3c] sm:$0xcc] %v1532
      %1536 = vst.msk [vmem:[#allocation2 + $0x44] sm:$0xc] %vm305, %v1528
      %v1537 = vld [vmem:[%s246] sm:$0x3f]
      %v1539 = vcombine.high %v1537, %v1537
      %v1541 = vunpack.c.l.s4 1983009808
      %v1542 = vunpack.c.0.s8 %v1541
      %v1543 = vlaneseq
      %v1544 = vshrl.u32 %v1543, 7
      %v1545 = vsub.s32 %v1542, %v1544
      %v1546 = vrot.slane %v1537, %v1545
      %v1548 = vunpack.c.l.s4 1983009808
      %v1549 = vunpack.c.0.s8 %v1548
      %v1550 = vlaneseq
      %v1551 = vshrl.u32 %v1550, 7
      %v1552 = vsub.s32 %v1549, %v1551
      %v1553 = vrot.slane %v1539, %v1552
      %1554 = vrot.lane.b32.xlu0 %v1546, 127
      %v1555 = vpop.permute.xlu0 %1554
      %1556 = vrot.lane.b32.xlu0 %v1553, 127
      %v1557 = vpop.permute.xlu0 %1556
      %v1558 = vrot.slane %v1555, 4
      %v1559 = vrot.slane %v1557, 4
      %v1560 = vsel %vm298, %v1558, %v1559
      %v1561 = vsel %vm300, %v1555, %v1560
      %1564 = vst [vmem:[#allocation2 + $0x48] sm:$0x33] %v1561
      %1565 = vst.msk [vmem:[#allocation2 + $0x50] sm:$0x3] %vm273, %v1557
      %v1566 = vld [vmem:[%s246] sm:$0x3f]
      %v1568 = vcombine.low %v1566, %v1566
      %v1570 = vunpack.c.l.s4 1983009808
      %v1571 = vunpack.c.0.s8 %v1570
      %v1572 = vlaneseq
      %v1573 = vshrl.u32 %v1572, 7
      %v1574 = vsub.s32 %v1571, %v1573
      %v1575 = vrot.slane %v1568, %v1574
      %v1577 = vunpack.c.l.s4 1983009808
      %v1578 = vunpack.c.0.s8 %v1577
      %v1579 = vlaneseq
      %v1580 = vshrl.u32 %v1579, 7
      %v1581 = vsub.s32 %v1578, %v1580
      %v1582 = vrot.slane %v1566, %v1581
      %1583 = vrot.lane.b32.xlu0 %v1575, 109
      %v1584 = vpop.permute.xlu0 %1583
      %1585 = vrot.lane.b32.xlu0 %v1582, 109
      %v1586 = vpop.permute.xlu0 %1585
      %v1587 = vrot.slane %v1584, 4
      %v1588 = vrot.slane %v1586, 4
      %v1589 = vsel %vm298, %v1587, %v1588
      %v1590 = vsel %vm391, %v1584, %v1589
      %1593 = vst [vmem:[#allocation2 + $0x48] sm:$0xcc] %v1590
      %1594 = vst.msk [vmem:[#allocation2 + $0x50] sm:$0xc] %vm305, %v1586
      %v1595 = vld [vmem:[%s246] sm:$0x3f]
      %v1597 = vcombine.high %v1595, %v1595
      %v1599 = vunpack.c.l.s4 1983009808
      %v1600 = vunpack.c.0.s8 %v1599
      %v1601 = vlaneseq
      %v1602 = vshrl.u32 %v1601, 7
      %v1603 = vsub.s32 %v1600, %v1602
      %v1604 = vrot.slane %v1595, %v1603
      %v1606 = vunpack.c.l.s4 1983009808
      %v1607 = vunpack.c.0.s8 %v1606
      %v1608 = vlaneseq
      %v1609 = vshrl.u32 %v1608, 7
      %v1610 = vsub.s32 %v1607, %v1609
      %v1611 = vrot.slane %v1597, %v1610
      %1612 = vrot.lane.b32.xlu0 %v1604, 91
      %v1613 = vpop.permute.xlu0 %1612
      %1614 = vrot.lane.b32.xlu0 %v1611, 91
      %v1615 = vpop.permute.xlu0 %1614
      %v1616 = vrot.slane %v1613, 4
      %v1617 = vrot.slane %v1615, 4
      %v1618 = vsel %vm298, %v1616, %v1617
      %v1619 = vsel %vm481, %v1613, %v1618
      %1622 = vst [vmem:[#allocation2 + $0x54] sm:$0x33] %v1619
      %1623 = vst.msk [vmem:[#allocation2 + $0x5c] sm:$0x3] %vm273, %v1615
      %s1624 = scalar_lea.vmem %s1, 4
      %v1625 = vld [vmem:[%s1624] sm:$0xf]
      %v1626 = vld [vmem:[#allocation2] sm:$0xff]
      %v1627 = vld [vmem:[#allocation2 + $0x8] sm:$0xf]
      %v1628 = vld [vmem:[#allocation2 + $0xc] sm:$0xff]
      %v1629 = vld [vmem:[#allocation2 + $0x14] sm:$0xf]
      %v1630 = vld [vmem:[#allocation2 + $0x18] sm:$0xff]
      %v1631 = vld [vmem:[#allocation2 + $0x20] sm:$0xf]
      %v1632 = vld [vmem:[#allocation2 + $0x24] sm:$0xff]
      %v1633 = vld [vmem:[#allocation2 + $0x2c] sm:$0xf]
      %v1634 = vld [vmem:[#allocation2 + $0x30] sm:$0xff]
      %v1635 = vld [vmem:[#allocation2 + $0x38] sm:$0xf]
      %v1636 = vld [vmem:[#allocation2 + $0x3c] sm:$0xff]
      %v1637 = vld [vmem:[#allocation2 + $0x44] sm:$0xf]
      %v1638 = vld [vmem:[#allocation2 + $0x48] sm:$0xff]
      %v1639 = vld [vmem:[#allocation2 + $0x50] sm:$0xf]
      %v1640 = vld [vmem:[#allocation2 + $0x54] sm:$0x33]
      %v1641 = vld [vmem:[#allocation2 + $0x5c] sm:$0x3]
      %s1642 = scalar_lea.vmem %s2, 8
      %v1643 = vld [vmem:[%s1642] sm:$0xff]
      %1645 = vset.pattern.permute.xlu0 0
      %1646 = vperm.xlu0 %1645, %v1643
      %v1647 = vpop.permute.xlu0 %1646
      %v1665 = vunpack.c.l.b16 %v1626
      %v1666 = vunpack.c.h.b16 %v1626
      %v1667 = vunpack.c.l.b16 %v1627
      %v1668 = vunpack.c.l.b16 %v1628
      %v1669 = vunpack.c.h.b16 %v1628
      %v1670 = vunpack.c.l.b16 %v1629
      %v1671 = vunpack.c.l.b16 %v1630
      %v1672 = vunpack.c.h.b16 %v1630
      %v1673 = vunpack.c.l.b16 %v1631
      %v1674 = vunpack.c.l.b16 %v1632
      %v1675 = vunpack.c.h.b16 %v1632
      %v1676 = vunpack.c.l.b16 %v1633
      %v1677 = vunpack.c.l.b16 %v1634
      %v1678 = vunpack.c.h.b16 %v1634
      %v1679 = vunpack.c.l.b16 %v1635
      %v1680 = vunpack.c.l.b16 %v1636
      %v1681 = vunpack.c.h.b16 %v1636
      %v1682 = vunpack.c.l.b16 %v1637
      %v1683 = vunpack.c.l.b16 %v1638
      %v1684 = vunpack.c.h.b16 %v1638
      %v1685 = vunpack.c.l.b16 %v1639
      %v1686 = vunpack.c.l.b16 %v1640
      %v1687 = vunpack.c.h.b16 %v1640
      %v1688 = vunpack.c.l.b16 %v1641
      %v1689 = vpack.c.b16 %v1668, %v1665
      %v1690 = vpack.c.b16 %v1669, %v1666
      %v1691 = vpack.c.b16 %v1670, %v1667
      %v1692 = vpack.c.b16 %v1674, %v1671
      %v1693 = vpack.c.b16 %v1675, %v1672
      %v1694 = vpack.c.b16 %v1676, %v1673
      %v1695 = vpack.c.b16 %v1680, %v1677
      %v1696 = vpack.c.b16 %v1681, %v1678
      %v1697 = vpack.c.b16 %v1682, %v1679
      %v1698 = vpack.c.b16 %v1686, %v1683
      %v1699 = vpack.c.b16 %v1687, %v1684
      %v1700 = vpack.c.b16 %v1688, %v1685
      %v1711 = vsel %vm775, %v1625, 0
      %v1714 = vsel %vm779, %v1698, 0
      %v1717 = vsel %vm779, %v1699, 0
      %v1720 = vsel %vm779, %v1700, 0
      %1722 = vmatprep.subr.bf16.mxu0 %v1690
      %1723 = vmatpush1.bf16.msra.mxu0 %v1689
      %1724 = vmatprep.subr.bf16.mxu0 %v1693
      %1725 = vmatpush1.bf16.msra.mxu0 %v1692
      %1726 = vmatprep.subr.bf16.mxu0 %v1696
      %1727 = vmatpush1.bf16.msra.mxu0 %v1695
      %1728 = vmatprep.subr.bf16.mxu0 %v1717
      %1729 = vmatpush1.bf16.msra.mxu0 %v1714
      %1730 = vmatprep.subr.bf16.mxu0 0
      %1731 = vmatpush1.bf16.msra.mxu0 0
      %1732 = vmatprep.subr.bf16.mxu0 0
      %1733 = vmatpush1.bf16.msra.mxu0 0
      %1734 = vmatprep.subr.bf16.mxu0 0
      %1735 = vmatpush1.bf16.msra.mxu0 0
      %1736 = vmatprep.subr.bf16.mxu0 0
      %1737 = vmatpush1.bf16.msra.mxu0 0
      %1738 = vmatprep.subr.bf16.mxu0 0
      %1739 = vmatpush1.bf16.msra.mxu0 0
      %1740 = vmatprep.subr.bf16.mxu0 0
      %1741 = vmatpush1.bf16.msra.mxu0 0
      %1742 = vmatprep.subr.bf16.mxu0 0
      %1743 = vmatpush1.bf16.msra.mxu0 0
      %1744 = vmatprep.subr.bf16.mxu0 0
      %1745 = vmatpush1.bf16.msra.mxu0 0
      %1746 = vmatprep.subr.bf16.mxu0 0
      %1747 = vmatpush1.bf16.msra.mxu0 0
      %1748 = vmatprep.subr.bf16.mxu0 0
      %1749 = vmatpush1.bf16.msra.mxu0 0
      %1750 = vmatprep.subr.bf16.mxu0 0
      %1751 = vmatpush1.bf16.msra.mxu0 0
      %1752 = vmatprep.subr.bf16.mxu0 0
      %1753 = vmatpush1.bf16.msra.mxu0 0
      %1754 = vmatprep.mubr.bf16.mxu0 0
      %1755 = vmatmul.mubr.bf16.gmra.mrb[0].mxu0 %v1711
      %v1756 = vpop.f32.mrb[0].mxu0
      %v1757 = vadd.f32 %v1647, %v1756
      %v1758 = vpop.f32.mrb[0].mxu0
      %v1759 = vadd.f32 %v1647, %v1758
      %v1760 = vpop.f32.mrb[0].mxu0
      %v1761 = vpop.f32.mrb[0].mxu0
      %1762 = vdwg.mxu0
      %1763 = vmatprep.subr.bf16.mxu0 0
      %1764 = vmatpush1.bf16.msra.mxu0 %v1691
      %1765 = vmatprep.subr.bf16.mxu0 0
      %1766 = vmatpush1.bf16.msra.mxu0 %v1694
      %1767 = vmatprep.subr.bf16.mxu0 0
      %1768 = vmatpush1.bf16.msra.mxu0 %v1697
      %1769 = vmatprep.subr.bf16.mxu0 0
      %1770 = vmatpush1.bf16.msra.mxu0 %v1720
      %1771 = vmatprep.subr.bf16.mxu0 0
      %1772 = vmatpush1.bf16.msra.mxu0 0
      %1773 = vmatprep.subr.bf16.mxu0 0
      %1774 = vmatpush1.bf16.msra.mxu0 0
      %1775 = vmatprep.subr.bf16.mxu0 0
      %1776 = vmatpush1.bf16.msra.mxu0 0
      %1777 = vmatprep.subr.bf16.mxu0 0
      %1778 = vmatpush1.bf16.msra.mxu0 0
      %1779 = vmatprep.subr.bf16.mxu0 0
      %1780 = vmatpush1.bf16.msra.mxu0 0
      %1781 = vmatprep.subr.bf16.mxu0 0
      %1782 = vmatpush1.bf16.msra.mxu0 0
      %1783 = vmatprep.subr.bf16.mxu0 0
      %1784 = vmatpush1.bf16.msra.mxu0 0
      %1785 = vmatprep.subr.bf16.mxu0 0
      %1786 = vmatpush1.bf16.msra.mxu0 0
      %1787 = vmatprep.subr.bf16.mxu0 0
      %1788 = vmatpush1.bf16.msra.mxu0 0
      %1789 = vmatprep.subr.bf16.mxu0 0
      %1790 = vmatpush1.bf16.msra.mxu0 0
      %1791 = vmatprep.subr.bf16.mxu0 0
      %1792 = vmatpush1.bf16.msra.mxu0 0
      %1793 = vmatprep.subr.bf16.mxu0 0
      %1794 = vmatpush1.bf16.msra.mxu0 0
      %1795 = vmatprep.mubr.bf16.mxu0 0
      %1796 = vmatmul.mubr.bf16.gmra.mrb[0].mxu0 %v1711
      %v1797 = vpop.f32.mrb[0].mxu0
      %v1798 = vadd.f32 %v1647, %v1797
      %v1799 = vpop.f32.mrb[0].mxu0
      %v1800 = vpop.f32.mrb[0].mxu0
      %v1801 = vpop.f32.mrb[0].mxu0
      %1802 = vdwg.mxu0
      %v1803 = vmax.f32 %v1757, 0.0
      %v1804 = vmax.f32 %v1759, 0.0
      %v1805 = vmax.f32 %v1798, 0.0
      %1806 = vset.pattern.permute.xlu0 1
      %1807 = vperm.xlu0 %1806, %v1643
      %v1808 = vpop.permute.xlu0 %1807
      %v1810 = vmul.f32 %v1803, %v1808
      %v1811 = vmul.f32 %v1804, %v1808
      %v1812 = vmul.f32 %v1805, %v1808
      %1813 = vset.pattern.permute.xlu0 2
      %1814 = vperm.xlu0 %1813, %v1643
      %v1815 = vpop.permute.xlu0 %1814
      %v1817 = vadd.f32 %v1810, %v1815
      %v1818 = vadd.f32 %v1811, %v1815
      %v1819 = vadd.f32 %v1812, %v1815
      %v1820 = vmax.f32 %v1817, 0.0
      %v1821 = vmax.f32 %v1818, 0.0
      %v1822 = vmax.f32 %v1819, 0.0
      %v1823 = vpack.c.bf16 %v1820, %v1820
      %v1824 = vpack.c.bf16 %v1821, %v1821
      %v1825 = vpack.c.bf16 %v1822, %v1822
      %s1826 = scalar_lea.vmem %s3, 288
      %v1827 = vld [vmem:[%s1826] sm:$0xff]
      %v1828 = vld [vmem:[%s1826 + $0x8] sm:$0xff]
      %v1829 = vld [vmem:[%s1826 + $0x10] sm:$0xff]
      %v1830 = vld [vmem:[%s1826 + $0x18] sm:$0xff]
      %v1831 = vld [vmem:[%s1826 + $0x20] sm:$0xff]
      %v1832 = vld [vmem:[%s1826 + $0x28] sm:$0xff]
      %v1833 = vld [vmem:[%s1826 + $0x30] sm:$0xff]
      %v1834 = vld [vmem:[%s1826 + $0x38] sm:$0xff]
      %v1835 = vld [vmem:[%s1826 + $0x40] sm:$0xff]
      %v1836 = vld [vmem:[%s1826 + $0x48] sm:$0xff]
      %v1837 = vld [vmem:[%s1826 + $0x50] sm:$0xff]
      %v1838 = vld [vmem:[%s1826 + $0x58] sm:$0xff]
      %v1839 = vld [vmem:[%s1826 + $0x60] sm:$0xff]
      %v1840 = vld [vmem:[%s1826 + $0x68] sm:$0xff]
      %v1841 = vld [vmem:[%s1826 + $0x70] sm:$0xff]
      %v1842 = vld [vmem:[%s1826 + $0x78] sm:$0xff]
      %v1843 = vld [vmem:[%s1826 + $0x80] sm:$0xff]
      %v1844 = vld [vmem:[%s1826 + $0x88] sm:$0xff]
      %v1845 = vld [vmem:[%s1826 + $0x90] sm:$0xff]
      %v1846 = vld [vmem:[%s1826 + $0x98] sm:$0xff]
      %v1847 = vld [vmem:[%s1826 + $0xa0] sm:$0xff]
      %v1848 = vld [vmem:[%s1826 + $0xa8] sm:$0xff]
      %v1849 = vld [vmem:[%s1826 + $0xb0] sm:$0xff]
      %v1850 = vld [vmem:[%s1826 + $0xb8] sm:$0xff]
      %v1851 = vld [vmem:[%s1826 + $0xc0] sm:$0xff]
      %v1852 = vld [vmem:[%s1826 + $0xc8] sm:$0xff]
      %v1853 = vld [vmem:[%s1826 + $0xd0] sm:$0xff]
      %v1854 = vld [vmem:[%s1826 + $0xd8] sm:$0xff]
      %v1855 = vld [vmem:[%s1826 + $0xe0] sm:$0xff]
      %v1856 = vld [vmem:[%s1826 + $0xe8] sm:$0xff]
      %v1857 = vld [vmem:[%s1826 + $0xf0] sm:$0xff]
      %v1858 = vld [vmem:[%s1826 + $0xf8] sm:$0xff]
      %v1859 = vld [vmem:[%s1826 + $0x100] sm:$0xff]
      %v1860 = vld [vmem:[%s1826 + $0x108] sm:$0xff]
      %v1861 = vld [vmem:[%s1826 + $0x110] sm:$0xff]
      %v1862 = vld [vmem:[%s1826 + $0x118] sm:$0xff]
      %v1899 = vunpack.c.l.b16 %v1827
      %v1900 = vunpack.c.h.b16 %v1827
      %v1901 = vunpack.c.l.b16 %v1828
      %v1902 = vunpack.c.h.b16 %v1828
      %v1903 = vunpack.c.l.b16 %v1829
      %v1904 = vunpack.c.h.b16 %v1829
      %v1905 = vunpack.c.l.b16 %v1830
      %v1906 = vunpack.c.h.b16 %v1830
      %v1907 = vunpack.c.l.b16 %v1831
      %v1908 = vunpack.c.h.b16 %v1831
      %v1909 = vunpack.c.l.b16 %v1832
      %v1910 = vunpack.c.h.b16 %v1832
      %v1911 = vunpack.c.l.b16 %v1833
      %v1912 = vunpack.c.h.b16 %v1833
      %v1913 = vunpack.c.l.b16 %v1834
      %v1914 = vunpack.c.h.b16 %v1834
      %v1915 = vunpack.c.l.b16 %v1835
      %v1916 = vunpack.c.h.b16 %v1835
      %v1917 = vunpack.c.l.b16 %v1836
      %v1918 = vunpack.c.h.b16 %v1836
      %v1919 = vunpack.c.l.b16 %v1837
      %v1920 = vunpack.c.h.b16 %v1837
      %v1921 = vunpack.c.l.b16 %v1838
      %v1922 = vunpack.c.h.b16 %v1838
      %v1923 = vunpack.c.l.b16 %v1839
      %v1924 = vunpack.c.h.b16 %v1839
      %v1925 = vunpack.c.l.b16 %v1840
      %v1926 = vunpack.c.h.b16 %v1840
      %v1927 = vunpack.c.l.b16 %v1841
      %v1928 = vunpack.c.h.b16 %v1841
      %v1929 = vunpack.c.l.b16 %v1842
      %v1930 = vunpack.c.h.b16 %v1842
      %v1931 = vunpack.c.l.b16 %v1843
      %v1932 = vunpack.c.h.b16 %v1843
      %v1933 = vunpack.c.l.b16 %v1844
      %v1934 = vunpack.c.h.b16 %v1844
      %v1935 = vunpack.c.l.b16 %v1845
      %v1936 = vunpack.c.h.b16 %v1845
      %v1937 = vunpack.c.l.b16 %v1846
      %v1938 = vunpack.c.h.b16 %v1846
      %v1939 = vunpack.c.l.b16 %v1847
      %v1940 = vunpack.c.h.b16 %v1847
      %v1941 = vunpack.c.l.b16 %v1848
      %v1942 = vunpack.c.h.b16 %v1848
      %v1943 = vunpack.c.l.b16 %v1849
      %v1944 = vunpack.c.h.b16 %v1849
      %v1945 = vunpack.c.l.b16 %v1850
      %v1946 = vunpack.c.h.b16 %v1850
      %v1947 = vunpack.c.l.b16 %v1851
      %v1948 = vunpack.c.h.b16 %v1851
      %v1949 = vunpack.c.l.b16 %v1852
      %v1950 = vunpack.c.h.b16 %v1852
      %v1951 = vunpack.c.l.b16 %v1853
      %v1952 = vunpack.c.h.b16 %v1853
      %v1953 = vunpack.c.l.b16 %v1854
      %v1954 = vunpack.c.h.b16 %v1854
      %v1955 = vunpack.c.l.b16 %v1855
      %v1956 = vunpack.c.h.b16 %v1855
      %v1957 = vunpack.c.l.b16 %v1856
      %v1958 = vunpack.c.h.b16 %v1856
      %v1959 = vunpack.c.l.b16 %v1857
      %v1960 = vunpack.c.h.b16 %v1857
      %v1961 = vunpack.c.l.b16 %v1858
      %v1962 = vunpack.c.h.b16 %v1858
      %v1963 = vunpack.c.l.b16 %v1859
      %v1964 = vunpack.c.h.b16 %v1859
      %v1965 = vunpack.c.l.b16 %v1860
      %v1966 = vunpack.c.h.b16 %v1860
      %v1967 = vunpack.c.l.b16 %v1861
      %v1968 = vunpack.c.h.b16 %v1861
      %v1969 = vunpack.c.l.b16 %v1862
      %v1970 = vunpack.c.h.b16 %v1862
      %v1971 = vpack.c.b16 %v1901, %v1899
      %v1972 = vpack.c.b16 %v1902, %v1900
      %v1973 = vpack.c.b16 %v1905, %v1903
      %v1974 = vpack.c.b16 %v1906, %v1904
      %v1975 = vpack.c.b16 %v1909, %v1907
      %v1976 = vpack.c.b16 %v1910, %v1908
      %v1977 = vpack.c.b16 %v1913, %v1911
      %v1978 = vpack.c.b16 %v1914, %v1912
      %v1979 = vpack.c.b16 %v1917, %v1915
      %v1980 = vpack.c.b16 %v1918, %v1916
      %v1981 = vpack.c.b16 %v1921, %v1919
      %v1982 = vpack.c.b16 %v1922, %v1920
      %v1983 = vpack.c.b16 %v1925, %v1923
      %v1984 = vpack.c.b16 %v1926, %v1924
      %v1985 = vpack.c.b16 %v1929, %v1927
      %v1986 = vpack.c.b16 %v1930, %v1928
      %v1987 = vpack.c.b16 %v1933, %v1931
      %v1988 = vpack.c.b16 %v1934, %v1932
      %v1989 = vpack.c.b16 %v1937, %v1935
      %v1990 = vpack.c.b16 %v1938, %v1936
      %v1991 = vpack.c.b16 %v1941, %v1939
      %v1992 = vpack.c.b16 %v1942, %v1940
      %v1993 = vpack.c.b16 %v1945, %v1943
      %v1994 = vpack.c.b16 %v1946, %v1944
      %v1995 = vpack.c.b16 %v1949, %v1947
      %v1996 = vpack.c.b16 %v1950, %v1948
      %v1997 = vpack.c.b16 %v1953, %v1951
      %v1998 = vpack.c.b16 %v1954, %v1952
      %v1999 = vpack.c.b16 %v1957, %v1955
      %v2000 = vpack.c.b16 %v1958, %v1956
      %v2001 = vpack.c.b16 %v1961, %v1959
      %v2002 = vpack.c.b16 %v1962, %v1960
      %v2003 = vpack.c.b16 %v1965, %v1963
      %v2004 = vpack.c.b16 %v1966, %v1964
      %v2005 = vpack.c.b16 %v1969, %v1967
      %v2006 = vpack.c.b16 %v1970, %v1968
      %v2044 = vsel %vm1109, %v1825, 0
      %2046 = vmatprep.subr.bf16.mxu0 %v1972
      %2047 = vmatpush1.bf16.msra.mxu0 %v1971
      %2048 = vmatprep.subr.bf16.mxu0 %v1974
      %2049 = vmatpush1.bf16.msra.mxu0 %v1973
      %2050 = vmatprep.subr.bf16.mxu0 %v1976
      %2051 = vmatpush1.bf16.msra.mxu0 %v1975
      %2052 = vmatprep.subr.bf16.mxu0 %v1978
      %2053 = vmatpush1.bf16.msra.mxu0 %v1977
      %2054 = vmatprep.subr.bf16.mxu0 %v1980
      %2055 = vmatpush1.bf16.msra.mxu0 %v1979
      %2056 = vmatprep.subr.bf16.mxu0 %v1982
      %2057 = vmatpush1.bf16.msra.mxu0 %v1981
      %2058 = vmatprep.subr.bf16.mxu0 %v1984
      %2059 = vmatpush1.bf16.msra.mxu0 %v1983
      %2060 = vmatprep.subr.bf16.mxu0 %v1986
      %2061 = vmatpush1.bf16.msra.mxu0 %v1985
      %2062 = vmatprep.subr.bf16.mxu0 %v1988
      %2063 = vmatpush1.bf16.msra.mxu0 %v1987
      %2064 = vmatprep.subr.bf16.mxu0 %v1990
      %2065 = vmatpush1.bf16.msra.mxu0 %v1989
      %2066 = vmatprep.subr.bf16.mxu0 %v1992
      %2067 = vmatpush1.bf16.msra.mxu0 %v1991
      %2068 = vmatprep.subr.bf16.mxu0 %v1994
      %2069 = vmatpush1.bf16.msra.mxu0 %v1993
      %2070 = vmatprep.subr.bf16.mxu0 %v1996
      %2071 = vmatpush1.bf16.msra.mxu0 %v1995
      %2072 = vmatprep.subr.bf16.mxu0 %v1998
      %2073 = vmatpush1.bf16.msra.mxu0 %v1997
      %2074 = vmatprep.subr.bf16.mxu0 %v2000
      %2075 = vmatpush1.bf16.msra.mxu0 %v1999
      %2076 = vmatprep.subr.bf16.mxu0 %v2002
      %2077 = vmatpush1.bf16.msra.mxu0 %v2001
      %2078 = vmatprep.mubr.bf16.mxu0 %v1824
      %2079 = vmatmul.mubr.bf16.gmra.mrb[0].mxu0 %v1823
      %v2080 = vpop.f32.mrb[0].mxu0
      %v2081 = vadd.f32 0.0, %v2080
      %v2082 = vpop.f32.mrb[0].mxu0
      %v2083 = vadd.f32 0.0, %v2082
      %v2084 = vpop.f32.mrb[0].mxu0
      %v2085 = vpop.f32.mrb[0].mxu0
      %2086 = vdwg.mxu0
      %2087 = vmatprep.subr.bf16.mxu0 %v2004
      %2088 = vmatpush1.bf16.msra.mxu0 %v2003
      %2089 = vmatprep.subr.bf16.mxu0 %v2006
      %2090 = vmatpush1.bf16.msra.mxu0 %v2005
      %2091 = vmatprep.subr.bf16.mxu0 0
      %2092 = vmatpush1.bf16.msra.mxu0 0
      %2093 = vmatprep.subr.bf16.mxu0 0
      %2094 = vmatpush1.bf16.msra.mxu0 0
      %2095 = vmatprep.subr.bf16.mxu0 0
      %2096 = vmatpush1.bf16.msra.mxu0 0
      %2097 = vmatprep.subr.bf16.mxu0 0
      %2098 = vmatpush1.bf16.msra.mxu0 0
      %2099 = vmatprep.subr.bf16.mxu0 0
      %2100 = vmatpush1.bf16.msra.mxu0 0
      %2101 = vmatprep.subr.bf16.mxu0 0
      %2102 = vmatpush1.bf16.msra.mxu0 0
      %2103 = vmatprep.subr.bf16.mxu0 0
      %2104 = vmatpush1.bf16.msra.mxu0 0
      %2105 = vmatprep.subr.bf16.mxu0 0
      %2106 = vmatpush1.bf16.msra.mxu0 0
      %2107 = vmatprep.subr.bf16.mxu0 0
      %2108 = vmatpush1.bf16.msra.mxu0 0
      %2109 = vmatprep.subr.bf16.mxu0 0
      %2110 = vmatpush1.bf16.msra.mxu0 0
      %2111 = vmatprep.subr.bf16.mxu0 0
      %2112 = vmatpush1.bf16.msra.mxu0 0
      %2113 = vmatprep.subr.bf16.mxu0 0
      %2114 = vmatpush1.bf16.msra.mxu0 0
      %2115 = vmatprep.subr.bf16.mxu0 0
      %2116 = vmatpush1.bf16.msra.mxu0 0
      %2117 = vmatprep.subr.bf16.mxu0 0
      %2118 = vmatpush1.bf16.msra.mxu0 0
      %2119 = vmatprep.mubr.bf16.mxu0 0
      %2120 = vmatmul.mubr.bf16.gmra.mrb[0].mxu0 %v2044
      %v2121 = vpop.f32.mrb[0].mxu0
      %v2122 = vadd.f32 %v2081, %v2121
      %v2123 = vpop.f32.mrb[0].mxu0
      %v2124 = vadd.f32 %v2083, %v2123
      %v2125 = vpop.f32.mrb[0].mxu0
      %v2126 = vpop.f32.mrb[0].mxu0
      %2127 = vdwg.mxu0
      %2128 = vst [vmem:[%s251 + $0x10] sm:$0xff] %v2122
      %2129 = vst [vmem:[%s251 + $0x18] sm:$0xff] %v2124
      %v2130 = vld [vmem:[%s246] sm:$0xf]
      %v2133 = vunpack.c.l.s4 1983009808
      %v2134 = vunpack.c.0.s8 %v2133
      %v2135 = vlaneseq
      %v2136 = vshrl.u32 %v2135, 7
      %v2137 = vsub.s32 %v2134, %v2136
      %v2138 = vrot.slane %v2130, %v2137
      %vm2140 = vcmask 1041408
      %vm2141 = vcmask 1012740
      %vm2142 = vmor %vm2141, %vm2140
      %2143 = vst.msk [vmem:[#allocation2] sm:$0x33] %vm2142, %v2138
      %v2144 = vld [vmem:[%s246] sm:$0xf]
      %v2146 = vcombine.low %v2144, %v2144
      %v2148 = vunpack.c.l.s4 1983009808
      %v2149 = vunpack.c.0.s8 %v2148
      %v2150 = vlaneseq
      %v2151 = vshrl.u32 %v2150, 7
      %v2152 = vsub.s32 %v2149, %v2151
      %v2153 = vrot.slane %v2146, %v2152
      %2154 = vrot.lane.b32.xlu0 %v2153, 126
      %v2155 = vpop.permute.xlu0 %2154
      %v2156 = vrot.slane %v2155, 4
      %v2157 = vsel %vm331, %v2155, %v2156
      %vm2159 = vcmask 1043458
      %vm2160 = vcmask 1014790
      %vm2161 = vmor %vm2160, %vm2159
      %2162 = vst.msk [vmem:[#allocation2] sm:$0xcc] %vm2161, %v2157
      %v2163 = vld [vmem:[%s246] sm:$0xf]
      %v2166 = vunpack.c.l.s4 1983009808
      %v2167 = vunpack.c.0.s8 %v2166
      %v2168 = vlaneseq
      %v2169 = vshrl.u32 %v2168, 7
      %v2170 = vsub.s32 %v2167, %v2169
      %v2171 = vrot.slane %v2163, %v2170
      %2172 = vrot.lane.b32.xlu0 %v2171, 124
      %v2173 = vpop.permute.xlu0 %2172
      %v2174 = vrot.slane %v2173, 4
      %vm2175 = vcmask 1014784
      %v2176 = vsel %vm2175, %v2173, %v2174
      %2178 = vst.msk [vmem:[#allocation2 + $0xc] sm:$0x33] %vm2142, %v2176
      %v2179 = vld [vmem:[%s246] sm:$0x3f]
      %v2181 = vcombine.low %v2179, %v2179
      %v2183 = vunpack.c.l.s4 1983009808
      %v2184 = vunpack.c.0.s8 %v2183
      %v2185 = vlaneseq
      %v2186 = vshrl.u32 %v2185, 7
      %v2187 = vsub.s32 %v2184, %v2186
      %v2188 = vrot.slane %v2181, %v2187
      %v2190 = vunpack.c.l.s4 1983009808
      %v2191 = vunpack.c.0.s8 %v2190
      %v2192 = vlaneseq
      %v2193 = vshrl.u32 %v2192, 7
      %v2194 = vsub.s32 %v2191, %v2193
      %v2195 = vrot.slane %v2179, %v2194
      %2196 = vrot.lane.b32.xlu0 %v2188, 92
      %v2197 = vpop.permute.xlu0 %2196
      %2198 = vrot.lane.b32.xlu0 %v2195, 92
      %v2199 = vpop.permute.xlu0 %2198
      %v2200 = vrot.slane %v2197, 4
      %v2201 = vrot.slane %v2199, 4
      %v2202 = vsel %vm298, %v2200, %v2201
      %v2203 = vsel %vm451, %v2197, %v2202
      %2205 = vst.msk [vmem:[#allocation2 + $0xc] sm:$0xcc] %vm2161, %v2203
      %v2206 = vld [vmem:[%s246] sm:$0x3f]
      %v2208 = vcombine.high %v2206, %v2206
      %v2210 = vunpack.c.l.s4 1983009808
      %v2211 = vunpack.c.0.s8 %v2210
      %v2212 = vlaneseq
      %v2213 = vshrl.u32 %v2212, 7
      %v2214 = vsub.s32 %v2211, %v2213
      %v2215 = vrot.slane %v2206, %v2214
      %v2217 = vunpack.c.l.s4 1983009808
      %v2218 = vunpack.c.0.s8 %v2217
      %v2219 = vlaneseq
      %v2220 = vshrl.u32 %v2219, 7
      %v2221 = vsub.s32 %v2218, %v2220
      %v2222 = vrot.slane %v2208, %v2221
      %2223 = vrot.lane.b32.xlu0 %v2215, 90
      %v2224 = vpop.permute.xlu0 %2223
      %2225 = vrot.lane.b32.xlu0 %v2222, 90
      %v2226 = vpop.permute.xlu0 %2225
      %v2227 = vrot.slane %v2224, 4
      %v2228 = vrot.slane %v2226, 4
      %v2229 = vsel %vm298, %v2227, %v2228
      %v2230 = vsel %vm511, %v2224, %v2229
      %2232 = vst.msk [vmem:[#allocation2 + $0x18] sm:$0x33] %vm2142, %v2230
      %v2233 = vld [vmem:[%s246] sm:$0x3f]
      %v2235 = vcombine.low %v2233, %v2233
      %v2237 = vunpack.c.l.s4 1983009808
      %v2238 = vunpack.c.0.s8 %v2237
      %v2239 = vlaneseq
      %v2240 = vshrl.u32 %v2239, 7
      %v2241 = vsub.s32 %v2238, %v2240
      %v2242 = vrot.slane %v2235, %v2241
      %v2244 = vunpack.c.l.s4 1983009808
      %v2245 = vunpack.c.0.s8 %v2244
      %v2246 = vlaneseq
      %v2247 = vshrl.u32 %v2246, 7
      %v2248 = vsub.s32 %v2245, %v2247
      %v2249 = vrot.slane %v2233, %v2248
      %2250 = vrot.lane.b32.xlu0 %v2242, 88
      %v2251 = vpop.permute.xlu0 %2250
      %2252 = vrot.lane.b32.xlu0 %v2249, 88
      %v2253 = vpop.permute.xlu0 %2252
      %v2254 = vrot.slane %v2251, 4
      %v2255 = vrot.slane %v2253, 4
      %v2256 = vsel %vm298, %v2254, %v2255
      %vm2257 = vcmask 719872
      %v2258 = vsel %vm2257, %v2251, %v2256
      %2260 = vst.msk [vmem:[#allocation2 + $0x18] sm:$0xcc] %vm2161, %v2258
      %v2261 = vld [vmem:[%s246] sm:$0x3f]
      %v2263 = vcombine.high %v2261, %v2261
      %v2265 = vunpack.c.l.s4 1983009808
      %v2266 = vunpack.c.0.s8 %v2265
      %v2267 = vlaneseq
      %v2268 = vshrl.u32 %v2267, 7
      %v2269 = vsub.s32 %v2266, %v2268
      %v2270 = vrot.slane %v2261, %v2269
      %v2272 = vunpack.c.l.s4 1983009808
      %v2273 = vunpack.c.0.s8 %v2272
      %v2274 = vlaneseq
      %v2275 = vshrl.u32 %v2274, 7
      %v2276 = vsub.s32 %v2273, %v2275
      %v2277 = vrot.slane %v2263, %v2276
      %2278 = vrot.lane.b32.xlu0 %v2270, 56
      %v2279 = vpop.permute.xlu0 %2278
      %2280 = vrot.lane.b32.xlu0 %v2277, 56
      %v2281 = vpop.permute.xlu0 %2280
      %v2282 = vrot.slane %v2279, 4
      %v2283 = vrot.slane %v2281, 4
      %v2284 = vsel %vm298, %v2282, %v2283
      %vm2285 = vcmask 457728
      %v2286 = vsel %vm2285, %v2279, %v2284
      %2288 = vst.msk [vmem:[#allocation2 + $0x24] sm:$0x33] %vm2142, %v2286
      %v2289 = vld [vmem:[%s246] sm:$0x3f]
      %v2291 = vcombine.low %v2289, %v2289
      %v2293 = vunpack.c.l.s4 1983009808
      %v2294 = vunpack.c.0.s8 %v2293
      %v2295 = vlaneseq
      %v2296 = vshrl.u32 %v2295, 7
      %v2297 = vsub.s32 %v2294, %v2296
      %v2298 = vrot.slane %v2291, %v2297
      %v2300 = vunpack.c.l.s4 1983009808
      %v2301 = vunpack.c.0.s8 %v2300
      %v2302 = vlaneseq
      %v2303 = vshrl.u32 %v2302, 7
      %v2304 = vsub.s32 %v2301, %v2303
      %v2305 = vrot.slane %v2289, %v2304
      %2306 = vrot.lane.b32.xlu0 %v2298, 54
      %v2307 = vpop.permute.xlu0 %2306
      %2308 = vrot.lane.b32.xlu0 %v2305, 54
      %v2309 = vpop.permute.xlu0 %2308
      %v2310 = vrot.slane %v2307, 4
      %v2311 = vrot.slane %v2309, 4
      %v2312 = vsel %vm298, %v2310, %v2311
      %vm2313 = vcmask 441344
      %v2314 = vsel %vm2313, %v2307, %v2312
      %2316 = vst.msk [vmem:[#allocation2 + $0x24] sm:$0xcc] %vm2161, %v2314
      %v2317 = vld [vmem:[%s246] sm:$0x3f]
      %v2319 = vcombine.high %v2317, %v2317
      %v2321 = vunpack.c.l.s4 1983009808
      %v2322 = vunpack.c.0.s8 %v2321
      %v2323 = vlaneseq
      %v2324 = vshrl.u32 %v2323, 7
      %v2325 = vsub.s32 %v2322, %v2324
      %v2326 = vrot.slane %v2317, %v2325
      %v2328 = vunpack.c.l.s4 1983009808
      %v2329 = vunpack.c.0.s8 %v2328
      %v2330 = vlaneseq
      %v2331 = vshrl.u32 %v2330, 7
      %v2332 = vsub.s32 %v2329, %v2331
      %v2333 = vrot.slane %v2319, %v2332
      %2334 = vrot.lane.b32.xlu0 %v2326, 52
      %v2335 = vpop.permute.xlu0 %2334
      %2336 = vrot.lane.b32.xlu0 %v2333, 52
      %v2337 = vpop.permute.xlu0 %2336
      %v2338 = vrot.slane %v2335, 4
      %v2339 = vrot.slane %v2337, 4
      %v2340 = vsel %vm298, %v2338, %v2339
      %vm2341 = vcmask 424960
      %v2342 = vsel %vm2341, %v2335, %v2340
      %2344 = vst.msk [vmem:[#allocation2 + $0x30] sm:$0x33] %vm2142, %v2342
      %v2345 = vld [vmem:[%s246] sm:$0x3f]
      %v2347 = vcombine.low %v2345, %v2345
      %v2349 = vunpack.c.l.s4 1983009808
      %v2350 = vunpack.c.0.s8 %v2349
      %v2351 = vlaneseq
      %v2352 = vshrl.u32 %v2351, 7
      %v2353 = vsub.s32 %v2350, %v2352
      %v2354 = vrot.slane %v2347, %v2353
      %v2356 = vunpack.c.l.s4 1983009808
      %v2357 = vunpack.c.0.s8 %v2356
      %v2358 = vlaneseq
      %v2359 = vshrl.u32 %v2358, 7
      %v2360 = vsub.s32 %v2357, %v2359
      %v2361 = vrot.slane %v2345, %v2360
      %2362 = vrot.lane.b32.xlu0 %v2354, 110
      %v2363 = vpop.permute.xlu0 %2362
      %2364 = vrot.lane.b32.xlu0 %v2361, 110
      %v2365 = vpop.permute.xlu0 %2364
      %v2366 = vrot.slane %v2363, 4
      %v2367 = vrot.slane %v2365, 4
      %v2368 = vsel %vm298, %v2366, %v2367
      %v2369 = vsel %vm361, %v2363, %v2368
      %2371 = vst.msk [vmem:[#allocation2 + $0x30] sm:$0xcc] %vm2161, %v2369
      %v2372 = vld [vmem:[%s246] sm:$0x3f]
      %v2374 = vcombine.high %v2372, %v2372
      %v2376 = vunpack.c.l.s4 1983009808
      %v2377 = vunpack.c.0.s8 %v2376
      %v2378 = vlaneseq
      %v2379 = vshrl.u32 %v2378, 7
      %v2380 = vsub.s32 %v2377, %v2379
      %v2381 = vrot.slane %v2372, %v2380
      %v2383 = vunpack.c.l.s4 1983009808
      %v2384 = vunpack.c.0.s8 %v2383
      %v2385 = vlaneseq
      %v2386 = vshrl.u32 %v2385, 7
      %v2387 = vsub.s32 %v2384, %v2386
      %v2388 = vrot.slane %v2374, %v2387
      %2389 = vrot.lane.b32.xlu0 %v2381, 108
      %v2390 = vpop.permute.xlu0 %2389
      %2391 = vrot.lane.b32.xlu0 %v2388, 108
      %v2392 = vpop.permute.xlu0 %2391
      %v2393 = vrot.slane %v2390, 4
      %v2394 = vrot.slane %v2392, 4
      %v2395 = vsel %vm298, %v2393, %v2394
      %v2396 = vsel %vm421, %v2390, %v2395
      %2398 = vst.msk [vmem:[#allocation2 + $0x3c] sm:$0x33] %vm2142, %v2396
      %v2399 = vld [vmem:[%s246] sm:$0x3f]
      %v2401 = vcombine.low %v2399, %v2399
      %v2403 = vunpack.c.l.s4 1983009808
      %v2404 = vunpack.c.0.s8 %v2403
      %v2405 = vlaneseq
      %v2406 = vshrl.u32 %v2405, 7
      %v2407 = vsub.s32 %v2404, %v2406
      %v2408 = vrot.slane %v2401, %v2407
      %v2410 = vunpack.c.l.s4 1983009808
      %v2411 = vunpack.c.0.s8 %v2410
      %v2412 = vlaneseq
      %v2413 = vshrl.u32 %v2412, 7
      %v2414 = vsub.s32 %v2411, %v2413
      %v2415 = vrot.slane %v2399, %v2414
      %2416 = vrot.lane.b32.xlu0 %v2408, 106
      %v2417 = vpop.permute.xlu0 %2416
      %2418 = vrot.lane.b32.xlu0 %v2415, 106
      %v2419 = vpop.permute.xlu0 %2418
      %v2420 = vrot.slane %v2417, 4
      %v2421 = vrot.slane %v2419, 4
      %v2422 = vsel %vm298, %v2420, %v2421
      %vm2423 = vcmask 867328
      %v2424 = vsel %vm2423, %v2417, %v2422
      %2426 = vst.msk [vmem:[#allocation2 + $0x3c] sm:$0xcc] %vm2161, %v2424
      %v2427 = vld [vmem:[%s246] sm:$0xf]
      %v2430 = vunpack.c.l.s4 1983009808
      %v2431 = vunpack.c.0.s8 %v2430
      %v2432 = vlaneseq
      %v2433 = vshrl.u32 %v2432, 7
      %v2434 = vsub.s32 %v2431, %v2433
      %v2435 = vrot.slane %v2427, %v2434
      %2436 = vrot.lane.b32.xlu0 %v2435, 127
      %v2437 = vpop.permute.xlu0 %2436
      %v2438 = vrot.slane %v2437, 4
      %v2439 = vsel %vm300, %v2437, %v2438
      %2441 = vst.msk [vmem:[#allocation2 + $0x48] sm:$0x33] %vm2142, %v2439
      %v2442 = vld [vmem:[%s246] sm:$0x3f]
      %v2444 = vcombine.low %v2442, %v2442
      %v2446 = vunpack.c.l.s4 1983009808
      %v2447 = vunpack.c.0.s8 %v2446
      %v2448 = vlaneseq
      %v2449 = vshrl.u32 %v2448, 7
      %v2450 = vsub.s32 %v2447, %v2449
      %v2451 = vrot.slane %v2444, %v2450
      %v2453 = vunpack.c.l.s4 1983009808
      %v2454 = vunpack.c.0.s8 %v2453
      %v2455 = vlaneseq
      %v2456 = vshrl.u32 %v2455, 7
      %v2457 = vsub.s32 %v2454, %v2456
      %v2458 = vrot.slane %v2442, %v2457
      %2459 = vrot.lane.b32.xlu0 %v2451, 91
      %v2460 = vpop.permute.xlu0 %2459
      %2461 = vrot.lane.b32.xlu0 %v2458, 91
      %v2462 = vpop.permute.xlu0 %2461
      %v2463 = vrot.slane %v2460, 4
      %v2464 = vrot.slane %v2462, 4
      %v2465 = vsel %vm298, %v2463, %v2464
      %v2466 = vsel %vm481, %v2460, %v2465
      %2468 = vst.msk [vmem:[#allocation2 + $0x48] sm:$0xcc] %vm2161, %v2466
      %v2469 = vld [vmem:[%s246] sm:$0x3f]
      %v2471 = vcombine.high %v2469, %v2469
      %v2473 = vunpack.c.l.s4 1983009808
      %v2474 = vunpack.c.0.s8 %v2473
      %v2475 = vlaneseq
      %v2476 = vshrl.u32 %v2475, 7
      %v2477 = vsub.s32 %v2474, %v2476
      %v2478 = vrot.slane %v2469, %v2477
      %v2480 = vunpack.c.l.s4 1983009808
      %v2481 = vunpack.c.0.s8 %v2480
      %v2482 = vlaneseq
      %v2483 = vshrl.u32 %v2482, 7
      %v2484 = vsub.s32 %v2481, %v2483
      %v2485 = vrot.slane %v2471, %v2484
      %2486 = vrot.lane.b32.xlu0 %v2478, 55
      %v2487 = vpop.permute.xlu0 %2486
      %2488 = vrot.lane.b32.xlu0 %v2485, 55
      %v2489 = vpop.permute.xlu0 %2488
      %v2490 = vrot.slane %v2487, 4
      %v2491 = vrot.slane %v2489, 4
      %v2492 = vsel %vm298, %v2490, %v2491
      %vm2493 = vcmask 449536
      %v2494 = vsel %vm2493, %v2487, %v2492
      %2496 = vst.msk [vmem:[#allocation2 + $0x54] sm:$0x33] %vm2142, %v2494
      %vm2497 = vcmask 1044448
      %vm2498 = vcmask 261124
      %vm2499 = vmor %vm2498, %vm2497
      %2500 = vst.msk [vmem:[#allocation2 + $0x4] sm:$0xff] %vm2499, 0
      %2501 = vst.msk [vmem:[#allocation2 + $0x10] sm:$0xff] %vm2499, 0
      %2502 = vst.msk [vmem:[#allocation2 + $0x1c] sm:$0xff] %vm2499, 0
      %2503 = vst.msk [vmem:[#allocation2 + $0x28] sm:$0xff] %vm2499, 0
      %2504 = vst.msk [vmem:[#allocation2 + $0x34] sm:$0xff] %vm2499, 0
      %2505 = vst.msk [vmem:[#allocation2 + $0x40] sm:$0xff] %vm2499, 0
      %2506 = vst.msk [vmem:[#allocation2 + $0x4c] sm:$0xff] %vm2499, 0
      %vm2507 = vcmask 1042400
      %vm2508 = vcmask 259076
      %vm2509 = vmor %vm2508, %vm2507
      %2510 = vst.msk [vmem:[#allocation2 + $0x58] sm:$0x33] %vm2509, 0
      %s2511 = scalar_lea.vmem %s1, 8
      %v2512 = vld [vmem:[%s2511] sm:$0xf]
      %v2513 = vld [vmem:[#allocation2] sm:$0xff]
      %v2514 = vld [vmem:[#allocation2 + $0x8] sm:$0xf]
      %v2515 = vld [vmem:[#allocation2 + $0xc] sm:$0xff]
      %v2516 = vld [vmem:[#allocation2 + $0x14] sm:$0xf]
      %v2517 = vld [vmem:[#allocation2 + $0x18] sm:$0xff]
      %v2518 = vld [vmem:[#allocation2 + $0x20] sm:$0xf]
      %v2519 = vld [vmem:[#allocation2 + $0x24] sm:$0xff]
      %v2520 = vld [vmem:[#allocation2 + $0x2c] sm:$0xf]
      %v2521 = vld [vmem:[#allocation2 + $0x30] sm:$0xff]
      %v2522 = vld [vmem:[#allocation2 + $0x38] sm:$0xf]
      %v2523 = vld [vmem:[#allocation2 + $0x3c] sm:$0xff]
      %v2524 = vld [vmem:[#allocation2 + $0x44] sm:$0xf]
      %v2525 = vld [vmem:[#allocation2 + $0x48] sm:$0xff]
      %v2526 = vld [vmem:[#allocation2 + $0x50] sm:$0xf]
      %v2527 = vld [vmem:[#allocation2 + $0x54] sm:$0x33]
      %v2528 = vld [vmem:[#allocation2 + $0x5c] sm:$0x3]
      %s2529 = scalar_lea.vmem %s2, 16
      %v2530 = vld [vmem:[%s2529] sm:$0xff]
      %2532 = vset.pattern.permute.xlu0 0
      %2533 = vperm.xlu0 %2532, %v2530
      %v2534 = vpop.permute.xlu0 %2533
      %v2552 = vunpack.c.l.b16 %v2513
      %v2553 = vunpack.c.h.b16 %v2513
      %v2554 = vunpack.c.l.b16 %v2514
      %v2555 = vunpack.c.l.b16 %v2515
      %v2556 = vunpack.c.h.b16 %v2515
      %v2557 = vunpack.c.l.b16 %v2516
      %v2558 = vunpack.c.l.b16 %v2517
      %v2559 = vunpack.c.h.b16 %v2517
      %v2560 = vunpack.c.l.b16 %v2518
      %v2561 = vunpack.c.l.b16 %v2519
      %v2562 = vunpack.c.h.b16 %v2519
      %v2563 = vunpack.c.l.b16 %v2520
      %v2564 = vunpack.c.l.b16 %v2521
      %v2565 = vunpack.c.h.b16 %v2521
      %v2566 = vunpack.c.l.b16 %v2522
      %v2567 = vunpack.c.l.b16 %v2523
      %v2568 = vunpack.c.h.b16 %v2523
      %v2569 = vunpack.c.l.b16 %v2524
      %v2570 = vunpack.c.l.b16 %v2525
      %v2571 = vunpack.c.h.b16 %v2525
      %v2572 = vunpack.c.l.b16 %v2526
      %v2573 = vunpack.c.l.b16 %v2527
      %v2574 = vunpack.c.h.b16 %v2527
      %v2575 = vunpack.c.l.b16 %v2528
      %v2576 = vpack.c.b16 %v2555, %v2552
      %v2577 = vpack.c.b16 %v2556, %v2553
      %v2578 = vpack.c.b16 %v2557, %v2554
      %v2579 = vpack.c.b16 %v2561, %v2558
      %v2580 = vpack.c.b16 %v2562, %v2559
      %v2581 = vpack.c.b16 %v2563, %v2560
      %v2582 = vpack.c.b16 %v2567, %v2564
      %v2583 = vpack.c.b16 %v2568, %v2565
      %v2584 = vpack.c.b16 %v2569, %v2566
      %v2585 = vpack.c.b16 %v2573, %v2570
      %v2586 = vpack.c.b16 %v2574, %v2571
      %v2587 = vpack.c.b16 %v2575, %v2572
      %v2598 = vsel %vm775, %v2512, 0
      %v2601 = vsel %vm779, %v2585, 0
      %v2604 = vsel %vm779, %v2586, 0
      %v2607 = vsel %vm779, %v2587, 0
      %2609 = vmatprep.subr.bf16.mxu0 %v2577
      %2610 = vmatpush1.bf16.msra.mxu0 %v2576
      %2611 = vmatprep.subr.bf16.mxu0 %v2580
      %2612 = vmatpush1.bf16.msra.mxu0 %v2579
      %2613 = vmatprep.subr.bf16.mxu0 %v2583
      %2614 = vmatpush1.bf16.msra.mxu0 %v2582
      %2615 = vmatprep.subr.bf16.mxu0 %v2604
      %2616 = vmatpush1.bf16.msra.mxu0 %v2601
      %2617 = vmatprep.subr.bf16.mxu0 0
      %2618 = vmatpush1.bf16.msra.mxu0 0
      %2619 = vmatprep.subr.bf16.mxu0 0
      %2620 = vmatpush1.bf16.msra.mxu0 0
      %2621 = vmatprep.subr.bf16.mxu0 0
      %2622 = vmatpush1.bf16.msra.mxu0 0
      %2623 = vmatprep.subr.bf16.mxu0 0
      %2624 = vmatpush1.bf16.msra.mxu0 0
      %2625 = vmatprep.subr.bf16.mxu0 0
      %2626 = vmatpush1.bf16.msra.mxu0 0
      %2627 = vmatprep.subr.bf16.mxu0 0
      %2628 = vmatpush1.bf16.msra.mxu0 0
      %2629 = vmatprep.subr.bf16.mxu0 0
      %2630 = vmatpush1.bf16.msra.mxu0 0
      %2631 = vmatprep.subr.bf16.mxu0 0
      %2632 = vmatpush1.bf16.msra.mxu0 0
      %2633 = vmatprep.subr.bf16.mxu0 0
      %2634 = vmatpush1.bf16.msra.mxu0 0
      %2635 = vmatprep.subr.bf16.mxu0 0
      %2636 = vmatpush1.bf16.msra.mxu0 0
      %2637 = vmatprep.subr.bf16.mxu0 0
      %2638 = vmatpush1.bf16.msra.mxu0 0
      %2639 = vmatprep.subr.bf16.mxu0 0
      %2640 = vmatpush1.bf16.msra.mxu0 0
      %2641 = vmatprep.mubr.bf16.mxu0 0
      %2642 = vmatmul.mubr.bf16.gmra.mrb[0].mxu0 %v2598
      %v2643 = vpop.f32.mrb[0].mxu0
      %v2644 = vadd.f32 %v2534, %v2643
      %v2645 = vpop.f32.mrb[0].mxu0
      %v2646 = vadd.f32 %v2534, %v2645
      %v2647 = vpop.f32.mrb[0].mxu0
      %v2648 = vpop.f32.mrb[0].mxu0
      %2649 = vdwg.mxu0
      %2650 = vmatprep.subr.bf16.mxu0 0
      %2651 = vmatpush1.bf16.msra.mxu0 %v2578
      %2652 = vmatprep.subr.bf16.mxu0 0
      %2653 = vmatpush1.bf16.msra.mxu0 %v2581
      %2654 = vmatprep.subr.bf16.mxu0 0
      %2655 = vmatpush1.bf16.msra.mxu0 %v2584
      %2656 = vmatprep.subr.bf16.mxu0 0
      %2657 = vmatpush1.bf16.msra.mxu0 %v2607
      %2658 = vmatprep.subr.bf16.mxu0 0
      %2659 = vmatpush1.bf16.msra.mxu0 0
      %2660 = vmatprep.subr.bf16.mxu0 0
      %2661 = vmatpush1.bf16.msra.mxu0 0
      %2662 = vmatprep.subr.bf16.mxu0 0
      %2663 = vmatpush1.bf16.msra.mxu0 0
      %2664 = vmatprep.subr.bf16.mxu0 0
      %2665 = vmatpush1.bf16.msra.mxu0 0
      %2666 = vmatprep.subr.bf16.mxu0 0
      %2667 = vmatpush1.bf16.msra.mxu0 0
      %2668 = vmatprep.subr.bf16.mxu0 0
      %2669 = vmatpush1.bf16.msra.mxu0 0
      %2670 = vmatprep.subr.bf16.mxu0 0
      %2671 = vmatpush1.bf16.msra.mxu0 0
      %2672 = vmatprep.subr.bf16.mxu0 0
      %2673 = vmatpush1.bf16.msra.mxu0 0
      %2674 = vmatprep.subr.bf16.mxu0 0
      %2675 = vmatpush1.bf16.msra.mxu0 0
      %2676 = vmatprep.subr.bf16.mxu0 0
      %2677 = vmatpush1.bf16.msra.mxu0 0
      %2678 = vmatprep.subr.bf16.mxu0 0
      %2679 = vmatpush1.bf16.msra.mxu0 0
      %2680 = vmatprep.subr.bf16.mxu0 0
      %2681 = vmatpush1.bf16.msra.mxu0 0
      %2682 = vmatprep.mubr.bf16.mxu0 0
      %2683 = vmatmul.mubr.bf16.gmra.mrb[0].mxu0 %v2598
      %v2684 = vpop.f32.mrb[0].mxu0
      %v2685 = vadd.f32 %v2534, %v2684
      %v2686 = vpop.f32.mrb[0].mxu0
      %v2687 = vpop.f32.mrb[0].mxu0
      %v2688 = vpop.f32.mrb[0].mxu0
      %2689 = vdwg.mxu0
      %v2690 = vmax.f32 %v2644, 0.0
      %v2691 = vmax.f32 %v2646, 0.0
      %v2692 = vmax.f32 %v2685, 0.0
      %2693 = vset.pattern.permute.xlu0 1
      %2694 = vperm.xlu0 %2693, %v2530
      %v2695 = vpop.permute.xlu0 %2694
      %v2697 = vmul.f32 %v2690, %v2695
      %v2698 = vmul.f32 %v2691, %v2695
      %v2699 = vmul.f32 %v2692, %v2695
      %2700 = vset.pattern.permute.xlu0 2
      %2701 = vperm.xlu0 %2700, %v2530
      %v2702 = vpop.permute.xlu0 %2701
      %v2704 = vadd.f32 %v2697, %v2702
      %v2705 = vadd.f32 %v2698, %v2702
      %v2706 = vadd.f32 %v2699, %v2702
      %v2707 = vmax.f32 %v2704, 0.0
      %v2708 = vmax.f32 %v2705, 0.0
      %v2709 = vmax.f32 %v2706, 0.0
      %v2710 = vpack.c.bf16 %v2707, %v2707
      %v2711 = vpack.c.bf16 %v2708, %v2708
      %v2712 = vpack.c.bf16 %v2709, %v2709
      %s2713 = scalar_lea.vmem %s3, 576
      %v2714 = vld [vmem:[%s2713] sm:$0xff]
      %v2715 = vld [vmem:[%s2713 + $0x8] sm:$0xff]
      %v2716 = vld [vmem:[%s2713 + $0x10] sm:$0xff]
      %v2717 = vld [vmem:[%s2713 + $0x18] sm:$0xff]
      %v2718 = vld [vmem:[%s2713 + $0x20] sm:$0xff]
      %v2719 = vld [vmem:[%s2713 + $0x28] sm:$0xff]
      %v2720 = vld [vmem:[%s2713 + $0x30] sm:$0xff]
      %v2721 = vld [vmem:[%s2713 + $0x38] sm:$0xff]
      %v2722 = vld [vmem:[%s2713 + $0x40] sm:$0xff]
      %v2723 = vld [vmem:[%s2713 + $0x48] sm:$0xff]
      %v2724 = vld [vmem:[%s2713 + $0x50] sm:$0xff]
      %v2725 = vld [vmem:[%s2713 + $0x58] sm:$0xff]
      %v2726 = vld [vmem:[%s2713 + $0x60] sm:$0xff]
      %v2727 = vld [vmem:[%s2713 + $0x68] sm:$0xff]
      %v2728 = vld [vmem:[%s2713 + $0x70] sm:$0xff]
      %v2729 = vld [vmem:[%s2713 + $0x78] sm:$0xff]
      %v2730 = vld [vmem:[%s2713 + $0x80] sm:$0xff]
      %v2731 = vld [vmem:[%s2713 + $0x88] sm:$0xff]
      %v2732 = vld [vmem:[%s2713 + $0x90] sm:$0xff]
      %v2733 = vld [vmem:[%s2713 + $0x98] sm:$0xff]
      %v2734 = vld [vmem:[%s2713 + $0xa0] sm:$0xff]
      %v2735 = vld [vmem:[%s2713 + $0xa8] sm:$0xff]
      %v2736 = vld [vmem:[%s2713 + $0xb0] sm:$0xff]
      %v2737 = vld [vmem:[%s2713 + $0xb8] sm:$0xff]
      %v2738 = vld [vmem:[%s2713 + $0xc0] sm:$0xff]
      %v2739 = vld [vmem:[%s2713 + $0xc8] sm:$0xff]
      %v2740 = vld [vmem:[%s2713 + $0xd0] sm:$0xff]
      %v2741 = vld [vmem:[%s2713 + $0xd8] sm:$0xff]
      %v2742 = vld [vmem:[%s2713 + $0xe0] sm:$0xff]
      %v2743 = vld [vmem:[%s2713 + $0xe8] sm:$0xff]
      %v2744 = vld [vmem:[%s2713 + $0xf0] sm:$0xff]
      %v2745 = vld [vmem:[%s2713 + $0xf8] sm:$0xff]
      %v2746 = vld [vmem:[%s2713 + $0x100] sm:$0xff]
      %v2747 = vld [vmem:[%s2713 + $0x108] sm:$0xff]
      %v2748 = vld [vmem:[%s2713 + $0x110] sm:$0xff]
      %v2749 = vld [vmem:[%s2713 + $0x118] sm:$0xff]
      %v2786 = vunpack.c.l.b16 %v2714
      %v2787 = vunpack.c.h.b16 %v2714
      %v2788 = vunpack.c.l.b16 %v2715
      %v2789 = vunpack.c.h.b16 %v2715
      %v2790 = vunpack.c.l.b16 %v2716
      %v2791 = vunpack.c.h.b16 %v2716
      %v2792 = vunpack.c.l.b16 %v2717
      %v2793 = vunpack.c.h.b16 %v2717
      %v2794 = vunpack.c.l.b16 %v2718
      %v2795 = vunpack.c.h.b16 %v2718
      %v2796 = vunpack.c.l.b16 %v2719
      %v2797 = vunpack.c.h.b16 %v2719
      %v2798 = vunpack.c.l.b16 %v2720
      %v2799 = vunpack.c.h.b16 %v2720
      %v2800 = vunpack.c.l.b16 %v2721
      %v2801 = vunpack.c.h.b16 %v2721
      %v2802 = vunpack.c.l.b16 %v2722
      %v2803 = vunpack.c.h.b16 %v2722
      %v2804 = vunpack.c.l.b16 %v2723
      %v2805 = vunpack.c.h.b16 %v2723
      %v2806 = vunpack.c.l.b16 %v2724
      %v2807 = vunpack.c.h.b16 %v2724
      %v2808 = vunpack.c.l.b16 %v2725
      %v2809 = vunpack.c.h.b16 %v2725
      %v2810 = vunpack.c.l.b16 %v2726
      %v2811 = vunpack.c.h.b16 %v2726
      %v2812 = vunpack.c.l.b16 %v2727
      %v2813 = vunpack.c.h.b16 %v2727
      %v2814 = vunpack.c.l.b16 %v2728
      %v2815 = vunpack.c.h.b16 %v2728
      %v2816 = vunpack.c.l.b16 %v2729
      %v2817 = vunpack.c.h.b16 %v2729
      %v2818 = vunpack.c.l.b16 %v2730
      %v2819 = vunpack.c.h.b16 %v2730
      %v2820 = vunpack.c.l.b16 %v2731
      %v2821 = vunpack.c.h.b16 %v2731
      %v2822 = vunpack.c.l.b16 %v2732
      %v2823 = vunpack.c.h.b16 %v2732
      %v2824 = vunpack.c.l.b16 %v2733
      %v2825 = vunpack.c.h.b16 %v2733
      %v2826 = vunpack.c.l.b16 %v2734
      %v2827 = vunpack.c.h.b16 %v2734
      %v2828 = vunpack.c.l.b16 %v2735
      %v2829 = vunpack.c.h.b16 %v2735
      %v2830 = vunpack.c.l.b16 %v2736
      %v2831 = vunpack.c.h.b16 %v2736
      %v2832 = vunpack.c.l.b16 %v2737
      %v2833 = vunpack.c.h.b16 %v2737
      %v2834 = vunpack.c.l.b16 %v2738
      %v2835 = vunpack.c.h.b16 %v2738
      %v2836 = vunpack.c.l.b16 %v2739
      %v2837 = vunpack.c.h.b16 %v2739
      %v2838 = vunpack.c.l.b16 %v2740
      %v2839 = vunpack.c.h.b16 %v2740
      %v2840 = vunpack.c.l.b16 %v2741
      %v2841 = vunpack.c.h.b16 %v2741
      %v2842 = vunpack.c.l.b16 %v2742
      %v2843 = vunpack.c.h.b16 %v2742
      %v2844 = vunpack.c.l.b16 %v2743
      %v2845 = vunpack.c.h.b16 %v2743
      %v2846 = vunpack.c.l.b16 %v2744
      %v2847 = vunpack.c.h.b16 %v2744
      %v2848 = vunpack.c.l.b16 %v2745
      %v2849 = vunpack.c.h.b16 %v2745
      %v2850 = vunpack.c.l.b16 %v2746
      %v2851 = vunpack.c.h.b16 %v2746
      %v2852 = vunpack.c.l.b16 %v2747
      %v2853 = vunpack.c.h.b16 %v2747
      %v2854 = vunpack.c.l.b16 %v2748
      %v2855 = vunpack.c.h.b16 %v2748
      %v2856 = vunpack.c.l.b16 %v2749
      %v2857 = vunpack.c.h.b16 %v2749
      %v2858 = vpack.c.b16 %v2788, %v2786
      %v2859 = vpack.c.b16 %v2789, %v2787
      %v2860 = vpack.c.b16 %v2792, %v2790
      %v2861 = vpack.c.b16 %v2793, %v2791
      %v2862 = vpack.c.b16 %v2796, %v2794
      %v2863 = vpack.c.b16 %v2797, %v2795
      %v2864 = vpack.c.b16 %v2800, %v2798
      %v2865 = vpack.c.b16 %v2801, %v2799
      %v2866 = vpack.c.b16 %v2804, %v2802
      %v2867 = vpack.c.b16 %v2805, %v2803
      %v2868 = vpack.c.b16 %v2808, %v2806
      %v2869 = vpack.c.b16 %v2809, %v2807
      %v2870 = vpack.c.b16 %v2812, %v2810
      %v2871 = vpack.c.b16 %v2813, %v2811
      %v2872 = vpack.c.b16 %v2816, %v2814
      %v2873 = vpack.c.b16 %v2817, %v2815
      %v2874 = vpack.c.b16 %v2820, %v2818
      %v2875 = vpack.c.b16 %v2821, %v2819
      %v2876 = vpack.c.b16 %v2824, %v2822
      %v2877 = vpack.c.b16 %v2825, %v2823
      %v2878 = vpack.c.b16 %v2828, %v2826
      %v2879 = vpack.c.b16 %v2829, %v2827
      %v2880 = vpack.c.b16 %v2832, %v2830
      %v2881 = vpack.c.b16 %v2833, %v2831
      %v2882 = vpack.c.b16 %v2836, %v2834
      %v2883 = vpack.c.b16 %v2837, %v2835
      %v2884 = vpack.c.b16 %v2840, %v2838
      %v2885 = vpack.c.b16 %v2841, %v2839
      %v2886 = vpack.c.b16 %v2844, %v2842
      %v2887 = vpack.c.b16 %v2845, %v2843
      %v2888 = vpack.c.b16 %v2848, %v2846
      %v2889 = vpack.c.b16 %v2849, %v2847
      %v2890 = vpack.c.b16 %v2852, %v2850
      %v2891 = vpack.c.b16 %v2853, %v2851
      %v2892 = vpack.c.b16 %v2856, %v2854
      %v2893 = vpack.c.b16 %v2857, %v2855
      %v2931 = vsel %vm1109, %v2712, 0
      %2933 = vmatprep.subr.bf16.mxu0 %v2859
      %2934 = vmatpush1.bf16.msra.mxu0 %v2858
      %2935 = vmatprep.subr.bf16.mxu0 %v2861
      %2936 = vmatpush1.bf16.msra.mxu0 %v2860
      %2937 = vmatprep.subr.bf16.mxu0 %v2863
      %2938 = vmatpush1.bf16.msra.mxu0 %v2862
      %2939 = vmatprep.subr.bf16.mxu0 %v2865
      %2940 = vmatpush1.bf16.msra.mxu0 %v2864
      %2941 = vmatprep.subr.bf16.mxu0 %v2867
      %2942 = vmatpush1.bf16.msra.mxu0 %v2866
      %2943 = vmatprep.subr.bf16.mxu0 %v2869
      %2944 = vmatpush1.bf16.msra.mxu0 %v2868
      %2945 = vmatprep.subr.bf16.mxu0 %v2871
      %2946 = vmatpush1.bf16.msra.mxu0 %v2870
      %2947 = vmatprep.subr.bf16.mxu0 %v2873
      %2948 = vmatpush1.bf16.msra.mxu0 %v2872
      %2949 = vmatprep.subr.bf16.mxu0 %v2875
      %2950 = vmatpush1.bf16.msra.mxu0 %v2874
      %2951 = vmatprep.subr.bf16.mxu0 %v2877
      %2952 = vmatpush1.bf16.msra.mxu0 %v2876
      %2953 = vmatprep.subr.bf16.mxu0 %v2879
      %2954 = vmatpush1.bf16.msra.mxu0 %v2878
      %2955 = vmatprep.subr.bf16.mxu0 %v2881
      %2956 = vmatpush1.bf16.msra.mxu0 %v2880
      %2957 = vmatprep.subr.bf16.mxu0 %v2883
      %2958 = vmatpush1.bf16.msra.mxu0 %v2882
      %2959 = vmatprep.subr.bf16.mxu0 %v2885
      %2960 = vmatpush1.bf16.msra.mxu0 %v2884
      %2961 = vmatprep.subr.bf16.mxu0 %v2887
      %2962 = vmatpush1.bf16.msra.mxu0 %v2886
      %2963 = vmatprep.subr.bf16.mxu0 %v2889
      %2964 = vmatpush1.bf16.msra.mxu0 %v2888
      %2965 = vmatprep.mubr.bf16.mxu0 %v2711
      %2966 = vmatmul.mubr.bf16.gmra.mrb[0].mxu0 %v2710
      %v2967 = vpop.f32.mrb[0].mxu0
      %v2968 = vadd.f32 0.0, %v2967
      %v2969 = vpop.f32.mrb[0].mxu0
      %v2970 = vadd.f32 0.0, %v2969
      %v2971 = vpop.f32.mrb[0].mxu0
      %v2972 = vpop.f32.mrb[0].mxu0
      %2973 = vdwg.mxu0
      %2974 = vmatprep.subr.bf16.mxu0 %v2891
      %2975 = vmatpush1.bf16.msra.mxu0 %v2890
      %2976 = vmatprep.subr.bf16.mxu0 %v2893
      %2977 = vmatpush1.bf16.msra.mxu0 %v2892
      %2978 = vmatprep.subr.bf16.mxu0 0
      %2979 = vmatpush1.bf16.msra.mxu0 0
      %2980 = vmatprep.subr.bf16.mxu0 0
      %2981 = vmatpush1.bf16.msra.mxu0 0
      %2982 = vmatprep.subr.bf16.mxu0 0
      %2983 = vmatpush1.bf16.msra.mxu0 0
      %2984 = vmatprep.subr.bf16.mxu0 0
      %2985 = vmatpush1.bf16.msra.mxu0 0
      %2986 = vmatprep.subr.bf16.mxu0 0
      %2987 = vmatpush1.bf16.msra.mxu0 0
      %2988 = vmatprep.subr.bf16.mxu0 0
      %2989 = vmatpush1.bf16.msra.mxu0 0
      %2990 = vmatprep.subr.bf16.mxu0 0
      %2991 = vmatpush1.bf16.msra.mxu0 0
      %2992 = vmatprep.subr.bf16.mxu0 0
      %2993 = vmatpush1.bf16.msra.mxu0 0
      %2994 = vmatprep.subr.bf16.mxu0 0
      %2995 = vmatpush1.bf16.msra.mxu0 0
      %2996 = vmatprep.subr.bf16.mxu0 0
      %2997 = vmatpush1.bf16.msra.mxu0 0
      %2998 = vmatprep.subr.bf16.mxu0 0
      %2999 = vmatpush1.bf16.msra.mxu0 0
      %3000 = vmatprep.subr.bf16.mxu0 0
      %3001 = vmatpush1.bf16.msra.mxu0 0
      %3002 = vmatprep.subr.bf16.mxu0 0
      %3003 = vmatpush1.bf16.msra.mxu0 0
      %3004 = vmatprep.subr.bf16.mxu0 0
      %3005 = vmatpush1.bf16.msra.mxu0 0
      %3006 = vmatprep.mubr.bf16.mxu0 0
      %3007 = vmatmul.mubr.bf16.gmra.mrb[0].mxu0 %v2931
      %v3008 = vpop.f32.mrb[0].mxu0
      %v3009 = vadd.f32 %v2968, %v3008
      %v3010 = vpop.f32.mrb[0].mxu0
      %v3011 = vadd.f32 %v2970, %v3010
      %v3012 = vpop.f32.mrb[0].mxu0
      %v3013 = vpop.f32.mrb[0].mxu0
      %3014 = vdwg.mxu0
      %3015 = vst [vmem:[%s251 + $0x20] sm:$0xff] %v3009
      %3016 = vst [vmem:[%s251 + $0x28] sm:$0xff] %v3011
      %v3017 = vld [vmem:[%s246] sm:$0xf]
      %v3020 = vunpack.c.l.s4 1983009808
      %v3021 = vunpack.c.0.s8 %v3020
      %v3022 = vlaneseq
      %v3023 = vshrl.u32 %v3022, 7
      %v3024 = vsub.s32 %v3021, %v3023
      %v3025 = vrot.slane %v3017, %v3024
      %vm3027 = vcmask 717828
      %vm3028 = vmor %vm3027, %vm2140
      %3029 = vst.msk [vmem:[#allocation2] sm:$0x33] %vm3028, %v3025
      %v3030 = vld [vmem:[%s246] sm:$0xf]
      %v3032 = vcombine.low %v3030, %v3030
      %v3034 = vunpack.c.l.s4 1983009808
      %v3035 = vunpack.c.0.s8 %v3034
      %v3036 = vlaneseq
      %v3037 = vshrl.u32 %v3036, 7
      %v3038 = vsub.s32 %v3035, %v3037
      %v3039 = vrot.slane %v3032, %v3038
      %3040 = vrot.lane.b32.xlu0 %v3039, 125
      %v3041 = vpop.permute.xlu0 %3040
      %v3042 = vrot.slane %v3041, 4
      %vm3043 = vcmask 1022976
      %v3044 = vsel %vm3043, %v3041, %v3042
      %vm3046 = vcmask 719878
      %vm3047 = vmor %vm3046, %vm2159
      %3048 = vst.msk [vmem:[#allocation2] sm:$0xcc] %vm3047, %v3044
      %v3049 = vld [vmem:[%s246] sm:$0xf]
      %v3052 = vunpack.c.l.s4 1983009808
      %v3053 = vunpack.c.0.s8 %v3052
      %v3054 = vlaneseq
      %v3055 = vshrl.u32 %v3054, 7
      %v3056 = vsub.s32 %v3053, %v3055
      %v3057 = vrot.slane %v3049, %v3056
      %3058 = vrot.lane.b32.xlu0 %v3057, 122
      %v3059 = vpop.permute.xlu0 %3058
      %v3060 = vrot.slane %v3059, 4
      %vm3061 = vcmask 998400
      %v3062 = vsel %vm3061, %v3059, %v3060
      %3064 = vst.msk [vmem:[#allocation2 + $0xc] sm:$0x33] %vm3028, %v3062
      %v3065 = vld [vmem:[%s246] sm:$0x3f]
      %v3067 = vcombine.low %v3065, %v3065
      %v3069 = vunpack.c.l.s4 1983009808
      %v3070 = vunpack.c.0.s8 %v3069
      %v3071 = vlaneseq
      %v3072 = vshrl.u32 %v3071, 7
      %v3073 = vsub.s32 %v3070, %v3072
      %v3074 = vrot.slane %v3067, %v3073
      %v3076 = vunpack.c.l.s4 1983009808
      %v3077 = vunpack.c.0.s8 %v3076
      %v3078 = vlaneseq
      %v3079 = vshrl.u32 %v3078, 7
      %v3080 = vsub.s32 %v3077, %v3079
      %v3081 = vrot.slane %v3065, %v3080
      %3082 = vrot.lane.b32.xlu0 %v3074, 74
      %v3083 = vpop.permute.xlu0 %3082
      %3084 = vrot.lane.b32.xlu0 %v3081, 74
      %v3085 = vpop.permute.xlu0 %3084
      %v3086 = vrot.slane %v3083, 4
      %v3087 = vrot.slane %v3085, 4
      %v3088 = vsel %vm298, %v3086, %v3087
      %vm3089 = vcmask 605184
      %v3090 = vsel %vm3089, %v3083, %v3088
      %3092 = vst.msk [vmem:[#allocation2 + $0xc] sm:$0xcc] %vm3047, %v3090
      %v3093 = vld [vmem:[%s246] sm:$0x3f]
      %v3095 = vcombine.high %v3093, %v3093
      %v3097 = vunpack.c.l.s4 1983009808
      %v3098 = vunpack.c.0.s8 %v3097
      %v3099 = vlaneseq
      %v3100 = vshrl.u32 %v3099, 7
      %v3101 = vsub.s32 %v3098, %v3100
      %v3102 = vrot.slane %v3093, %v3101
      %v3104 = vunpack.c.l.s4 1983009808
      %v3105 = vunpack.c.0.s8 %v3104
      %v3106 = vlaneseq
      %v3107 = vshrl.u32 %v3106, 7
      %v3108 = vsub.s32 %v3105, %v3107
      %v3109 = vrot.slane %v3095, %v3108
      %3110 = vrot.lane.b32.xlu0 %v3102, 71
      %v3111 = vpop.permute.xlu0 %3110
      %3112 = vrot.lane.b32.xlu0 %v3109, 71
      %v3113 = vpop.permute.xlu0 %3112
      %v3114 = vrot.slane %v3111, 4
      %v3115 = vrot.slane %v3113, 4
      %v3116 = vsel %vm298, %v3114, %v3115
      %vm3117 = vcmask 580608
      %v3118 = vsel %vm3117, %v3111, %v3116
      %3120 = vst.msk [vmem:[#allocation2 + $0x18] sm:$0x33] %vm3028, %v3118
      %v3121 = vld [vmem:[%s246] sm:$0x3f]
      %v3123 = vcombine.low %v3121, %v3121
      %v3125 = vunpack.c.l.s4 1983009808
      %v3126 = vunpack.c.0.s8 %v3125
      %v3127 = vlaneseq
      %v3128 = vshrl.u32 %v3127, 7
      %v3129 = vsub.s32 %v3126, %v3128
      %v3130 = vrot.slane %v3123, %v3129
      %v3132 = vunpack.c.l.s4 1983009808
      %v3133 = vunpack.c.0.s8 %v3132
      %v3134 = vlaneseq
      %v3135 = vshrl.u32 %v3134, 7
      %v3136 = vsub.s32 %v3133, %v3135
      %v3137 = vrot.slane %v3121, %v3136
      %3138 = vrot.lane.b32.xlu0 %v3130, 68
      %v3139 = vpop.permute.xlu0 %3138
      %3140 = vrot.lane.b32.xlu0 %v3137, 68
      %v3141 = vpop.permute.xlu0 %3140
      %v3142 = vrot.slane %v3139, 4
      %v3143 = vrot.slane %v3141, 4
      %v3144 = vsel %vm298, %v3142, %v3143
      %vm3145 = vcmask 556032
      %v3146 = vsel %vm3145, %v3139, %v3144
      %3148 = vst.msk [vmem:[#allocation2 + $0x18] sm:$0xcc] %vm3047, %v3146
      %v3149 = vld [vmem:[%s246] sm:$0x3f]
      %v3151 = vcombine.high %v3149, %v3149
      %v3153 = vunpack.c.l.s4 1983009808
      %v3154 = vunpack.c.0.s8 %v3153
      %v3155 = vlaneseq
      %v3156 = vshrl.u32 %v3155, 7
      %v3157 = vsub.s32 %v3154, %v3156
      %v3158 = vrot.slane %v3149, %v3157
      %v3160 = vunpack.c.l.s4 1983009808
      %v3161 = vunpack.c.0.s8 %v3160
      %v3162 = vlaneseq
      %v3163 = vshrl.u32 %v3162, 7
      %v3164 = vsub.s32 %v3161, %v3163
      %v3165 = vrot.slane %v3151, %v3164
      %3166 = vrot.lane.b32.xlu0 %v3158, 20
      %v3167 = vpop.permute.xlu0 %3166
      %3168 = vrot.lane.b32.xlu0 %v3165, 20
      %v3169 = vpop.permute.xlu0 %3168
      %v3170 = vrot.slane %v3167, 4
      %v3171 = vrot.slane %v3169, 4
      %v3172 = vsel %vm298, %v3170, %v3171
      %vm3173 = vcmask 162816
      %v3174 = vsel %vm3173, %v3167, %v3172
      %3176 = vst.msk [vmem:[#allocation2 + $0x24] sm:$0x33] %vm3028, %v3174
      %v3177 = vld [vmem:[%s246] sm:$0x3f]
      %v3179 = vcombine.low %v3177, %v3177
      %v3181 = vunpack.c.l.s4 1983009808
      %v3182 = vunpack.c.0.s8 %v3181
      %v3183 = vlaneseq
      %v3184 = vshrl.u32 %v3183, 7
      %v3185 = vsub.s32 %v3182, %v3184
      %v3186 = vrot.slane %v3179, %v3185
      %v3188 = vunpack.c.l.s4 1983009808
      %v3189 = vunpack.c.0.s8 %v3188
      %v3190 = vlaneseq
      %v3191 = vshrl.u32 %v3190, 7
      %v3192 = vsub.s32 %v3189, %v3191
      %v3193 = vrot.slane %v3177, %v3192
      %3194 = vrot.lane.b32.xlu0 %v3186, 17
      %v3195 = vpop.permute.xlu0 %3194
      %3196 = vrot.lane.b32.xlu0 %v3193, 17
      %v3197 = vpop.permute.xlu0 %3196
      %v3198 = vrot.slane %v3195, 4
      %v3199 = vrot.slane %v3197, 4
      %v3200 = vsel %vm298, %v3198, %v3199
      %vm3201 = vcmask 138240
      %v3202 = vsel %vm3201, %v3195, %v3200
      %3204 = vst.msk [vmem:[#allocation2 + $0x24] sm:$0xcc] %vm3047, %v3202
      %v3205 = vld [vmem:[%s246] sm:$0x3f]
      %v3207 = vcombine.high %v3205, %v3205
      %v3209 = vunpack.c.l.s4 1983009808
      %v3210 = vunpack.c.0.s8 %v3209
      %v3211 = vlaneseq
      %v3212 = vshrl.u32 %v3211, 7
      %v3213 = vsub.s32 %v3210, %v3212
      %v3214 = vrot.slane %v3205, %v3213
      %v3216 = vunpack.c.l.s4 1983009808
      %v3217 = vunpack.c.0.s8 %v3216
      %v3218 = vlaneseq
      %v3219 = vshrl.u32 %v3218, 7
      %v3220 = vsub.s32 %v3217, %v3219
      %v3221 = vrot.slane %v3207, %v3220
      %3222 = vrot.lane.b32.xlu0 %v3214, 14
      %v3223 = vpop.permute.xlu0 %3222
      %3224 = vrot.lane.b32.xlu0 %v3221, 14
      %v3225 = vpop.permute.xlu0 %3224
      %v3226 = vrot.slane %v3223, 4
      %v3227 = vrot.slane %v3225, 4
      %v3228 = vsel %vm298, %v3226, %v3227
      %vm3229 = vcmask 113664
      %v3230 = vsel %vm3229, %v3223, %v3228
      %3232 = vst.msk [vmem:[#allocation2 + $0x30] sm:$0x33] %vm3028, %v3230
      %v3233 = vld [vmem:[%s246] sm:$0xf]
      %v3235 = vcombine.low %v3233, %v3233
      %v3237 = vunpack.c.l.s4 1983009808
      %v3238 = vunpack.c.0.s8 %v3237
      %v3239 = vlaneseq
      %v3240 = vshrl.u32 %v3239, 7
      %v3241 = vsub.s32 %v3238, %v3240
      %v3242 = vrot.slane %v3235, %v3241
      %3243 = vrot.lane.b32.xlu0 %v3242, 110
      %v3244 = vpop.permute.xlu0 %3243
      %v3245 = vrot.slane %v3244, 4
      %v3246 = vsel %vm361, %v3244, %v3245
      %3248 = vst.msk [vmem:[#allocation2 + $0x30] sm:$0xcc] %vm3047, %v3246
      %v3249 = vld [vmem:[%s246] sm:$0xf]
      %v3252 = vunpack.c.l.s4 1983009808
      %v3253 = vunpack.c.0.s8 %v3252
      %v3254 = vlaneseq
      %v3255 = vshrl.u32 %v3254, 7
      %v3256 = vsub.s32 %v3253, %v3255
      %v3257 = vrot.slane %v3249, %v3256
      %3258 = vrot.lane.b32.xlu0 %v3257, 107
      %v3259 = vpop.permute.xlu0 %3258
      %v3260 = vrot.slane %v3259, 4
      %vm3261 = vcmask 875520
      %v3262 = vsel %vm3261, %v3259, %v3260
      %3264 = vst.msk [vmem:[#allocation2 + $0x3c] sm:$0x33] %vm3028, %v3262
      %v3265 = vld [vmem:[%s246] sm:$0xf]
      %v3267 = vcombine.low %v3265, %v3265
      %v3269 = vunpack.c.l.s4 1983009808
      %v3270 = vunpack.c.0.s8 %v3269
      %v3271 = vlaneseq
      %v3272 = vshrl.u32 %v3271, 7
      %v3273 = vsub.s32 %v3270, %v3272
      %v3274 = vrot.slane %v3267, %v3273
      %3275 = vrot.lane.b32.xlu0 %v3274, 104
      %v3276 = vpop.permute.xlu0 %3275
      %v3277 = vrot.slane %v3276, 4
      %vm3278 = vcmask 850944
      %v3279 = vsel %vm3278, %v3276, %v3277
      %3281 = vst.msk [vmem:[#allocation2 + $0x3c] sm:$0xcc] %vm3047, %v3279
      %v3282 = vld [vmem:[%s246] sm:$0xf]
      %v3285 = vunpack.c.l.s4 1983009808
      %v3286 = vunpack.c.0.s8 %v3285
      %v3287 = vlaneseq
      %v3288 = vshrl.u32 %v3287, 7
      %v3289 = vsub.s32 %v3286, %v3288
      %v3290 = vrot.slane %v3282, %v3289
      %3291 = vrot.lane.b32.xlu0 %v3290, 127
      %v3292 = vpop.permute.xlu0 %3291
      %v3293 = vrot.slane %v3292, 4
      %v3294 = vsel %vm300, %v3292, %v3293
      %3296 = vst.msk [vmem:[#allocation2 + $0x48] sm:$0x33] %vm3028, %v3294
      %v3297 = vld [vmem:[%s246] sm:$0x3f]
      %v3299 = vcombine.low %v3297, %v3297
      %v3301 = vunpack.c.l.s4 1983009808
      %v3302 = vunpack.c.0.s8 %v3301
      %v3303 = vlaneseq
      %v3304 = vshrl.u32 %v3303, 7
      %v3305 = vsub.s32 %v3302, %v3304
      %v3306 = vrot.slane %v3299, %v3305
      %v3308 = vunpack.c.l.s4 1983009808
      %v3309 = vunpack.c.0.s8 %v3308
      %v3310 = vlaneseq
      %v3311 = vshrl.u32 %v3310, 7
      %v3312 = vsub.s32 %v3309, %v3311
      %v3313 = vrot.slane %v3297, %v3312
      %3314 = vrot.lane.b32.xlu0 %v3306, 73
      %v3315 = vpop.permute.xlu0 %3314
      %3316 = vrot.lane.b32.xlu0 %v3313, 73
      %v3317 = vpop.permute.xlu0 %3316
      %v3318 = vrot.slane %v3315, 4
      %v3319 = vrot.slane %v3317, 4
      %v3320 = vsel %vm298, %v3318, %v3319
      %vm3321 = vcmask 596992
      %v3322 = vsel %vm3321, %v3315, %v3320
      %3324 = vst.msk [vmem:[#allocation2 + $0x48] sm:$0xcc] %vm3047, %v3322
      %v3325 = vld [vmem:[%s246] sm:$0x3f]
      %v3327 = vcombine.high %v3325, %v3325
      %v3329 = vunpack.c.l.s4 1983009808
      %v3330 = vunpack.c.0.s8 %v3329
      %v3331 = vlaneseq
      %v3332 = vshrl.u32 %v3331, 7
      %v3333 = vsub.s32 %v3330, %v3332
      %v3334 = vrot.slane %v3325, %v3333
      %v3336 = vunpack.c.l.s4 1983009808
      %v3337 = vunpack.c.0.s8 %v3336
      %v3338 = vlaneseq
      %v3339 = vshrl.u32 %v3338, 7
      %v3340 = vsub.s32 %v3337, %v3339
      %v3341 = vrot.slane %v3327, %v3340
      %3342 = vrot.lane.b32.xlu0 %v3334, 19
      %v3343 = vpop.permute.xlu0 %3342
      %3344 = vrot.lane.b32.xlu0 %v3341, 19
      %v3345 = vpop.permute.xlu0 %3344
      %v3346 = vrot.slane %v3343, 4
      %v3347 = vrot.slane %v3345, 4
      %v3348 = vsel %vm298, %v3346, %v3347
      %vm3349 = vcmask 154624
      %v3350 = vsel %vm3349, %v3343, %v3348
      %3352 = vst.msk [vmem:[#allocation2 + $0x54] sm:$0x33] %vm3028, %v3350
      %vm3353 = vcmask 1044160
      %vm3354 = vmor %vm2498, %vm3353
      %3355 = vst.msk [vmem:[#allocation2 + $0x4] sm:$0xff] %vm3354, 0
      %3356 = vst.msk [vmem:[#allocation2 + $0x10] sm:$0xff] %vm3354, 0
      %3357 = vst.msk [vmem:[#allocation2 + $0x1c] sm:$0xff] %vm3354, 0
      %3358 = vst.msk [vmem:[#allocation2 + $0x28] sm:$0xff] %vm3354, 0
      %3359 = vst.msk [vmem:[#allocation2 + $0x34] sm:$0xff] %vm3354, 0
      %3360 = vst.msk [vmem:[#allocation2 + $0x40] sm:$0xff] %vm3354, 0
      %3361 = vst.msk [vmem:[#allocation2 + $0x4c] sm:$0xff] %vm3354, 0
      %vm3362 = vcmask 1042112
      %vm3363 = vmor %vm2508, %vm3362
      %3364 = vst.msk [vmem:[#allocation2 + $0x58] sm:$0x33] %vm3363, 0
      %s3365 = scalar_lea.vmem %s1, 12
      %v3366 = vld [vmem:[%s3365] sm:$0xf]
      %v3367 = vld [vmem:[#allocation2] sm:$0xff]
      %v3368 = vld [vmem:[#allocation2 + $0x8] sm:$0xf]
      %v3369 = vld [vmem:[#allocation2 + $0xc] sm:$0xff]
      %v3370 = vld [vmem:[#allocation2 + $0x14] sm:$0xf]
      %v3371 = vld [vmem:[#allocation2 + $0x18] sm:$0xff]
      %v3372 = vld [vmem:[#allocation2 + $0x20] sm:$0xf]
      %v3373 = vld [vmem:[#allocation2 + $0x24] sm:$0xff]
      %v3374 = vld [vmem:[#allocation2 + $0x2c] sm:$0xf]
      %v3375 = vld [vmem:[#allocation2 + $0x30] sm:$0xff]
      %v3376 = vld [vmem:[#allocation2 + $0x38] sm:$0xf]
      %v3377 = vld [vmem:[#allocation2 + $0x3c] sm:$0xff]
      %v3378 = vld [vmem:[#allocation2 + $0x44] sm:$0xf]
      %v3379 = vld [vmem:[#allocation2 + $0x48] sm:$0xff]
      %v3380 = vld [vmem:[#allocation2 + $0x50] sm:$0xf]
      %v3381 = vld [vmem:[#allocation2 + $0x54] sm:$0x33]
      %v3382 = vld [vmem:[#allocation2 + $0x5c] sm:$0x3]
      %s3383 = scalar_lea.vmem %s2, 24
      %v3384 = vld [vmem:[%s3383] sm:$0xff]
      %3386 = vset.pattern.permute.xlu0 0
      %3387 = vperm.xlu0 %3386, %v3384
      %v3388 = vpop.permute.xlu0 %3387
      %v3406 = vunpack.c.l.b16 %v3367
      %v3407 = vunpack.c.h.b16 %v3367
      %v3408 = vunpack.c.l.b16 %v3368
      %v3409 = vunpack.c.l.b16 %v3369
      %v3410 = vunpack.c.h.b16 %v3369
      %v3411 = vunpack.c.l.b16 %v3370
      %v3412 = vunpack.c.l.b16 %v3371
      %v3413 = vunpack.c.h.b16 %v3371
      %v3414 = vunpack.c.l.b16 %v3372
      %v3415 = vunpack.c.l.b16 %v3373
      %v3416 = vunpack.c.h.b16 %v3373
      %v3417 = vunpack.c.l.b16 %v3374
      %v3418 = vunpack.c.l.b16 %v3375
      %v3419 = vunpack.c.h.b16 %v3375
      %v3420 = vunpack.c.l.b16 %v3376
      %v3421 = vunpack.c.l.b16 %v3377
      %v3422 = vunpack.c.h.b16 %v3377
      %v3423 = vunpack.c.l.b16 %v3378
      %v3424 = vunpack.c.l.b16 %v3379
      %v3425 = vunpack.c.h.b16 %v3379
      %v3426 = vunpack.c.l.b16 %v3380
      %v3427 = vunpack.c.l.b16 %v3381
      %v3428 = vunpack.c.h.b16 %v3381
      %v3429 = vunpack.c.l.b16 %v3382
      %v3430 = vpack.c.b16 %v3409, %v3406
      %v3431 = vpack.c.b16 %v3410, %v3407
      %v3432 = vpack.c.b16 %v3411, %v3408
      %v3433 = vpack.c.b16 %v3415, %v3412
      %v3434 = vpack.c.b16 %v3416, %v3413
      %v3435 = vpack.c.b16 %v3417, %v3414
      %v3436 = vpack.c.b16 %v3421, %v3418
      %v3437 = vpack.c.b16 %v3422, %v3419
      %v3438 = vpack.c.b16 %v3423, %v3420
      %v3439 = vpack.c.b16 %v3427, %v3424
      %v3440 = vpack.c.b16 %v3428, %v3425
      %v3441 = vpack.c.b16 %v3429, %v3426
      %v3452 = vsel %vm775, %v3366, 0
      %v3455 = vsel %vm779, %v3439, 0
      %v3458 = vsel %vm779, %v3440, 0
      %v3461 = vsel %vm779, %v3441, 0
      %3463 = vmatprep.subr.bf16.mxu0 %v3431
      %3464 = vmatpush1.bf16.msra.mxu0 %v3430
      %3465 = vmatprep.subr.bf16.mxu0 %v3434
      %3466 = vmatpush1.bf16.msra.mxu0 %v3433
      %3467 = vmatprep.subr.bf16.mxu0 %v3437
      %3468 = vmatpush1.bf16.msra.mxu0 %v3436
      %3469 = vmatprep.subr.bf16.mxu0 %v3458
      %3470 = vmatpush1.bf16.msra.mxu0 %v3455
      %3471 = vmatprep.subr.bf16.mxu0 0
      %3472 = vmatpush1.bf16.msra.mxu0 0
      %3473 = vmatprep.subr.bf16.mxu0 0
      %3474 = vmatpush1.bf16.msra.mxu0 0
      %3475 = vmatprep.subr.bf16.mxu0 0
      %3476 = vmatpush1.bf16.msra.mxu0 0
      %3477 = vmatprep.subr.bf16.mxu0 0
      %3478 = vmatpush1.bf16.msra.mxu0 0
      %3479 = vmatprep.subr.bf16.mxu0 0
      %3480 = vmatpush1.bf16.msra.mxu0 0
      %3481 = vmatprep.subr.bf16.mxu0 0
      %3482 = vmatpush1.bf16.msra.mxu0 0
      %3483 = vmatprep.subr.bf16.mxu0 0
      %3484 = vmatpush1.bf16.msra.mxu0 0
      %3485 = vmatprep.subr.bf16.mxu0 0
      %3486 = vmatpush1.bf16.msra.mxu0 0
      %3487 = vmatprep.subr.bf16.mxu0 0
      %3488 = vmatpush1.bf16.msra.mxu0 0
      %3489 = vmatprep.subr.bf16.mxu0 0
      %3490 = vmatpush1.bf16.msra.mxu0 0
      %3491 = vmatprep.subr.bf16.mxu0 0
      %3492 = vmatpush1.bf16.msra.mxu0 0
      %3493 = vmatprep.subr.bf16.mxu0 0
      %3494 = vmatpush1.bf16.msra.mxu0 0
      %3495 = vmatprep.mubr.bf16.mxu0 0
      %3496 = vmatmul.mubr.bf16.gmra.mrb[0].mxu0 %v3452
      %v3497 = vpop.f32.mrb[0].mxu0
      %v3498 = vadd.f32 %v3388, %v3497
      %v3499 = vpop.f32.mrb[0].mxu0
      %v3500 = vadd.f32 %v3388, %v3499
      %v3501 = vpop.f32.mrb[0].mxu0
      %v3502 = vpop.f32.mrb[0].mxu0
      %3503 = vdwg.mxu0
      %3504 = vmatprep.subr.bf16.mxu0 0
      %3505 = vmatpush1.bf16.msra.mxu0 %v3432
      %3506 = vmatprep.subr.bf16.mxu0 0
      %3507 = vmatpush1.bf16.msra.mxu0 %v3435
      %3508 = vmatprep.subr.bf16.mxu0 0
      %3509 = vmatpush1.bf16.msra.mxu0 %v3438
      %3510 = vmatprep.subr.bf16.mxu0 0
      %3511 = vmatpush1.bf16.msra.mxu0 %v3461
      %3512 = vmatprep.subr.bf16.mxu0 0
      %3513 = vmatpush1.bf16.msra.mxu0 0
      %3514 = vmatprep.subr.bf16.mxu0 0
      %3515 = vmatpush1.bf16.msra.mxu0 0
      %3516 = vmatprep.subr.bf16.mxu0 0
      %3517 = vmatpush1.bf16.msra.mxu0 0
      %3518 = vmatprep.subr.bf16.mxu0 0
      %3519 = vmatpush1.bf16.msra.mxu0 0
      %3520 = vmatprep.subr.bf16.mxu0 0
      %3521 = vmatpush1.bf16.msra.mxu0 0
      %3522 = vmatprep.subr.bf16.mxu0 0
      %3523 = vmatpush1.bf16.msra.mxu0 0
      %3524 = vmatprep.subr.bf16.mxu0 0
      %3525 = vmatpush1.bf16.msra.mxu0 0
      %3526 = vmatprep.subr.bf16.mxu0 0
      %3527 = vmatpush1.bf16.msra.mxu0 0
      %3528 = vmatprep.subr.bf16.mxu0 0
      %3529 = vmatpush1.bf16.msra.mxu0 0
      %3530 = vmatprep.subr.bf16.mxu0 0
      %3531 = vmatpush1.bf16.msra.mxu0 0
      %3532 = vmatprep.subr.bf16.mxu0 0
      %3533 = vmatpush1.bf16.msra.mxu0 0
      %3534 = vmatprep.subr.bf16.mxu0 0
      %3535 = vmatpush1.bf16.msra.mxu0 0
      %3536 = vmatprep.mubr.bf16.mxu0 0
      %3537 = vmatmul.mubr.bf16.gmra.mrb[0].mxu0 %v3452
      %v3538 = vpop.f32.mrb[0].mxu0
      %v3539 = vadd.f32 %v3388, %v3538
      %v3540 = vpop.f32.mrb[0].mxu0
      %v3541 = vpop.f32.mrb[0].mxu0
      %v3542 = vpop.f32.mrb[0].mxu0
      %3543 = vdwg.mxu0
      %v3544 = vmax.f32 %v3498, 0.0
      %v3545 = vmax.f32 %v3500, 0.0
      %v3546 = vmax.f32 %v3539, 0.0
      %3547 = vset.pattern.permute.xlu0 1
      %3548 = vperm.xlu0 %3547, %v3384
      %v3549 = vpop.permute.xlu0 %3548
      %v3551 = vmul.f32 %v3544, %v3549
      %v3552 = vmul.f32 %v3545, %v3549
      %v3553 = vmul.f32 %v3546, %v3549
      %3554 = vset.pattern.permute.xlu0 2
      %3555 = vperm.xlu0 %3554, %v3384
      %v3556 = vpop.permute.xlu0 %3555
      %v3558 = vadd.f32 %v3551, %v3556
      %v3559 = vadd.f32 %v3552, %v3556
      %v3560 = vadd.f32 %v3553, %v3556
      %v3561 = vmax.f32 %v3558, 0.0
      %v3562 = vmax.f32 %v3559, 0.0
      %v3563 = vmax.f32 %v3560, 0.0
      %v3564 = vpack.c.bf16 %v3561, %v3561
      %v3565 = vpack.c.bf16 %v3562, %v3562
      %v3566 = vpack.c.bf16 %v3563, %v3563
      %s3567 = scalar_lea.vmem %s3, 864
      %v3568 = vld [vmem:[%s3567] sm:$0xff]
      %v3569 = vld [vmem:[%s3567 + $0x8] sm:$0xff]
      %v3570 = vld [vmem:[%s3567 + $0x10] sm:$0xff]
      %v3571 = vld [vmem:[%s3567 + $0x18] sm:$0xff]
      %v3572 = vld [vmem:[%s3567 + $0x20] sm:$0xff]
      %v3573 = vld [vmem:[%s3567 + $0x28] sm:$0xff]
      %v3574 = vld [vmem:[%s3567 + $0x30] sm:$0xff]
      %v3575 = vld [vmem:[%s3567 + $0x38] sm:$0xff]
      %v3576 = vld [vmem:[%s3567 + $0x40] sm:$0xff]
      %v3577 = vld [vmem:[%s3567 + $0x48] sm:$0xff]
      %v3578 = vld [vmem:[%s3567 + $0x50] sm:$0xff]
      %v3579 = vld [vmem:[%s3567 + $0x58] sm:$0xff]
      %v3580 = vld [vmem:[%s3567 + $0x60] sm:$0xff]
      %v3581 = vld [vmem:[%s3567 + $0x68] sm:$0xff]
      %v3582 = vld [vmem:[%s3567 + $0x70] sm:$0xff]
      %v3583 = vld [vmem:[%s3567 + $0x78] sm:$0xff]
      %v3584 = vld [vmem:[%s3567 + $0x80] sm:$0xff]
      %v3585 = vld [vmem:[%s3567 + $0x88] sm:$0xff]
      %v3586 = vld [vmem:[%s3567 + $0x90] sm:$0xff]
      %v3587 = vld [vmem:[%s3567 + $0x98] sm:$0xff]
      %v3588 = vld [vmem:[%s3567 + $0xa0] sm:$0xff]
      %v3589 = vld [vmem:[%s3567 + $0xa8] sm:$0xff]
      %v3590 = vld [vmem:[%s3567 + $0xb0] sm:$0xff]
      %v3591 = vld [vmem:[%s3567 + $0xb8] sm:$0xff]
      %v3592 = vld [vmem:[%s3567 + $0xc0] sm:$0xff]
      %v3593 = vld [vmem:[%s3567 + $0xc8] sm:$0xff]
      %v3594 = vld [vmem:[%s3567 + $0xd0] sm:$0xff]
      %v3595 = vld [vmem:[%s3567 + $0xd8] sm:$0xff]
      %v3596 = vld [vmem:[%s3567 + $0xe0] sm:$0xff]
      %v3597 = vld [vmem:[%s3567 + $0xe8] sm:$0xff]
      %v3598 = vld [vmem:[%s3567 + $0xf0] sm:$0xff]
      %v3599 = vld [vmem:[%s3567 + $0xf8] sm:$0xff]
      %v3600 = vld [vmem:[%s3567 + $0x100] sm:$0xff]
      %v3601 = vld [vmem:[%s3567 + $0x108] sm:$0xff]
      %v3602 = vld [vmem:[%s3567 + $0x110] sm:$0xff]
      %v3603 = vld [vmem:[%s3567 + $0x118] sm:$0xff]
      %v3640 = vunpack.c.l.b16 %v3568
      %v3641 = vunpack.c.h.b16 %v3568
      %v3642 = vunpack.c.l.b16 %v3569
      %v3643 = vunpack.c.h.b16 %v3569
      %v3644 = vunpack.c.l.b16 %v3570
      %v3645 = vunpack.c.h.b16 %v3570
      %v3646 = vunpack.c.l.b16 %v3571
      %v3647 = vunpack.c.h.b16 %v3571
      %v3648 = vunpack.c.l.b16 %v3572
      %v3649 = vunpack.c.h.b16 %v3572
      %v3650 = vunpack.c.l.b16 %v3573
      %v3651 = vunpack.c.h.b16 %v3573
      %v3652 = vunpack.c.l.b16 %v3574
      %v3653 = vunpack.c.h.b16 %v3574
      %v3654 = vunpack.c.l.b16 %v3575
      %v3655 = vunpack.c.h.b16 %v3575
      %v3656 = vunpack.c.l.b16 %v3576
      %v3657 = vunpack.c.h.b16 %v3576
      %v3658 = vunpack.c.l.b16 %v3577
      %v3659 = vunpack.c.h.b16 %v3577
      %v3660 = vunpack.c.l.b16 %v3578
      %v3661 = vunpack.c.h.b16 %v3578
      %v3662 = vunpack.c.l.b16 %v3579
      %v3663 = vunpack.c.h.b16 %v3579
      %v3664 = vunpack.c.l.b16 %v3580
      %v3665 = vunpack.c.h.b16 %v3580
      %v3666 = vunpack.c.l.b16 %v3581
      %v3667 = vunpack.c.h.b16 %v3581
      %v3668 = vunpack.c.l.b16 %v3582
      %v3669 = vunpack.c.h.b16 %v3582
      %v3670 = vunpack.c.l.b16 %v3583
      %v3671 = vunpack.c.h.b16 %v3583
      %v3672 = vunpack.c.l.b16 %v3584
      %v3673 = vunpack.c.h.b16 %v3584
      %v3674 = vunpack.c.l.b16 %v3585
      %v3675 = vunpack.c.h.b16 %v3585
      %v3676 = vunpack.c.l.b16 %v3586
      %v3677 = vunpack.c.h.b16 %v3586
      %v3678 = vunpack.c.l.b16 %v3587
      %v3679 = vunpack.c.h.b16 %v3587
      %v3680 = vunpack.c.l.b16 %v3588
      %v3681 = vunpack.c.h.b16 %v3588
      %v3682 = vunpack.c.l.b16 %v3589
      %v3683 = vunpack.c.h.b16 %v3589
      %v3684 = vunpack.c.l.b16 %v3590
      %v3685 = vunpack.c.h.b16 %v3590
      %v3686 = vunpack.c.l.b16 %v3591
      %v3687 = vunpack.c.h.b16 %v3591
      %v3688 = vunpack.c.l.b16 %v3592
      %v3689 = vunpack.c.h.b16 %v3592
      %v3690 = vunpack.c.l.b16 %v3593
      %v3691 = vunpack.c.h.b16 %v3593
      %v3692 = vunpack.c.l.b16 %v3594
      %v3693 = vunpack.c.h.b16 %v3594
      %v3694 = vunpack.c.l.b16 %v3595
      %v3695 = vunpack.c.h.b16 %v3595
      %v3696 = vunpack.c.l.b16 %v3596
      %v3697 = vunpack.c.h.b16 %v3596
      %v3698 = vunpack.c.l.b16 %v3597
      %v3699 = vunpack.c.h.b16 %v3597
      %v3700 = vunpack.c.l.b16 %v3598
      %v3701 = vunpack.c.h.b16 %v3598
      %v3702 = vunpack.c.l.b16 %v3599
      %v3703 = vunpack.c.h.b16 %v3599
      %v3704 = vunpack.c.l.b16 %v3600
      %v3705 = vunpack.c.h.b16 %v3600
      %v3706 = vunpack.c.l.b16 %v3601
      %v3707 = vunpack.c.h.b16 %v3601
      %v3708 = vunpack.c.l.b16 %v3602
      %v3709 = vunpack.c.h.b16 %v3602
      %v3710 = vunpack.c.l.b16 %v3603
      %v3711 = vunpack.c.h.b16 %v3603
      %v3712 = vpack.c.b16 %v3642, %v3640
      %v3713 = vpack.c.b16 %v3643, %v3641
      %v3714 = vpack.c.b16 %v3646, %v3644
      %v3715 = vpack.c.b16 %v3647, %v3645
      %v3716 = vpack.c.b16 %v3650, %v3648
      %v3717 = vpack.c.b16 %v3651, %v3649
      %v3718 = vpack.c.b16 %v3654, %v3652
      %v3719 = vpack.c.b16 %v3655, %v3653
      %v3720 = vpack.c.b16 %v3658, %v3656
      %v3721 = vpack.c.b16 %v3659, %v3657
      %v3722 = vpack.c.b16 %v3662, %v3660
      %v3723 = vpack.c.b16 %v3663, %v3661
      %v3724 = vpack.c.b16 %v3666, %v3664
      %v3725 = vpack.c.b16 %v3667, %v3665
      %v3726 = vpack.c.b16 %v3670, %v3668
      %v3727 = vpack.c.b16 %v3671, %v3669
      %v3728 = vpack.c.b16 %v3674, %v3672
      %v3729 = vpack.c.b16 %v3675, %v3673
      %v3730 = vpack.c.b16 %v3678, %v3676
      %v3731 = vpack.c.b16 %v3679, %v3677
      %v3732 = vpack.c.b16 %v3682, %v3680
      %v3733 = vpack.c.b16 %v3683, %v3681
      %v3734 = vpack.c.b16 %v3686, %v3684
      %v3735 = vpack.c.b16 %v3687, %v3685
      %v3736 = vpack.c.b16 %v3690, %v3688
      %v3737 = vpack.c.b16 %v3691, %v3689
      %v3738 = vpack.c.b16 %v3694, %v3692
      %v3739 = vpack.c.b16 %v3695, %v3693
      %v3740 = vpack.c.b16 %v3698, %v3696
      %v3741 = vpack.c.b16 %v3699, %v3697
      %v3742 = vpack.c.b16 %v3702, %v3700
      %v3743 = vpack.c.b16 %v3703, %v3701
      %v3744 = vpack.c.b16 %v3706, %v3704
      %v3745 = vpack.c.b16 %v3707, %v3705
      %v3746 = vpack.c.b16 %v3710, %v3708
      %v3747 = vpack.c.b16 %v3711, %v3709
      %v3785 = vsel %vm1109, %v3566, 0
      %3787 = vmatprep.subr.bf16.mxu0 %v3713
      %3788 = vmatpush1.bf16.msra.mxu0 %v3712
      %3789 = vmatprep.subr.bf16.mxu0 %v3715
      %3790 = vmatpush1.bf16.msra.mxu0 %v3714
      %3791 = vmatprep.subr.bf16.mxu0 %v3717
      %3792 = vmatpush1.bf16.msra.mxu0 %v3716
      %3793 = vmatprep.subr.bf16.mxu0 %v3719
      %3794 = vmatpush1.bf16.msra.mxu0 %v3718
      %3795 = vmatprep.subr.bf16.mxu0 %v3721
      %3796 = vmatpush1.bf16.msra.mxu0 %v3720
      %3797 = vmatprep.subr.bf16.mxu0 %v3723
      %3798 = vmatpush1.bf16.msra.mxu0 %v3722
      %3799 = vmatprep.subr.bf16.mxu0 %v3725
      %3800 = vmatpush1.bf16.msra.mxu0 %v3724
      %3801 = vmatprep.subr.bf16.mxu0 %v3727
      %3802 = vmatpush1.bf16.msra.mxu0 %v3726
      %3803 = vmatprep.subr.bf16.mxu0 %v3729
      %3804 = vmatpush1.bf16.msra.mxu0 %v3728
      %3805 = vmatprep.subr.bf16.mxu0 %v3731
      %3806 = vmatpush1.bf16.msra.mxu0 %v3730
      %3807 = vmatprep.subr.bf16.mxu0 %v3733
      %3808 = vmatpush1.bf16.msra.mxu0 %v3732
      %3809 = vmatprep.subr.bf16.mxu0 %v3735
      %3810 = vmatpush1.bf16.msra.mxu0 %v3734
      %3811 = vmatprep.subr.bf16.mxu0 %v3737
      %3812 = vmatpush1.bf16.msra.mxu0 %v3736
      %3813 = vmatprep.subr.bf16.mxu0 %v3739
      %3814 = vmatpush1.bf16.msra.mxu0 %v3738
      %3815 = vmatprep.subr.bf16.mxu0 %v3741
      %3816 = vmatpush1.bf16.msra.mxu0 %v3740
      %3817 = vmatprep.subr.bf16.mxu0 %v3743
      %3818 = vmatpush1.bf16.msra.mxu0 %v3742
      %3819 = vmatprep.mubr.bf16.mxu0 %v3565
      %3820 = vmatmul.mubr.bf16.gmra.mrb[0].mxu0 %v3564
      %v3821 = vpop.f32.mrb[0].mxu0
      %v3822 = vadd.f32 0.0, %v3821
      %v3823 = vpop.f32.mrb[0].mxu0
      %v3824 = vadd.f32 0.0, %v3823
      %v3825 = vpop.f32.mrb[0].mxu0
      %v3826 = vpop.f32.mrb[0].mxu0
      %3827 = vdwg.mxu0
      %3828 = vmatprep.subr.bf16.mxu0 %v3745
      %3829 = vmatpush1.bf16.msra.mxu0 %v3744
      %3830 = vmatprep.subr.bf16.mxu0 %v3747
      %3831 = vmatpush1.bf16.msra.mxu0 %v3746
      %3832 = vmatprep.subr.bf16.mxu0 0
      %3833 = vmatpush1.bf16.msra.mxu0 0
      %3834 = vmatprep.subr.bf16.mxu0 0
      %3835 = vmatpush1.bf16.msra.mxu0 0
      %3836 = vmatprep.subr.bf16.mxu0 0
      %3837 = vmatpush1.bf16.msra.mxu0 0
      %3838 = vmatprep.subr.bf16.mxu0 0
      %3839 = vmatpush1.bf16.msra.mxu0 0
      %3840 = vmatprep.subr.bf16.mxu0 0
      %3841 = vmatpush1.bf16.msra.mxu0 0
      %3842 = vmatprep.subr.bf16.mxu0 0
      %3843 = vmatpush1.bf16.msra.mxu0 0
      %3844 = vmatprep.subr.bf16.mxu0 0
      %3845 = vmatpush1.bf16.msra.mxu0 0
      %3846 = vmatprep.subr.bf16.mxu0 0
      %3847 = vmatpush1.bf16.msra.mxu0 0
      %3848 = vmatprep.subr.bf16.mxu0 0
      %3849 = vmatpush1.bf16.msra.mxu0 0
      %3850 = vmatprep.subr.bf16.mxu0 0
      %3851 = vmatpush1.bf16.msra.mxu0 0
      %3852 = vmatprep.subr.bf16.mxu0 0
      %3853 = vmatpush1.bf16.msra.mxu0 0
      %3854 = vmatprep.subr.bf16.mxu0 0
      %3855 = vmatpush1.bf16.msra.mxu0 0
      %3856 = vmatprep.subr.bf16.mxu0 0
      %3857 = vmatpush1.bf16.msra.mxu0 0
      %3858 = vmatprep.subr.bf16.mxu0 0
      %3859 = vmatpush1.bf16.msra.mxu0 0
      %3860 = vmatprep.mubr.bf16.mxu0 0
      %3861 = vmatmul.mubr.bf16.gmra.mrb[0].mxu0 %v3785
      %v3862 = vpop.f32.mrb[0].mxu0
      %v3863 = vadd.f32 %v3822, %v3862
      %v3864 = vpop.f32.mrb[0].mxu0
      %v3865 = vadd.f32 %v3824, %v3864
      %v3866 = vpop.f32.mrb[0].mxu0
      %v3867 = vpop.f32.mrb[0].mxu0
      %3868 = vdwg.mxu0
      %3869 = vst [vmem:[%s251 + $0x30] sm:$0xff] %v3863
      %3870 = vst [vmem:[%s251 + $0x38] sm:$0xff] %v3865
      %v3871 = vld [vmem:[%s246] sm:$0x3f]
      %v3872 = vunpack.c.l.bf16 %v3871
      %v3873 = vunpack.c.h.bf16 %v3871
      %v3875 = vcombine.high %v3872, %v3872
      %vm3877 = vcmask 1043456
      %v3878 = vsel %vm3877, %v3872, 0.0
      %v3879 = vsel %vm3877, %v3875, 0.0
      %v3880 = vadd.f32 %v3878, %v3879
      %v3881 = vsel %vm3877, %v3873, 0.0
      %v3882 = vadd.f32 %v3880, %v3881
      %3883 = vadd.xlane.f32.xlu0 %v3882
      %v3884 = vpop.xlane.xlu0 %3883
      %v3885 = vld [vmem:[%s4] sm:$0xff]
      %v3886 = vld [vmem:[%s5] sm:$0xff]
      %vm3887 = vcmask 31744
      %v3889 = vsel %vm3887, %v3885, 0
      %v3892 = vsel %vm3877, %v3884, 0
      %3894 = vmatprep.subr.mxu0 0.0
      %3895 = vmatpush1.msra.mxu0 %v3892
      %3896 = vmatprep.subr.mxu0 0.0
      %3897 = vmatpush1.msra.mxu0 0.0
      %3898 = vmatprep.subr.mxu0 0.0
      %3899 = vmatpush1.msra.mxu0 0.0
      %3900 = vmatprep.subr.mxu0 0.0
      %3901 = vmatpush1.msra.mxu0 0.0
      %3902 = vmatprep.subr.mxu0 0.0
      %3903 = vmatpush1.msra.mxu0 0.0
      %3904 = vmatprep.subr.mxu0 0.0
      %3905 = vmatpush1.msra.mxu0 0.0
      %3906 = vmatprep.subr.mxu0 0.0
      %3907 = vmatpush1.msra.mxu0 0.0
      %3908 = vmatprep.subr.mxu0 0.0
      %3909 = vmatpush1.msra.mxu0 0.0
      %3910 = vmatprep.subr.mxu0 0.0
      %3911 = vmatpush1.msra.mxu0 0.0
      %3912 = vmatprep.subr.mxu0 0.0
      %3913 = vmatpush1.msra.mxu0 0.0
      %3914 = vmatprep.subr.mxu0 0.0
      %3915 = vmatpush1.msra.mxu0 0.0
      %3916 = vmatprep.subr.mxu0 0.0
      %3917 = vmatpush1.msra.mxu0 0.0
      %3918 = vmatprep.subr.mxu0 0.0
      %3919 = vmatpush1.msra.mxu0 0.0
      %3920 = vmatprep.subr.mxu0 0.0
      %3921 = vmatpush1.msra.mxu0 0.0
      %3922 = vmatprep.subr.mxu0 0.0
      %3923 = vmatpush1.msra.mxu0 0.0
      %3924 = vmatprep.subr.mxu0 0.0
      %3925 = vmatpush1.msra.mxu0 0.0
      %3926 = vmatprep.subr.mxu0 0.0
      %3927 = vmatpush1.msra.mxu0 0.0
      %3928 = vmatprep.subr.mxu0 0.0
      %3929 = vmatpush1.msra.mxu0 0.0
      %3930 = vmatprep.subr.mxu0 0.0
      %3931 = vmatpush1.msra.mxu0 0.0
      %3932 = vmatprep.subr.mxu0 0.0
      %3933 = vmatpush1.msra.mxu0 0.0
      %3934 = vmatprep.subr.mxu0 0.0
      %3935 = vmatpush1.msra.mxu0 0.0
      %3936 = vmatprep.subr.mxu0 0.0
      %3937 = vmatpush1.msra.mxu0 0.0
      %3938 = vmatprep.subr.mxu0 0.0
      %3939 = vmatpush1.msra.mxu0 0.0
      %3940 = vmatprep.subr.mxu0 0.0
      %3941 = vmatpush1.msra.mxu0 0.0
      %3942 = vmatprep.subr.mxu0 0.0
      %3943 = vmatpush1.msra.mxu0 0.0
      %3944 = vmatprep.subr.mxu0 0.0
      %3945 = vmatpush1.msra.mxu0 0.0
      %3946 = vmatprep.subr.mxu0 0.0
      %3947 = vmatpush1.msra.mxu0 0.0
      %3948 = vmatprep.subr.mxu0 0.0
      %3949 = vmatpush1.msra.mxu0 0.0
      %3950 = vmatprep.subr.mxu0 0.0
      %3951 = vmatpush1.msra.mxu0 0.0
      %3952 = vmatprep.subr.mxu0 0.0
      %3953 = vmatpush1.msra.mxu0 0.0
      %3954 = vmatprep.subr.mxu0 0.0
      %3955 = vmatpush1.msra.mxu0 0.0
      %3956 = vmatprep.subr.mxu0 0.0
      %3957 = vmatpush1.msra.mxu0 0.0
      %3958 = vmatprep.mubr.f32.mxu0 0.0
      %3959 = vmatmul.mubr.f32.gmra.mrb[0].mxu0 %v3889
      %v3960 = vpop.f32.mrb[0].mxu0
      %v3961 = vadd.f32 %v3886, %v3960
      %v3962 = vpop.f32.mrb[0].mxu0
      %3963 = vdwg.mxu0
      %v3964 = vmax.f32 %v3961, 0.0
      %3966 = vrot.lane.b32.xlu0 %v3886, 127
      %v3967 = vpop.permute.xlu0 %3966
      %v3969 = vmul.f32 %v3964, %v3967
      %3970 = vrot.lane.b32.xlu0 %v3886, 126
      %v3971 = vpop.permute.xlu0 %3970
      %v3973 = vadd.f32 %v3969, %v3971
      %v3974 = vmax.f32 %v3973, 0.0
      %3976 = vset.pattern.permute.xlu0 0
      %3977 = vperm.xlu0 %3976, %v3974
      %v3978 = vpop.permute.xlu0 %3977
      %3980 = vst [vmem:[%s251 + $0x40] sm:$0xff] %v3978
      %3981 = vst [vmem:[%s251 + $0x48] sm:$0xff] %v3978
      %p3982 = scmp.lt.s32.totalorder %s17, 1
      %s3983 = scalar_select %p3982, %s17, 1
      %s3984 = smul.addr %s3983, 10
      %s3985 = smul.addr %s3984, 8
      %s3986 = scalar_lea.vmem %s6, %s3985
      // Predicated region
      $region45: #{run.1} parent=43 // pred_check
        %p3987 = pneg %p166
      $region46: #{run.1} parent=43 // pred_check_branch
        %3989 = sbr.rel (%p3987) target = $region48
      $region47: #{run.1} parent=43 // pred_region
        _
      $region48: #{run.1} parent=43 // pred_fallthru
        _
    $region44: #{run.1} parent=5 // pred_fallthru
      _
    %p3990 = scmp.le.s32.totalorder 2, %s12
    // Predicated region
    $region49: #{run.1} parent=5 // pred_check
      %p3991 = pneg %p3990
    $region50: #{run.1} parent=5 // pred_check_branch
      %3993 = sbr.rel (%p3991) target = $region52
    $region51: #{run.1} parent=5 // pred_region
      %s3994 = ssub.s32 %s12, 2
      // Predicated region
      $region53: #{run.1} parent=51 // pred_check
        %p3995 = pneg %p172
      $region54: #{run.1} parent=51 // pred_check_branch
        %3997 = sbr.rel (%p3995) target = $region56
      $region55: #{run.1} parent=51 // pred_region
        %p3998 = scmp.lt.s32.totalorder %s18, 1
        %s3999 = scalar_select %p3998, %s18, 1
        %s4000 = smul.addr %s3999, 10
        %s4001 = smul.addr %s4000, 8
        %s4002 = scalar_lea.vmem %s6, %s4001
      $region56: #{run.1} parent=51 // pred_fallthru
        _
    $region52: #{run.1} parent=5 // pred_fallthru
      _
  $region6: #{run.1} parent=0 // loop_footer
    %s16 = sadd.s32 1, %s12
  $region7: #{run.1} parent=0 // loop_footer_branch
    %11 = sbr.rel target = $region3
  $region8: #{run.1} parent=0 // loop_exit
    _

</llo_original>
